<compile_context>
chip_gen: v5e
topology: v5e:2x2
jax: 0.10.0
libtpu: 0.0.40
codegen_flags: <defaults>
</compile_context>

<pallas_src>
import jax
import jax.numpy as jnp
from jax import lax
from jax.experimental import pallas as pl
from jax.experimental.pallas import tpu as pltpu


# Flip to jnp.bfloat16 on v6e/v7x for ~2x MXU throughput at larger problem
# sizes (accumulation stays f32; elementwise bias/ReLU/pool stay f32 — v5e has
# no bf16 VPU path). Kept f32 by default to match the f32 PyTorch module.
MXU_DTYPE = jnp.float32


# ---------------------------------------------------------------------------
# Fused kernel: conv0 + ReLU -> conv1 + ReLU -> 2x2/2 maxpool, one batch elem
# ---------------------------------------------------------------------------
def _fused_conv_block_kernel(p0_ref, w0_ref, b0_ref, w1_ref, b1_ref, o_ref,
                             xpad_ref, p1_ref):
    """
    p0_ref   : (1, H*W, 9*Cin)   conv0 im2col patches (MXU_DTYPE)
    w0_ref   : (9*Cin, C)        conv0 weights, rows ordered (kh, kw, cin)
    b0_ref   : (1, C)            conv0 bias (f32)
    w1_ref   : (9*C, C)          conv1 weights, rows ordered (kh, kw, c)
    b1_ref   : (1, C)            conv1 bias (f32)
    o_ref    : (1, Ho, Wo, C)    pooled output
    xpad_ref : VMEM (H+2, W+2, C)  zero-padded conv0 activation (scratch)
    p1_ref   : VMEM (H*W, 9*C)     conv1 im2col patch matrix (scratch)
    """
    Hp, Wp, C = xpad_ref.shape
    H, W = Hp - 2, Wp - 2
    _, Ho, Wo, _ = o_ref.shape

    # ---- conv0: one MXU matmul over the fused K = 9*Cin axis ----
    a0 = jnp.dot(p0_ref[0], w0_ref[...], preferred_element_type=jnp.float32)
    a0 = jnp.maximum(a0 + b0_ref[0].astype(jnp.float32), 0.0)       # (H*W, C)

    # ---- 'same' zero padding of the conv0 activation, entirely in VMEM ----
    xpad_ref[...] = jnp.zeros_like(xpad_ref)
    xpad_ref[pl.ds(1, H), pl.ds(1, W), :] = (
        a0.reshape(H, W, C).astype(xpad_ref.dtype))

    # ---- build conv1 im2col patch matrix (H*W, 9*C) in VMEM ----
    xp = xpad_ref[...]
    for kh in range(3):
        for kw in range(3):
            t = kh * 3 + kw
            p1_ref[:, pl.ds(t * C, C)] = (
                xp[kh:kh + H, kw:kw + W, :].reshape(H * W, C))

    # ---- conv1: one MXU matmul, K = 9*C (MXU accumulates internally) ----
    a1 = jnp.dot(p1_ref[...], w1_ref[...], preferred_element_type=jnp.float32)
    a1 = jnp.maximum(a1 + b1_ref[0].astype(jnp.float32), 0.0)       # (H*W, C)

    # ---- 2x2 / stride-2 max pool epilogue (even H/W: no edge padding) ----
    a1 = a1.reshape(Ho, 2, Wo, 2, C)
    o_ref[0] = jnp.max(a1, axis=(1, 3)).astype(o_ref.dtype)


# ---------------------------------------------------------------------------
# Wrapper
# ---------------------------------------------------------------------------
@jax.jit
def simple_conv_block_forward(x_nchw, w0_hwio, b0, w1_hwio, b1):
    """SimpleConvBlock.forward with default args. Input/output are NCHW."""
    N, Cin, H, W = x_nchw.shape
    C = w0_hwio.shape[-1]                               # filters (Cout)
    # TODO(synk): PyTorch-style 'same' max pooling for odd H/W needs edge
    # padding; only even spatial dims are supported here.
    assert H % 2 == 0 and W % 2 == 0
    Ho, Wo = H // 2, W // 2

    x = jnp.transpose(x_nchw, (0, 2, 3, 1))             # NCHW -> NHWC

    # conv0 im2col built once in the wrapper: (N, H*W, 9*Cin), lane-dense last
    # dim; keeps the narrow Cin-wide layout out of the kernel and folds the
    # input 'same' padding into the patch gather.
    xp = jnp.pad(x, ((0, 0), (1, 1), (1, 1), (0, 0)))
    patches0 = jnp.concatenate(
        [xp[:, kh:kh + H, kw:kw + W, :]
         for kh in range(3) for kw in range(3)],
        axis=-1).reshape(N, H * W, 9 * Cin).astype(MXU_DTYPE)

    # Weights pre-reshaped to im2col layout: rows ordered (kh, kw, cin).
    w0 = w0_hwio.reshape(9 * Cin, C).astype(MXU_DTYPE)
    w1 = w1_hwio.reshape(9 * C, C).astype(MXU_DTYPE)
    b0_2d = b0.reshape(1, C).astype(jnp.float32)
    b1_2d = b1.reshape(1, C).astype(jnp.float32)

    out_nhwc = pl.pallas_call(
        _fused_conv_block_kernel,
        out_shape=jax.ShapeDtypeStruct((N, Ho, Wo, C), x.dtype),
        grid=(N,),
        in_specs=[
            pl.BlockSpec((1, H * W, 9 * Cin), lambda n: (n, 0, 0)),
            pl.BlockSpec((9 * Cin, C), lambda n: (0, 0)),
            pl.BlockSpec((1, C), lambda n: (0, 0)),
            pl.BlockSpec((9 * C, C), lambda n: (0, 0)),
            pl.BlockSpec((1, C), lambda n: (0, 0)),
        ],
        out_specs=pl.BlockSpec((1, Ho, Wo, C), lambda n: (n, 0, 0, 0)),
        scratch_shapes=[
            pltpu.VMEM((H + 2, W + 2, C), MXU_DTYPE),   # padded conv0 act
            pltpu.VMEM((H * W, 9 * C), MXU_DTYPE),      # conv1 im2col patches
        ],
        compiler_params=pltpu.CompilerParams(
            dimension_semantics=("parallel",),
            vmem_limit_bytes=32 * 1024 * 1024),
        # TODO(synk): for large H/W (esp. v7x's 64 MiB VMEM) add an H-row tile
        # grid axis with a 1-row halo instead of whole-image blocks.
    )(patches0, w0, b0_2d, w1, b1_2d)

    return jnp.transpose(out_nhwc, (0, 3, 1, 2))        # NHWC -> NCHW


# ---------------------------------------------------------------------------
# Pure-JAX reference (for correctness check)
# ---------------------------------------------------------------------------
def _reference_forward(x_nchw, w0_hwio, b0, w1_hwio, b1):
    x = jnp.transpose(x_nchw, (0, 2, 3, 1))
    dn = ('NHWC', 'HWIO', 'NHWC')
    x = lax.conv_general_dilated(x, w0_hwio, (1, 1), 'SAME',
                                 dimension_numbers=dn) + b0
    x = jnp.maximum(x, 0.0)
    x = lax.conv_general_dilated(x, w1_hwio, (1, 1), 'SAME',
                                 dimension_numbers=dn) + b1
    x = jnp.maximum(x, 0.0)
    x = lax.reduce_window(x, -jnp.inf, lax.max,
                          (1, 2, 2, 1), (1, 2, 2, 1), 'SAME')
    return jnp.transpose(x, (0, 3, 1, 2))


# ---------------------------------------------------------------------------
if __name__ == "__main__":
    key = jax.random.PRNGKey(0)
    k_x, k_w0, k_b0, k_w1, k_b1 = jax.random.split(key, 5)

    N, Cin, H, W = 2, 4, 16, 16
    filters, ksz = 32, 3

    x = jax.random.normal(k_x, (N, Cin, H, W), dtype=jnp.float32)

    # Deterministic parameter init (PyTorch OIHW shapes), converted to HWIO.
    w0_oihw = 0.1 * jax.random.normal(k_w0, (filters, Cin, ksz, ksz), jnp.float32)
    b0 = 0.1 * jax.random.normal(k_b0, (filters,), jnp.float32)
    w1_oihw = 0.1 * jax.random.normal(k_w1, (filters, filters, ksz, ksz), jnp.float32)
    b1 = 0.1 * jax.random.normal(k_b1, (filters,), jnp.float32)

    w0_hwio = jnp.transpose(w0_oihw, (2, 3, 1, 0))   # OIHW -> HWIO
    w1_hwio = jnp.transpose(w1_oihw, (2, 3, 1, 0))

    out = simple_conv_block_forward(x, w0_hwio, b0, w1_hwio, b1)
    out = jax.block_until_ready(out)

    ref = _reference_forward(x, w0_hwio, b0, w1_hwio, b1)
    assert out.shape == (N, filters, H // 2, W // 2), out.shape
    tol = 1e-4 if MXU_DTYPE == jnp.float32 else 2e-2
    assert jnp.allclose(out, ref, atol=tol, rtol=tol), "mismatch vs reference"

    print("KERNEL_OK")
</pallas_src>

<mosaic_0001>
module attributes {stable_mosaic.version = 11 : i64} {
  func.func @_fused_conv_block_kernel(%arg0: i32, %arg1: memref<1x256x36xf32, #tpu.memory_space<vmem>>, %arg2: memref<36x32xf32, #tpu.memory_space<vmem>>, %arg3: memref<1x32xf32, #tpu.memory_space<vmem>>, %arg4: memref<288x32xf32, #tpu.memory_space<vmem>>, %arg5: memref<1x32xf32, #tpu.memory_space<vmem>>, %arg6: memref<1x8x8x32xf32, #tpu.memory_space<vmem>>, %arg7: memref<18x18x32xf32, #tpu.memory_space<vmem>>, %arg8: memref<256x288xf32, #tpu.memory_space<vmem>>) attributes {dimension_semantics = [#tpu.dimension_semantics<parallel>], iteration_bounds = array<i64: 2>, scalar_prefetch = 0 : i64, scratch_operands = 2 : i64, tpu.core_type = #tpu.core_type<tc>, window_params = [{transform_indices = @transform_0, window_bounds = array<i64: 1, 256, 36>}, {pipeline_mode = #tpu.pipeline_mode<synchronous>, transform_indices = @transform_1, window_bounds = array<i64: 36, 32>}, {pipeline_mode = #tpu.pipeline_mode<synchronous>, transform_indices = @transform_2, window_bounds = array<i64: 1, 32>}, {pipeline_mode = #tpu.pipeline_mode<synchronous>, transform_indices = @transform_3, window_bounds = array<i64: 288, 32>}, {pipeline_mode = #tpu.pipeline_mode<synchronous>, transform_indices = @transform_4, window_bounds = array<i64: 1, 32>}, {transform_indices = @transform_5, window_bounds = array<i64: 1, 8, 8, 32>}]} {
    %c0 = arith.constant 0 : index
    %c0_0 = arith.constant 0 : index
    %c0_1 = arith.constant 0 : index
    %0 = vector.load %arg1[%c0, %c0_0, %c0_1] : memref<1x256x36xf32, #tpu.memory_space<vmem>>, vector<1x256x36xf32>
    %1 = vector.shape_cast %0 : vector<1x256x36xf32> to vector<256x36xf32>
    %c0_2 = arith.constant 0 : index
    %c0_3 = arith.constant 0 : index
    %2 = vector.load %arg2[%c0_2, %c0_3] : memref<36x32xf32, #tpu.memory_space<vmem>>, vector<36x32xf32>
    %cst = arith.constant dense<0.000000e+00> : vector<256x32xf32>
    %3 = tpu.matmul %1, %2, %cst {dimension_numbers = #tpu.dot_dimension_numbers<[1], [0], [0], [1], [0, 0, 1, 1], [], []>} : vector<256x36xf32>, vector<36x32xf32>, vector<256x32xf32> -> vector<256x32xf32>
    %c0_4 = arith.constant 0 : index
    %c0_5 = arith.constant 0 : index
    %4 = vector.load %arg3[%c0_4, %c0_5] : memref<1x32xf32, #tpu.memory_space<vmem>>, vector<1x32xf32>
    %5 = vector.shape_cast %4 : vector<1x32xf32> to vector<32xf32>
    %6 = vector.shape_cast %5 : vector<32xf32> to vector<1x32xf32>
    %7 = vector.broadcast %6 : vector<1x32xf32> to vector<256x32xf32>
    %8 = arith.addf %3, %7 : vector<256x32xf32>
    %cst_6 = arith.constant 0.000000e+00 : f32
    %9 = vector.broadcast %cst_6 : f32 to vector<256x32xf32>
    %10 = arith.maximumf %8, %9 : vector<256x32xf32>
    %cst_7 = arith.constant 0.000000e+00 : f32
    %11 = vector.broadcast %cst_7 : f32 to vector<18x18x32xf32>
    %c0_8 = arith.constant 0 : index
    %c0_9 = arith.constant 0 : index
    %c0_10 = arith.constant 0 : index
    %12 = vector.load %arg7[%c0_8, %c0_9, %c0_10] : memref<18x18x32xf32, #tpu.memory_space<vmem>>, vector<18x18x32xf32>
    tpu.vector_store %arg7[%c0_8, %c0_9, %c0_10], %11 {strides = array<i32>} : memref<18x18x32xf32, #tpu.memory_space<vmem>>, vector<18x18x32xf32>,
    %13 = vector.shape_cast %10 : vector<256x32xf32> to vector<16x16x32xf32>
    %c1 = arith.constant 1 : index
    %c1_11 = arith.constant 1 : index
    %c0_12 = arith.constant 0 : index
    %14 = vector.load %arg7[%c1, %c1_11, %c0_12] : memref<18x18x32xf32, #tpu.memory_space<vmem>>, vector<16x16x32xf32>
    tpu.vector_store %arg7[%c1, %c1_11, %c0_12], %13 {strides = array<i32>} : memref<18x18x32xf32, #tpu.memory_space<vmem>>, vector<16x16x32xf32>,
    %c0_13 = arith.constant 0 : index
    %c0_14 = arith.constant 0 : index
    %c0_15 = arith.constant 0 : index
    %15 = vector.load %arg7[%c0_13, %c0_14, %c0_15] : memref<18x18x32xf32, #tpu.memory_space<vmem>>, vector<18x18x32xf32>
    %16 = vector.extract_strided_slice %15 {offsets = [0, 0, 0], sizes = [16, 16, 32], strides = [1, 1, 1]} : vector<18x18x32xf32> to vector<16x16x32xf32>
    %17 = vector.shape_cast %16 : vector<16x16x32xf32> to vector<256x32xf32>
    %c0_16 = arith.constant 0 : index
    %c0_17 = arith.constant 0 : index
    %18 = vector.load %arg8[%c0_16, %c0_17] : memref<256x288xf32, #tpu.memory_space<vmem>>, vector<256x32xf32>
    tpu.vector_store %arg8[%c0_16, %c0_17], %17 {strides = array<i32>} : memref<256x288xf32, #tpu.memory_space<vmem>>, vector<256x32xf32>,
    %19 = vector.extract_strided_slice %15 {offsets = [0, 1, 0], sizes = [16, 16, 32], strides = [1, 1, 1]} : vector<18x18x32xf32> to vector<16x16x32xf32>
    %20 = vector.shape_cast %19 : vector<16x16x32xf32> to vector<256x32xf32>
    %c0_18 = arith.constant 0 : index
    %c32 = arith.constant 32 : index
    %21 = vector.load %arg8[%c0_18, %c32] : memref<256x288xf32, #tpu.memory_space<vmem>>, vector<256x32xf32>
    tpu.vector_store %arg8[%c0_18, %c32], %20 {strides = array<i32>} : memref<256x288xf32, #tpu.memory_space<vmem>>, vector<256x32xf32>,
    %22 = vector.extract_strided_slice %15 {offsets = [0, 2, 0], sizes = [16, 16, 32], strides = [1, 1, 1]} : vector<18x18x32xf32> to vector<16x16x32xf32>
    %23 = vector.shape_cast %22 : vector<16x16x32xf32> to vector<256x32xf32>
    %c0_19 = arith.constant 0 : index
    %c64 = arith.constant 64 : index
    %24 = vector.load %arg8[%c0_19, %c64] : memref<256x288xf32, #tpu.memory_space<vmem>>, vector<256x32xf32>
    tpu.vector_store %arg8[%c0_19, %c64], %23 {strides = array<i32>} : memref<256x288xf32, #tpu.memory_space<vmem>>, vector<256x32xf32>,
    %25 = vector.extract_strided_slice %15 {offsets = [1, 0, 0], sizes = [16, 16, 32], strides = [1, 1, 1]} : vector<18x18x32xf32> to vector<16x16x32xf32>
    %26 = vector.shape_cast %25 : vector<16x16x32xf32> to vector<256x32xf32>
    %c0_20 = arith.constant 0 : index
    %c96 = arith.constant 96 : index
    %27 = vector.load %arg8[%c0_20, %c96] : memref<256x288xf32, #tpu.memory_space<vmem>>, vector<256x32xf32>
    tpu.vector_store %arg8[%c0_20, %c96], %26 {strides = array<i32>} : memref<256x288xf32, #tpu.memory_space<vmem>>, vector<256x32xf32>,
    %28 = vector.extract_strided_slice %15 {offsets = [1, 1, 0], sizes = [16, 16, 32], strides = [1, 1, 1]} : vector<18x18x32xf32> to vector<16x16x32xf32>
    %29 = vector.shape_cast %28 : vector<16x16x32xf32> to vector<256x32xf32>
    %c0_21 = arith.constant 0 : index
    %c128 = arith.constant 128 : index
    %30 = vector.load %arg8[%c0_21, %c128] : memref<256x288xf32, #tpu.memory_space<vmem>>, vector<256x32xf32>
    tpu.vector_store %arg8[%c0_21, %c128], %29 {strides = array<i32>} : memref<256x288xf32, #tpu.memory_space<vmem>>, vector<256x32xf32>,
    %31 = vector.extract_strided_slice %15 {offsets = [1, 2, 0], sizes = [16, 16, 32], strides = [1, 1, 1]} : vector<18x18x32xf32> to vector<16x16x32xf32>
    %32 = vector.shape_cast %31 : vector<16x16x32xf32> to vector<256x32xf32>
    %c0_22 = arith.constant 0 : index
    %c160 = arith.constant 160 : index
    %33 = vector.load %arg8[%c0_22, %c160] : memref<256x288xf32, #tpu.memory_space<vmem>>, vector<256x32xf32>
    tpu.vector_store %arg8[%c0_22, %c160], %32 {strides = array<i32>} : memref<256x288xf32, #tpu.memory_space<vmem>>, vector<256x32xf32>,
    %34 = vector.extract_strided_slice %15 {offsets = [2, 0, 0], sizes = [16, 16, 32], strides = [1, 1, 1]} : vector<18x18x32xf32> to vector<16x16x32xf32>
    %35 = vector.shape_cast %34 : vector<16x16x32xf32> to vector<256x32xf32>
    %c0_23 = arith.constant 0 : index
    %c192 = arith.constant 192 : index
    %36 = vector.load %arg8[%c0_23, %c192] : memref<256x288xf32, #tpu.memory_space<vmem>>, vector<256x32xf32>
    tpu.vector_store %arg8[%c0_23, %c192], %35 {strides = array<i32>} : memref<256x288xf32, #tpu.memory_space<vmem>>, vector<256x32xf32>,
    %37 = vector.extract_strided_slice %15 {offsets = [2, 1, 0], sizes = [16, 16, 32], strides = [1, 1, 1]} : vector<18x18x32xf32> to vector<16x16x32xf32>
    %38 = vector.shape_cast %37 : vector<16x16x32xf32> to vector<256x32xf32>
    %c0_24 = arith.constant 0 : index
    %c224 = arith.constant 224 : index
    %39 = vector.load %arg8[%c0_24, %c224] : memref<256x288xf32, #tpu.memory_space<vmem>>, vector<256x32xf32>
    tpu.vector_store %arg8[%c0_24, %c224], %38 {strides = array<i32>} : memref<256x288xf32, #tpu.memory_space<vmem>>, vector<256x32xf32>,
    %40 = vector.extract_strided_slice %15 {offsets = [2, 2, 0], sizes = [16, 16, 32], strides = [1, 1, 1]} : vector<18x18x32xf32> to vector<16x16x32xf32>
    %41 = vector.shape_cast %40 : vector<16x16x32xf32> to vector<256x32xf32>
    %c0_25 = arith.constant 0 : index
    %c256 = arith.constant 256 : index
    %42 = vector.load %arg8[%c0_25, %c256] : memref<256x288xf32, #tpu.memory_space<vmem>>, vector<256x32xf32>
    tpu.vector_store %arg8[%c0_25, %c256], %41 {strides = array<i32>} : memref<256x288xf32, #tpu.memory_space<vmem>>, vector<256x32xf32>,
    %c0_26 = arith.constant 0 : index
    %c0_27 = arith.constant 0 : index
    %43 = vector.load %arg8[%c0_26, %c0_27] : memref<256x288xf32, #tpu.memory_space<vmem>>, vector<256x288xf32>
    %c0_28 = arith.constant 0 : index
    %c0_29 = arith.constant 0 : index
    %44 = vector.load %arg4[%c0_28, %c0_29] : memref<288x32xf32, #tpu.memory_space<vmem>>, vector<288x32xf32>
    %cst_30 = arith.constant dense<0.000000e+00> : vector<256x32xf32>
    %45 = tpu.matmul %43, %44, %cst_30 {dimension_numbers = #tpu.dot_dimension_numbers<[1], [0], [0], [1], [0, 0, 1, 1], [], []>} : vector<256x288xf32>, vector<288x32xf32>, vector<256x32xf32> -> vector<256x32xf32>
    %c0_31 = arith.constant 0 : index
    %c0_32 = arith.constant 0 : index
    %46 = vector.load %arg5[%c0_31, %c0_32] : memref<1x32xf32, #tpu.memory_space<vmem>>, vector<1x32xf32>
    %47 = vector.shape_cast %46 : vector<1x32xf32> to vector<32xf32>
    %48 = vector.shape_cast %47 : vector<32xf32> to vector<1x32xf32>
    %49 = vector.broadcast %48 : vector<1x32xf32> to vector<256x32xf32>
    %50 = arith.addf %45, %49 : vector<256x32xf32>
    %cst_33 = arith.constant 0.000000e+00 : f32
    %51 = vector.broadcast %cst_33 : f32 to vector<256x32xf32>
    %52 = arith.maximumf %50, %51 : vector<256x32xf32>
    %53 = vector.shape_cast %52 : vector<256x32xf32> to vector<8x2x8x2x32xf32>
    %cst_34 = arith.constant dense<0xFF800000> : vector<8x8x32xf32>
    %54 = vector.multi_reduction <maximumf>, %53, %cst_34 [1, 3] : vector<8x2x8x2x32xf32> to vector<8x8x32xf32>
    %c0_35 = arith.constant 0 : index
    %c0_36 = arith.constant 0 : index
    %c0_37 = arith.constant 0 : index
    %c0_38 = arith.constant 0 : index
    %55 = vector.load %arg6[%c0_35, %c0_36, %c0_37, %c0_38] : memref<1x8x8x32xf32, #tpu.memory_space<vmem>>, vector<1x8x8x32xf32>
    %56 = vector.shape_cast %55 : vector<1x8x8x32xf32> to vector<8x8x32xf32>
    %57 = vector.shape_cast %54 : vector<8x8x32xf32> to vector<1x8x8x32xf32>
    tpu.vector_store %arg6[%c0_35, %c0_36, %c0_37, %c0_38], %57 {strides = array<i32>} : memref<1x8x8x32xf32, #tpu.memory_space<vmem>>, vector<1x8x8x32xf32>,
    return
  }
  func.func @transform_0(%arg0: i32) -> (i32, i32, i32) {
    %c0_i32 = arith.constant 0 : i32
    %c0_i32_0 = arith.constant 0 : i32
    %c0_i32_1 = arith.constant 0 : i32
    return %arg0, %c0_i32, %c0_i32_0 : i32, i32, i32
  }
  func.func @transform_1(%arg0: i32) -> (i32, i32) {
    %c0_i32 = arith.constant 0 : i32
    %c0_i32_0 = arith.constant 0 : i32
    %c0_i32_1 = arith.constant 0 : i32
    return %c0_i32, %c0_i32_0 : i32, i32
  }
  func.func @transform_2(%arg0: i32) -> (i32, i32) {
    %c0_i32 = arith.constant 0 : i32
    %c0_i32_0 = arith.constant 0 : i32
    %c0_i32_1 = arith.constant 0 : i32
    return %c0_i32, %c0_i32_0 : i32, i32
  }
  func.func @transform_3(%arg0: i32) -> (i32, i32) {
    %c0_i32 = arith.constant 0 : i32
    %c0_i32_0 = arith.constant 0 : i32
    %c0_i32_1 = arith.constant 0 : i32
    return %c0_i32, %c0_i32_0 : i32, i32
  }
  func.func @transform_4(%arg0: i32) -> (i32, i32) {
    %c0_i32 = arith.constant 0 : i32
    %c0_i32_0 = arith.constant 0 : i32
    %c0_i32_1 = arith.constant 0 : i32
    return %c0_i32, %c0_i32_0 : i32, i32
  }
  func.func @transform_5(%arg0: i32) -> (i32, i32, i32, i32) {
    %c0_i32 = arith.constant 0 : i32
    %c0_i32_0 = arith.constant 0 : i32
    %c0_i32_1 = arith.constant 0 : i32
    %c0_i32_2 = arith.constant 0 : i32
    return %arg0, %c0_i32, %c0_i32_0, %c0_i32_1 : i32, i32, i32, i32
  }
}

</mosaic_0001>

<llo_original>
// kernel: simple_conv_block_forward.1
$region0: #{simple_conv_block_forward.1}
  #allocation0 [shape = 'u32[]', space=smem, size = 0x4, offset = 0x4, fixed_abs, tag = 'smem constant byte address 0x4 - core index']
  #allocation1 [shape = 'u32[72,128]{1,0:T(1,128)}', space=vmem, size = 0x9000, scoped, tag = 'internal scratch']
  #allocation2 [shape = 'f32[18,18,32]{2,1,0:T(8,128)}', space=vmem, size = 0x36000, scoped, tag = 'scratch operand']
  #allocation3 [shape = 'f32[256,288]{1,0:T(8,128)}', space=vmem, size = 0x60000, scoped, tag = 'scratch operand']
  %s0 = inlined_call_operand.vmem [shape: f32[2,256,36], index: 0, kind: input, shape index: {}]
  %s1 = inlined_call_operand.vmem [shape: f32[36,32], index: 1, kind: input, shape index: {}]
  %s2 = inlined_call_operand.vmem [shape: f32[1,32], index: 2, kind: input, shape index: {}]
  %s3 = inlined_call_operand.vmem [shape: f32[288,32], index: 3, kind: input, shape index: {}]
  %s4 = inlined_call_operand.vmem [shape: f32[1,32], index: 4, kind: input, shape index: {}]
  %s5 = inlined_call_operand.hbm [shape: f32[2,8,8,32], index: 5, kind: output, shape index: {}]
  %s6 = sld [smem:[#allocation0]]
  $region53: #{simple_conv_block_forward.1} parent=0
    _
  %s8 = ssub.s32 1, %s6
  %s9 = scalar_select 0, %s8, %s6
  $region1: #{simple_conv_block_forward.1} parent=0
    #allocation4 [shape = 'u8[65536]{0}', space=vmem, size = 0x10000, scoped, tag = 'output window, operand 0']
    #allocation5 [shape = 's32[2]{0}', space=sflag, size = 0x8, scoped, tag = 'scoped memory for simple_conv_block_forward.1']
    %10 = vsyncpa [#allocation5], 0
    %s11 = scalar_lea.sflag [#allocation5], 1
    %12 = vsyncpa %s11, 0
    loop: start=0, step=1, limit=4
    $region2: #{simple_conv_block_forward.1} parent=1 // loop_pre_header
      _
    $region3: #{simple_conv_block_forward.1} parent=1 // loop_header
      %s14 = sphi 0, %s18
      %p15 = scmp.ge.s32.totalorder %s14, 4
      %s24 = sphi 0, %s26
      %s27 = sphi 0, %s24
      %s28 = sphi 0, %s27
      %s44 = sphi 0, %s28
      %s48 = sphi 0, %s48
      %s50 = sphi 0, %s48
      %s51 = sphi 0, %s50
      %s65 = sphi 0, %s51
      %s69 = sphi 0, %s69
      %s71 = sphi 0, %s69
      %s72 = sphi 0, %s71
      %s86 = sphi 0, %s72
      %s90 = sphi 0, %s90
      %s92 = sphi 0, %s90
      %s93 = sphi 0, %s92
      %s107 = sphi 0, %s93
      %s111 = sphi 0, %s111
      %s113 = sphi 0, %s111
      %s114 = sphi 0, %s113
      %s128 = sphi 0, %s114
      %s134 = sphi 0, %s136
      %s137 = sphi 0, %s134
      %s138 = sphi 0, %s137
      %s154 = sphi 0, %s138
    $region4: #{simple_conv_block_forward.1} parent=1 // loop_header_branch
      %17 = sbr.rel (%p15) target = $region8
    $region5: #{simple_conv_block_forward.1} parent=1 // loop_body
      %s19 = ssub.s32 %s14, 1
      %s20 = ssub.s32 %s14, 2
      %s21 = sadd.s32 %s14, 1
      %s22 = ssub.s32 %s14, %s21
      %p23 = scmp.eq.s32.totalorder %s22, 0
      %s25 = sadd.s32 %s24, 1
      %s26 = scalar_select %p23, %s24, %s25
      %p29 = pneg %p23
      %p30 = scmp.eq.s32.totalorder %s14, 1
      %p31 = por %p29, %p30
      %p32 = scmp.ne.s32.totalorder %s24, %s27
      %p33 = scmp.eq.s32.totalorder %s14, 0
      %p34 = por %p32, %p33
      %p35 = scmp.ne.s32.totalorder %s24, %s27
      %p36 = scmp.eq.s32.totalorder %s19, 1
      %p37 = por %p35, %p36
      %p38 = scmp.ne.s32.totalorder %s27, %s28
      %p39 = scmp.eq.s32.totalorder %s19, 0
      %p40 = por %p38, %p39
      %p41 = scmp.ne.s32.totalorder %s27, %s28
      %p42 = scmp.eq.s32.totalorder %s20, 1
      %p43 = por %p41, %p42
      %p45 = scmp.ne.s32.totalorder %s28, %s44
      %p46 = scmp.eq.s32.totalorder %s20, 0
      %p47 = por %p45, %p46
      %s49 = sadd.s32 %s48, 1
      %p52 = scmp.eq.s32.totalorder %s14, 1
      %p53 = scmp.ne.s32.totalorder %s48, %s50
      %p54 = scmp.eq.s32.totalorder %s14, 0
      %p55 = por %p53, %p54
      %p56 = scmp.ne.s32.totalorder %s48, %s50
      %p57 = scmp.eq.s32.totalorder %s19, 1
      %p58 = por %p56, %p57
      %p59 = scmp.ne.s32.totalorder %s50, %s51
      %p60 = scmp.eq.s32.totalorder %s19, 0
      %p61 = por %p59, %p60
      %p62 = scmp.ne.s32.totalorder %s50, %s51
      %p63 = scmp.eq.s32.totalorder %s20, 1
      %p64 = por %p62, %p63
      %p66 = scmp.ne.s32.totalorder %s51, %s65
      %p67 = scmp.eq.s32.totalorder %s20, 0
      %p68 = por %p66, %p67
      %s70 = sadd.s32 %s69, 1
      %p73 = scmp.eq.s32.totalorder %s14, 1
      %p74 = scmp.ne.s32.totalorder %s69, %s71
      %p75 = scmp.eq.s32.totalorder %s14, 0
      %p76 = por %p74, %p75
      %p77 = scmp.ne.s32.totalorder %s69, %s71
      %p78 = scmp.eq.s32.totalorder %s19, 1
      %p79 = por %p77, %p78
      %p80 = scmp.ne.s32.totalorder %s71, %s72
      %p81 = scmp.eq.s32.totalorder %s19, 0
      %p82 = por %p80, %p81
      %p83 = scmp.ne.s32.totalorder %s71, %s72
      %p84 = scmp.eq.s32.totalorder %s20, 1
      %p85 = por %p83, %p84
      %p87 = scmp.ne.s32.totalorder %s72, %s86
      %p88 = scmp.eq.s32.totalorder %s20, 0
      %p89 = por %p87, %p88
      %s91 = sadd.s32 %s90, 1
      %p94 = scmp.eq.s32.totalorder %s14, 1
      %p95 = scmp.ne.s32.totalorder %s90, %s92
      %p96 = scmp.eq.s32.totalorder %s14, 0
      %p97 = por %p95, %p96
      %p98 = scmp.ne.s32.totalorder %s90, %s92
      %p99 = scmp.eq.s32.totalorder %s19, 1
      %p100 = por %p98, %p99
      %p101 = scmp.ne.s32.totalorder %s92, %s93
      %p102 = scmp.eq.s32.totalorder %s19, 0
      %p103 = por %p101, %p102
      %p104 = scmp.ne.s32.totalorder %s92, %s93
      %p105 = scmp.eq.s32.totalorder %s20, 1
      %p106 = por %p104, %p105
      %p108 = scmp.ne.s32.totalorder %s93, %s107
      %p109 = scmp.eq.s32.totalorder %s20, 0
      %p110 = por %p108, %p109
      %s112 = sadd.s32 %s111, 1
      %p115 = scmp.eq.s32.totalorder %s14, 1
      %p116 = scmp.ne.s32.totalorder %s111, %s113
      %p117 = scmp.eq.s32.totalorder %s14, 0
      %p118 = por %p116, %p117
      %p119 = scmp.ne.s32.totalorder %s111, %s113
      %p120 = scmp.eq.s32.totalorder %s19, 1
      %p121 = por %p119, %p120
      %p122 = scmp.ne.s32.totalorder %s113, %s114
      %p123 = scmp.eq.s32.totalorder %s19, 0
      %p124 = por %p122, %p123
      %p125 = scmp.ne.s32.totalorder %s113, %s114
      %p126 = scmp.eq.s32.totalorder %s20, 1
      %p127 = por %p125, %p126
      %p129 = scmp.ne.s32.totalorder %s114, %s128
      %p130 = scmp.eq.s32.totalorder %s20, 0
      %p131 = por %p129, %p130
      %s132 = ssub.s32 %s14, %s21
      %p133 = scmp.eq.s32.totalorder %s132, 0
      %s135 = sadd.s32 %s134, 1
      %s136 = scalar_select %p133, %s134, %s135
      %p139 = pneg %p133
      %p140 = scmp.eq.s32.totalorder %s14, 1
      %p141 = por %p139, %p140
      %p142 = scmp.ne.s32.totalorder %s134, %s137
      %p143 = scmp.eq.s32.totalorder %s14, 0
      %p144 = por %p142, %p143
      %p145 = scmp.ne.s32.totalorder %s134, %s137
      %p146 = scmp.eq.s32.totalorder %s19, 1
      %p147 = por %p145, %p146
      %p148 = scmp.ne.s32.totalorder %s137, %s138
      %p149 = scmp.eq.s32.totalorder %s19, 0
      %p150 = por %p148, %p149
      %p151 = scmp.ne.s32.totalorder %s137, %s138
      %p152 = scmp.eq.s32.totalorder %s20, 1
      %p153 = por %p151, %p152
      %p155 = scmp.ne.s32.totalorder %s138, %s154
      %p156 = scmp.eq.s32.totalorder %s20, 0
      %p157 = por %p155, %p156
      %p158 = scmp.le.s32.totalorder 1, %s14
      %p159 = scmp.lt.s32.totalorder %s14, 3
      %p160 = pnand %p158, %p159
      %p161 = pneg %p160
      // Predicated region
      $region9: #{simple_conv_block_forward.1} parent=5 // pred_check
        _
      $region10: #{simple_conv_block_forward.1} parent=5 // pred_check_branch
        %163 = sbr.rel (%p160) target = $region12
      $region11: #{simple_conv_block_forward.1} parent=5 // pred_region
        %s164 = ssub.s32 %s14, 1
        // Predicated region
        $region13: #{simple_conv_block_forward.1} parent=11 // pred_check
          %p165 = pneg %p61
        $region14: #{simple_conv_block_forward.1} parent=11 // pred_check_branch
          %167 = sbr.rel (%p165) target = $region16
        $region15: #{simple_conv_block_forward.1} parent=11 // pred_region
          _
        $region16: #{simple_conv_block_forward.1} parent=11 // pred_fallthru
          _
        // Predicated region
        $region17: #{simple_conv_block_forward.1} parent=11 // pred_check
          %p168 = pneg %p82
        $region18: #{simple_conv_block_forward.1} parent=11 // pred_check_branch
          %170 = sbr.rel (%p168) target = $region20
        $region19: #{simple_conv_block_forward.1} parent=11 // pred_region
          _
        $region20: #{simple_conv_block_forward.1} parent=11 // pred_fallthru
          _
        // Predicated region
        $region21: #{simple_conv_block_forward.1} parent=11 // pred_check
          %p171 = pneg %p103
        $region22: #{simple_conv_block_forward.1} parent=11 // pred_check_branch
          %173 = sbr.rel (%p171) target = $region24
        $region23: #{simple_conv_block_forward.1} parent=11 // pred_region
          _
        $region24: #{simple_conv_block_forward.1} parent=11 // pred_fallthru
          _
        // Predicated region
        $region25: #{simple_conv_block_forward.1} parent=11 // pred_check
          %p174 = pneg %p124
        $region26: #{simple_conv_block_forward.1} parent=11 // pred_check_branch
          %176 = sbr.rel (%p174) target = $region28
        $region27: #{simple_conv_block_forward.1} parent=11 // pred_region
          _
        $region28: #{simple_conv_block_forward.1} parent=11 // pred_fallthru
          _
      $region12: #{simple_conv_block_forward.1} parent=5 // pred_fallthru
        _
      %p177 = scmp.lt.s32.totalorder %s14, 2
      // Predicated region
      $region29: #{simple_conv_block_forward.1} parent=5 // pred_check
        %p178 = pneg %p177
      $region30: #{simple_conv_block_forward.1} parent=5 // pred_check_branch
        %180 = sbr.rel (%p178) target = $region32
      $region31: #{simple_conv_block_forward.1} parent=5 // pred_region
        // Predicated region
        $region33: #{simple_conv_block_forward.1} parent=31 // pred_check
          %p181 = pneg %p34
        $region34: #{simple_conv_block_forward.1} parent=31 // pred_check_branch
          %183 = sbr.rel (%p181) target = $region36
        $region35: #{simple_conv_block_forward.1} parent=31 // pred_region
          %p184 = scmp.lt.s32.totalorder %s14, 1
          %s185 = scalar_select %p184, %s14, 1
          %s186 = smul.addr %s185, 32
          %s187 = smul.addr %s186, 8
          %s188 = scalar_lea.vmem %s0, %s187
        $region36: #{simple_conv_block_forward.1} parent=31 // pred_fallthru
          _
      $region32: #{simple_conv_block_forward.1} parent=5 // pred_fallthru
        _
      %p189 = scmp.le.s32.totalorder 1, %s14
      %p190 = scmp.lt.s32.totalorder %s14, 3
      %p191 = pnand %p189, %p190
      %p192 = pneg %p191
      // Predicated region
      $region37: #{simple_conv_block_forward.1} parent=5 // pred_check
        _
      $region38: #{simple_conv_block_forward.1} parent=5 // pred_check_branch
        %194 = sbr.rel (%p191) target = $region40
      $region39: #{simple_conv_block_forward.1} parent=5 // pred_region
        %s195 = ssub.s32 %s14, 1
        %p196 = scmp.lt.s32.totalorder %s19, 1
        %s197 = scalar_select %p196, %s19, 1
        %s198 = smul.addr %s197, 32
        %s199 = smul.addr %s198, 8
        %s200 = scalar_lea.vmem %s0, %s199
        %p201 = pneg %p40
        %p202 = pneg %p37
        %p203 = pneg %p61
        %p204 = pneg %p58
        %p205 = pneg %p82
        %p206 = pneg %p79
        %p207 = pneg %p103
        %p208 = pneg %p100
        %p209 = pneg %p124
        %p210 = pneg %p121
        %p211 = pneg %p150
        %p212 = pneg %p147
        %s213 = sand.u32 %s137, 1
        %s214 = scalar_lea.sflag [#allocation5], %s213
        %s215 = sand.u32 %s137, 1
        %s216 = smul.addr %s215, 64
        %s217 = scalar_lea.vmem [#allocation4], %s216
        %p218 = scmp.lt.s32.totalorder %s19, 1
        %s219 = scalar_select %p218, %s19, 1
        %s220 = smul.addr %s219, 32
        %s221 = smul.addr %s220, 8
        %s222 = scalar_lea.vmem %s0, %s221
        %v223 = vld [vmem:[%s222] sm:$0xff]
        %v224 = vld [vmem:[%s222 + $0x8] sm:$0xff]
        %v225 = vld [vmem:[%s222 + $0x10] sm:$0xff]
        %v226 = vld [vmem:[%s222 + $0x18] sm:$0xff]
        %v227 = vld [vmem:[%s222 + $0x20] sm:$0xff]
        %v228 = vld [vmem:[%s222 + $0x28] sm:$0xff]
        %v229 = vld [vmem:[%s222 + $0x30] sm:$0xff]
        %v230 = vld [vmem:[%s222 + $0x38] sm:$0xff]
        %v231 = vld [vmem:[%s222 + $0x40] sm:$0xff]
        %v232 = vld [vmem:[%s222 + $0x48] sm:$0xff]
        %v233 = vld [vmem:[%s222 + $0x50] sm:$0xff]
        %v234 = vld [vmem:[%s222 + $0x58] sm:$0xff]
        %v235 = vld [vmem:[%s222 + $0x60] sm:$0xff]
        %v236 = vld [vmem:[%s222 + $0x68] sm:$0xff]
        %v237 = vld [vmem:[%s222 + $0x70] sm:$0xff]
        %v238 = vld [vmem:[%s222 + $0x78] sm:$0xff]
        %v239 = vld [vmem:[%s222 + $0x80] sm:$0xff]
        %v240 = vld [vmem:[%s222 + $0x88] sm:$0xff]
        %v241 = vld [vmem:[%s222 + $0x90] sm:$0xff]
        %v242 = vld [vmem:[%s222 + $0x98] sm:$0xff]
        %v243 = vld [vmem:[%s222 + $0xa0] sm:$0xff]
        %v244 = vld [vmem:[%s222 + $0xa8] sm:$0xff]
        %v245 = vld [vmem:[%s222 + $0xb0] sm:$0xff]
        %v246 = vld [vmem:[%s222 + $0xb8] sm:$0xff]
        %v247 = vld [vmem:[%s222 + $0xc0] sm:$0xff]
        %v248 = vld [vmem:[%s222 + $0xc8] sm:$0xff]
        %v249 = vld [vmem:[%s222 + $0xd0] sm:$0xff]
        %v250 = vld [vmem:[%s222 + $0xd8] sm:$0xff]
        %v251 = vld [vmem:[%s222 + $0xe0] sm:$0xff]
        %v252 = vld [vmem:[%s222 + $0xe8] sm:$0xff]
        %v253 = vld [vmem:[%s222 + $0xf0] sm:$0xff]
        %v254 = vld [vmem:[%s222 + $0xf8] sm:$0xff]
        %v255 = vld [vmem:[%s1] sm:$0xff]
        %v256 = vld [vmem:[%s1 + $0x8] sm:$0xff]
        %v257 = vld [vmem:[%s1 + $0x10] sm:$0xff]
        %v258 = vld [vmem:[%s1 + $0x18] sm:$0xff]
        %v259 = vld [vmem:[%s1 + $0x20] sm:$0xf]
        %v260 = vld [vmem:[%s2] sm:$0x1]
        %v262 = vperm.slane %v260, 0
        %vm264 = vcmask 293888
        %v266 = vsel %vm264, %v223, 0
        %v269 = vsel %vm264, %v224, 0
        %v272 = vsel %vm264, %v225, 0
        %v275 = vsel %vm264, %v226, 0
        %v278 = vsel %vm264, %v227, 0
        %v281 = vsel %vm264, %v228, 0
        %v284 = vsel %vm264, %v229, 0
        %v287 = vsel %vm264, %v230, 0
        %v290 = vsel %vm264, %v231, 0
        %v293 = vsel %vm264, %v232, 0
        %v296 = vsel %vm264, %v233, 0
        %v299 = vsel %vm264, %v234, 0
        %v302 = vsel %vm264, %v235, 0
        %v305 = vsel %vm264, %v236, 0
        %v308 = vsel %vm264, %v237, 0
        %v311 = vsel %vm264, %v238, 0
        %v314 = vsel %vm264, %v239, 0
        %v317 = vsel %vm264, %v240, 0
        %v320 = vsel %vm264, %v241, 0
        %v323 = vsel %vm264, %v242, 0
        %v326 = vsel %vm264, %v243, 0
        %v329 = vsel %vm264, %v244, 0
        %v332 = vsel %vm264, %v245, 0
        %v335 = vsel %vm264, %v246, 0
        %v338 = vsel %vm264, %v247, 0
        %v341 = vsel %vm264, %v248, 0
        %v344 = vsel %vm264, %v249, 0
        %v347 = vsel %vm264, %v250, 0
        %v350 = vsel %vm264, %v251, 0
        %v353 = vsel %vm264, %v252, 0
        %v356 = vsel %vm264, %v253, 0
        %v359 = vsel %vm264, %v254, 0
        %vm361 = vcmask 1043456
        %v363 = vsel %vm361, %v259, 0
        %365 = vmatpush.msra.mxu0 0.0
        %366 = vmatpush.msra.mxu0 0.0
        %367 = vmatpush.msra.mxu0 0.0
        %368 = vmatpush.msra.mxu0 0.0
        %369 = vmatpush.msra.mxu0 0.0
        %370 = vmatpush.msra.mxu0 0.0
        %371 = vmatpush.msra.mxu0 0.0
        %372 = vmatpush.msra.mxu0 0.0
        %373 = vmatpush.msra.mxu0 0.0
        %374 = vmatpush.msra.mxu0 0.0
        %375 = vmatpush.msra.mxu0 0.0
        %376 = vmatpush.msra.mxu0 %v363
        %377 = vmatpush.msra.mxu0 %v258
        %378 = vmatpush.msra.mxu0 %v257
        %379 = vmatpush.msra.mxu0 %v256
        %380 = vmatpush.msra.mxu0 %v255
        %381 = vmatmul.f32.gmra.mxu0 %v266
        %v382 = vpop.f32.mrf.mxu0
        %v383 = vadd.f32 %v262, %v382
        %384 = vmatmul.f32.gmra.mxu0 %v269
        %v385 = vpop.f32.mrf.mxu0
        %v386 = vadd.f32 %v262, %v385
        %387 = vmatmul.f32.gmra.mxu0 %v272
        %v388 = vpop.f32.mrf.mxu0
        %v389 = vadd.f32 %v262, %v388
        %390 = vmatmul.f32.gmra.mxu0 %v275
        %v391 = vpop.f32.mrf.mxu0
        %v392 = vadd.f32 %v262, %v391
        %393 = vmatmul.f32.gmra.mxu0 %v278
        %v394 = vpop.f32.mrf.mxu0
        %v395 = vadd.f32 %v262, %v394
        %396 = vmatmul.f32.gmra.mxu0 %v281
        %v397 = vpop.f32.mrf.mxu0
        %v398 = vadd.f32 %v262, %v397
        %399 = vmatmul.f32.gmra.mxu0 %v284
        %v400 = vpop.f32.mrf.mxu0
        %v401 = vadd.f32 %v262, %v400
        %402 = vmatmul.f32.gmra.mxu0 %v287
        %v403 = vpop.f32.mrf.mxu0
        %v404 = vadd.f32 %v262, %v403
        %405 = vmatmul.f32.gmra.mxu0 %v290
        %v406 = vpop.f32.mrf.mxu0
        %v407 = vadd.f32 %v262, %v406
        %408 = vmatmul.f32.gmra.mxu0 %v293
        %v409 = vpop.f32.mrf.mxu0
        %v410 = vadd.f32 %v262, %v409
        %411 = vmatmul.f32.gmra.mxu0 %v296
        %v412 = vpop.f32.mrf.mxu0
        %v413 = vadd.f32 %v262, %v412
        %414 = vmatmul.f32.gmra.mxu0 %v299
        %v415 = vpop.f32.mrf.mxu0
        %v416 = vadd.f32 %v262, %v415
        %417 = vmatmul.f32.gmra.mxu0 %v302
        %v418 = vpop.f32.mrf.mxu0
        %v419 = vadd.f32 %v262, %v418
        %420 = vmatmul.f32.gmra.mxu0 %v305
        %v421 = vpop.f32.mrf.mxu0
        %v422 = vadd.f32 %v262, %v421
        %423 = vmatmul.f32.gmra.mxu0 %v308
        %v424 = vpop.f32.mrf.mxu0
        %v425 = vadd.f32 %v262, %v424
        %426 = vmatmul.f32.gmra.mxu0 %v311
        %v427 = vpop.f32.mrf.mxu0
        %v428 = vadd.f32 %v262, %v427
        %429 = vmatmul.f32.gmra.mxu0 %v314
        %v430 = vpop.f32.mrf.mxu0
        %v431 = vadd.f32 %v262, %v430
        %432 = vmatmul.f32.gmra.mxu0 %v317
        %v433 = vpop.f32.mrf.mxu0
        %v434 = vadd.f32 %v262, %v433
        %435 = vmatmul.f32.gmra.mxu0 %v320
        %v436 = vpop.f32.mrf.mxu0
        %v437 = vadd.f32 %v262, %v436
        %438 = vmatmul.f32.gmra.mxu0 %v323
        %v439 = vpop.f32.mrf.mxu0
        %v440 = vadd.f32 %v262, %v439
        %441 = vmatmul.f32.gmra.mxu0 %v326
        %v442 = vpop.f32.mrf.mxu0
        %v443 = vadd.f32 %v262, %v442
        %444 = vmatmul.f32.gmra.mxu0 %v329
        %v445 = vpop.f32.mrf.mxu0
        %v446 = vadd.f32 %v262, %v445
        %447 = vmatmul.f32.gmra.mxu0 %v332
        %v448 = vpop.f32.mrf.mxu0
        %v449 = vadd.f32 %v262, %v448
        %450 = vmatmul.f32.gmra.mxu0 %v335
        %v451 = vpop.f32.mrf.mxu0
        %v452 = vadd.f32 %v262, %v451
        %453 = vmatmul.f32.gmra.mxu0 %v338
        %v454 = vpop.f32.mrf.mxu0
        %v455 = vadd.f32 %v262, %v454
        %456 = vmatmul.f32.gmra.mxu0 %v341
        %v457 = vpop.f32.mrf.mxu0
        %v458 = vadd.f32 %v262, %v457
        %459 = vmatmul.f32.gmra.mxu0 %v344
        %v460 = vpop.f32.mrf.mxu0
        %v461 = vadd.f32 %v262, %v460
        %462 = vmatmul.f32.gmra.mxu0 %v347
        %v463 = vpop.f32.mrf.mxu0
        %v464 = vadd.f32 %v262, %v463
        %465 = vmatmul.f32.gmra.mxu0 %v350
        %v466 = vpop.f32.mrf.mxu0
        %v467 = vadd.f32 %v262, %v466
        %468 = vmatmul.f32.gmra.mxu0 %v353
        %v469 = vpop.f32.mrf.mxu0
        %v470 = vadd.f32 %v262, %v469
        %471 = vmatmul.f32.gmra.mxu0 %v356
        %v472 = vpop.f32.mrf.mxu0
        %v473 = vadd.f32 %v262, %v472
        %474 = vmatmul.f32.gmra.mxu0 %v359
        %v475 = vpop.f32.mrf.mxu0
        %v476 = vadd.f32 %v262, %v475
        %477 = vdwg.mxu0
        %v478 = vmax.f32 %v383, 0.0
        %v479 = vmax.f32 %v386, 0.0
        %v480 = vmax.f32 %v389, 0.0
        %v481 = vmax.f32 %v392, 0.0
        %v482 = vmax.f32 %v395, 0.0
        %v483 = vmax.f32 %v398, 0.0
        %v484 = vmax.f32 %v401, 0.0
        %v485 = vmax.f32 %v404, 0.0
        %v486 = vmax.f32 %v407, 0.0
        %v487 = vmax.f32 %v410, 0.0
        %v488 = vmax.f32 %v413, 0.0
        %v489 = vmax.f32 %v416, 0.0
        %v490 = vmax.f32 %v419, 0.0
        %v491 = vmax.f32 %v422, 0.0
        %v492 = vmax.f32 %v425, 0.0
        %v493 = vmax.f32 %v428, 0.0
        %v494 = vmax.f32 %v431, 0.0
        %v495 = vmax.f32 %v434, 0.0
        %v496 = vmax.f32 %v437, 0.0
        %v497 = vmax.f32 %v440, 0.0
        %v498 = vmax.f32 %v443, 0.0
        %v499 = vmax.f32 %v446, 0.0
        %v500 = vmax.f32 %v449, 0.0
        %v501 = vmax.f32 %v452, 0.0
        %v502 = vmax.f32 %v455, 0.0
        %v503 = vmax.f32 %v458, 0.0
        %v504 = vmax.f32 %v461, 0.0
        %v505 = vmax.f32 %v464, 0.0
        %v506 = vmax.f32 %v467, 0.0
        %v507 = vmax.f32 %v470, 0.0
        %v508 = vmax.f32 %v473, 0.0
        %v509 = vmax.f32 %v476, 0.0
        %vm510 = vcmask 261120
        %511 = vst.msk [vmem:[#allocation2] sm:$0xff] %vm510, 0.0
        %512 = vst.msk [vmem:[#allocation2 + $0x8] sm:$0xff] %vm510, 0.0
        %vm513 = vcmask 254976
        %514 = vst.msk [vmem:[#allocation2 + $0x10] sm:$0x3] %vm513, 0.0
        %515 = vst.msk [vmem:[#allocation2 + $0x18] sm:$0xff] %vm510, 0.0
        %516 = vst.msk [vmem:[#allocation2 + $0x20] sm:$0xff] %vm510, 0.0
        %517 = vst.msk [vmem:[#allocation2 + $0x28] sm:$0x3] %vm513, 0.0
        %518 = vst.msk [vmem:[#allocation2 + $0x30] sm:$0xff] %vm510, 0.0
        %519 = vst.msk [vmem:[#allocation2 + $0x38] sm:$0xff] %vm510, 0.0
        %520 = vst.msk [vmem:[#allocation2 + $0x40] sm:$0x3] %vm513, 0.0
        %521 = vst.msk [vmem:[#allocation2 + $0x48] sm:$0xff] %vm510, 0.0
        %522 = vst.msk [vmem:[#allocation2 + $0x50] sm:$0xff] %vm510, 0.0
        %523 = vst.msk [vmem:[#allocation2 + $0x58] sm:$0x3] %vm513, 0.0
        %524 = vst.msk [vmem:[#allocation2 + $0x60] sm:$0xff] %vm510, 0.0
        %525 = vst.msk [vmem:[#allocation2 + $0x68] sm:$0xff] %vm510, 0.0
        %526 = vst.msk [vmem:[#allocation2 + $0x70] sm:$0x3] %vm513, 0.0
        %527 = vst.msk [vmem:[#allocation2 + $0x78] sm:$0xff] %vm510, 0.0
        %528 = vst.msk [vmem:[#allocation2 + $0x80] sm:$0xff] %vm510, 0.0
        %529 = vst.msk [vmem:[#allocation2 + $0x88] sm:$0x3] %vm513, 0.0
        %530 = vst.msk [vmem:[#allocation2 + $0x90] sm:$0xff] %vm510, 0.0
        %531 = vst.msk [vmem:[#allocation2 + $0x98] sm:$0xff] %vm510, 0.0
        %532 = vst.msk [vmem:[#allocation2 + $0xa0] sm:$0x3] %vm513, 0.0
        %533 = vst.msk [vmem:[#allocation2 + $0xa8] sm:$0xff] %vm510, 0.0
        %534 = vst.msk [vmem:[#allocation2 + $0xb0] sm:$0xff] %vm510, 0.0
        %535 = vst.msk [vmem:[#allocation2 + $0xb8] sm:$0x3] %vm513, 0.0
        %536 = vst.msk [vmem:[#allocation2 + $0xc0] sm:$0xff] %vm510, 0.0
        %537 = vst.msk [vmem:[#allocation2 + $0xc8] sm:$0xff] %vm510, 0.0
        %538 = vst.msk [vmem:[#allocation2 + $0xd0] sm:$0x3] %vm513, 0.0
        %539 = vst.msk [vmem:[#allocation2 + $0xd8] sm:$0xff] %vm510, 0.0
        %540 = vst.msk [vmem:[#allocation2 + $0xe0] sm:$0xff] %vm510, 0.0
        %541 = vst.msk [vmem:[#allocation2 + $0xe8] sm:$0x3] %vm513, 0.0
        %542 = vst.msk [vmem:[#allocation2 + $0xf0] sm:$0xff] %vm510, 0.0
        %543 = vst.msk [vmem:[#allocation2 + $0xf8] sm:$0xff] %vm510, 0.0
        %544 = vst.msk [vmem:[#allocation2 + $0x100] sm:$0x3] %vm513, 0.0
        %545 = vst.msk [vmem:[#allocation2 + $0x108] sm:$0xff] %vm510, 0.0
        %546 = vst.msk [vmem:[#allocation2 + $0x110] sm:$0xff] %vm510, 0.0
        %547 = vst.msk [vmem:[#allocation2 + $0x118] sm:$0x3] %vm513, 0.0
        %548 = vst.msk [vmem:[#allocation2 + $0x120] sm:$0xff] %vm510, 0.0
        %549 = vst.msk [vmem:[#allocation2 + $0x128] sm:$0xff] %vm510, 0.0
        %550 = vst.msk [vmem:[#allocation2 + $0x130] sm:$0x3] %vm513, 0.0
        %551 = vst.msk [vmem:[#allocation2 + $0x138] sm:$0xff] %vm510, 0.0
        %552 = vst.msk [vmem:[#allocation2 + $0x140] sm:$0xff] %vm510, 0.0
        %553 = vst.msk [vmem:[#allocation2 + $0x148] sm:$0x3] %vm513, 0.0
        %554 = vst.msk [vmem:[#allocation2 + $0x150] sm:$0xff] %vm510, 0.0
        %555 = vst.msk [vmem:[#allocation2 + $0x158] sm:$0xff] %vm510, 0.0
        %556 = vst.msk [vmem:[#allocation2 + $0x160] sm:$0x3] %vm513, 0.0
        %557 = vst.msk [vmem:[#allocation2 + $0x168] sm:$0xff] %vm510, 0.0
        %558 = vst.msk [vmem:[#allocation2 + $0x170] sm:$0xff] %vm510, 0.0
        %559 = vst.msk [vmem:[#allocation2 + $0x178] sm:$0x3] %vm513, 0.0
        %560 = vst.msk [vmem:[#allocation2 + $0x180] sm:$0xff] %vm510, 0.0
        %561 = vst.msk [vmem:[#allocation2 + $0x188] sm:$0xff] %vm510, 0.0
        %562 = vst.msk [vmem:[#allocation2 + $0x190] sm:$0x3] %vm513, 0.0
        %563 = vst.msk [vmem:[#allocation2 + $0x198] sm:$0xff] %vm510, 0.0
        %564 = vst.msk [vmem:[#allocation2 + $0x1a0] sm:$0xff] %vm510, 0.0
        %565 = vst.msk [vmem:[#allocation2 + $0x1a8] sm:$0x3] %vm513, 0.0
        %s566 = scalar_lea.vmem [#allocation2], 24
        %567 = vst.msk [vmem:[%s566 + $0x1] sm:$0xff] %vm510, %v478
        %568 = vst.msk [vmem:[%s566 + $0x9] sm:$0xff] %vm510, %v479
        %569 = vst.msk [vmem:[%s566 + $0x19] sm:$0xff] %vm510, %v480
        %570 = vst.msk [vmem:[%s566 + $0x21] sm:$0xff] %vm510, %v481
        %571 = vst.msk [vmem:[%s566 + $0x31] sm:$0xff] %vm510, %v482
        %572 = vst.msk [vmem:[%s566 + $0x39] sm:$0xff] %vm510, %v483
        %573 = vst.msk [vmem:[%s566 + $0x49] sm:$0xff] %vm510, %v484
        %574 = vst.msk [vmem:[%s566 + $0x51] sm:$0xff] %vm510, %v485
        %575 = vst.msk [vmem:[%s566 + $0x61] sm:$0xff] %vm510, %v486
        %576 = vst.msk [vmem:[%s566 + $0x69] sm:$0xff] %vm510, %v487
        %577 = vst.msk [vmem:[%s566 + $0x79] sm:$0xff] %vm510, %v488
        %578 = vst.msk [vmem:[%s566 + $0x81] sm:$0xff] %vm510, %v489
        %579 = vst.msk [vmem:[%s566 + $0x91] sm:$0xff] %vm510, %v490
        %580 = vst.msk [vmem:[%s566 + $0x99] sm:$0xff] %vm510, %v491
        %581 = vst.msk [vmem:[%s566 + $0xa9] sm:$0xff] %vm510, %v492
        %582 = vst.msk [vmem:[%s566 + $0xb1] sm:$0xff] %vm510, %v493
        %583 = vst.msk [vmem:[%s566 + $0xc1] sm:$0xff] %vm510, %v494
        %584 = vst.msk [vmem:[%s566 + $0xc9] sm:$0xff] %vm510, %v495
        %585 = vst.msk [vmem:[%s566 + $0xd9] sm:$0xff] %vm510, %v496
        %586 = vst.msk [vmem:[%s566 + $0xe1] sm:$0xff] %vm510, %v497
        %587 = vst.msk [vmem:[%s566 + $0xf1] sm:$0xff] %vm510, %v498
        %588 = vst.msk [vmem:[%s566 + $0xf9] sm:$0xff] %vm510, %v499
        %589 = vst.msk [vmem:[%s566 + $0x109] sm:$0xff] %vm510, %v500
        %590 = vst.msk [vmem:[%s566 + $0x111] sm:$0xff] %vm510, %v501
        %591 = vst.msk [vmem:[%s566 + $0x121] sm:$0xff] %vm510, %v502
        %592 = vst.msk [vmem:[%s566 + $0x129] sm:$0xff] %vm510, %v503
        %593 = vst.msk [vmem:[%s566 + $0x139] sm:$0xff] %vm510, %v504
        %594 = vst.msk [vmem:[%s566 + $0x141] sm:$0xff] %vm510, %v505
        %595 = vst.msk [vmem:[%s566 + $0x151] sm:$0xff] %vm510, %v506
        %596 = vst.msk [vmem:[%s566 + $0x159] sm:$0xff] %vm510, %v507
        %597 = vst.msk [vmem:[%s566 + $0x169] sm:$0xff] %vm510, %v508
        %598 = vst.msk [vmem:[%s566 + $0x171] sm:$0xff] %vm510, %v509
        %v599 = vld [vmem:[#allocation2] sm:$0xff]
        %v600 = vld [vmem:[#allocation2 + $0x8] sm:$0xff]
        %v601 = vld [vmem:[#allocation2 + $0x10] sm:$0x3]
        %v602 = vld [vmem:[#allocation2 + $0x18] sm:$0xff]
        %v603 = vld [vmem:[#allocation2 + $0x20] sm:$0xff]
        %v604 = vld [vmem:[#allocation2 + $0x28] sm:$0x3]
        %v605 = vld [vmem:[#allocation2 + $0x30] sm:$0xff]
        %v606 = vld [vmem:[#allocation2 + $0x38] sm:$0xff]
        %v607 = vld [vmem:[#allocation2 + $0x40] sm:$0x3]
        %v608 = vld [vmem:[#allocation2 + $0x48] sm:$0xff]
        %v609 = vld [vmem:[#allocation2 + $0x50] sm:$0xff]
        %v610 = vld [vmem:[#allocation2 + $0x58] sm:$0x3]
        %v611 = vld [vmem:[#allocation2 + $0x60] sm:$0xff]
        %v612 = vld [vmem:[#allocation2 + $0x68] sm:$0xff]
        %v613 = vld [vmem:[#allocation2 + $0x70] sm:$0x3]
        %v614 = vld [vmem:[#allocation2 + $0x78] sm:$0xff]
        %v615 = vld [vmem:[#allocation2 + $0x80] sm:$0xff]
        %v616 = vld [vmem:[#allocation2 + $0x88] sm:$0x3]
        %v617 = vld [vmem:[#allocation2 + $0x90] sm:$0xff]
        %v618 = vld [vmem:[#allocation2 + $0x98] sm:$0xff]
        %v619 = vld [vmem:[#allocation2 + $0xa0] sm:$0x3]
        %v620 = vld [vmem:[#allocation2 + $0xa8] sm:$0xff]
        %v621 = vld [vmem:[#allocation2 + $0xb0] sm:$0xff]
        %v622 = vld [vmem:[#allocation2 + $0xb8] sm:$0x3]
        %v623 = vld [vmem:[#allocation2 + $0xc0] sm:$0xff]
        %v624 = vld [vmem:[#allocation2 + $0xc8] sm:$0xff]
        %v625 = vld [vmem:[#allocation2 + $0xd0] sm:$0x3]
        %v626 = vld [vmem:[#allocation2 + $0xd8] sm:$0xff]
        %v627 = vld [vmem:[#allocation2 + $0xe0] sm:$0xff]
        %v628 = vld [vmem:[#allocation2 + $0xe8] sm:$0x3]
        %v629 = vld [vmem:[#allocation2 + $0xf0] sm:$0xff]
        %v630 = vld [vmem:[#allocation2 + $0xf8] sm:$0xff]
        %v631 = vld [vmem:[#allocation2 + $0x100] sm:$0x3]
        %v632 = vld [vmem:[#allocation2 + $0x108] sm:$0xff]
        %v633 = vld [vmem:[#allocation2 + $0x110] sm:$0xff]
        %v634 = vld [vmem:[#allocation2 + $0x118] sm:$0x3]
        %v635 = vld [vmem:[#allocation2 + $0x120] sm:$0xff]
        %v636 = vld [vmem:[#allocation2 + $0x128] sm:$0xff]
        %v637 = vld [vmem:[#allocation2 + $0x130] sm:$0x3]
        %v638 = vld [vmem:[#allocation2 + $0x138] sm:$0xff]
        %v639 = vld [vmem:[#allocation2 + $0x140] sm:$0xff]
        %v640 = vld [vmem:[#allocation2 + $0x148] sm:$0x3]
        %v641 = vld [vmem:[#allocation2 + $0x150] sm:$0xff]
        %v642 = vld [vmem:[#allocation2 + $0x158] sm:$0xff]
        %v643 = vld [vmem:[#allocation2 + $0x160] sm:$0x3]
        %v644 = vld [vmem:[#allocation2 + $0x168] sm:$0xff]
        %v645 = vld [vmem:[#allocation2 + $0x170] sm:$0xff]
        %v646 = vld [vmem:[#allocation2 + $0x178] sm:$0x3]
        %v647 = vld [vmem:[#allocation2 + $0x180] sm:$0xff]
        %v648 = vld [vmem:[#allocation2 + $0x188] sm:$0xff]
        %v649 = vld [vmem:[#allocation2 + $0x190] sm:$0x3]
        %v650 = vld [vmem:[#allocation2 + $0x198] sm:$0xff]
        %v651 = vld [vmem:[#allocation2 + $0x1a0] sm:$0xff]
        %v652 = vld [vmem:[#allocation2 + $0x1a8] sm:$0x3]
        %653 = vst.msk [vmem:[#allocation3] sm:$0xff] %vm510, %v599
        %654 = vst.msk [vmem:[#allocation3 + $0x18] sm:$0xff] %vm510, %v600
        %655 = vst.msk [vmem:[#allocation3 + $0x30] sm:$0xff] %vm510, %v602
        %656 = vst.msk [vmem:[#allocation3 + $0x48] sm:$0xff] %vm510, %v603
        %657 = vst.msk [vmem:[#allocation3 + $0x60] sm:$0xff] %vm510, %v605
        %658 = vst.msk [vmem:[#allocation3 + $0x78] sm:$0xff] %vm510, %v606
        %659 = vst.msk [vmem:[#allocation3 + $0x90] sm:$0xff] %vm510, %v608
        %660 = vst.msk [vmem:[#allocation3 + $0xa8] sm:$0xff] %vm510, %v609
        %661 = vst.msk [vmem:[#allocation3 + $0xc0] sm:$0xff] %vm510, %v611
        %662 = vst.msk [vmem:[#allocation3 + $0xd8] sm:$0xff] %vm510, %v612
        %663 = vst.msk [vmem:[#allocation3 + $0xf0] sm:$0xff] %vm510, %v614
        %664 = vst.msk [vmem:[#allocation3 + $0x108] sm:$0xff] %vm510, %v615
        %665 = vst.msk [vmem:[#allocation3 + $0x120] sm:$0xff] %vm510, %v617
        %666 = vst.msk [vmem:[#allocation3 + $0x138] sm:$0xff] %vm510, %v618
        %667 = vst.msk [vmem:[#allocation3 + $0x150] sm:$0xff] %vm510, %v620
        %668 = vst.msk [vmem:[#allocation3 + $0x168] sm:$0xff] %vm510, %v621
        %669 = vst.msk [vmem:[#allocation3 + $0x180] sm:$0xff] %vm510, %v623
        %670 = vst.msk [vmem:[#allocation3 + $0x198] sm:$0xff] %vm510, %v624
        %671 = vst.msk [vmem:[#allocation3 + $0x1b0] sm:$0xff] %vm510, %v626
        %672 = vst.msk [vmem:[#allocation3 + $0x1c8] sm:$0xff] %vm510, %v627
        %673 = vst.msk [vmem:[#allocation3 + $0x1e0] sm:$0xff] %vm510, %v629
        %674 = vst.msk [vmem:[#allocation3 + $0x1f8] sm:$0xff] %vm510, %v630
        %675 = vst.msk [vmem:[#allocation3 + $0x210] sm:$0xff] %vm510, %v632
        %676 = vst.msk [vmem:[#allocation3 + $0x228] sm:$0xff] %vm510, %v633
        %677 = vst.msk [vmem:[#allocation3 + $0x240] sm:$0xff] %vm510, %v635
        %678 = vst.msk [vmem:[#allocation3 + $0x258] sm:$0xff] %vm510, %v636
        %679 = vst.msk [vmem:[#allocation3 + $0x270] sm:$0xff] %vm510, %v638
        %680 = vst.msk [vmem:[#allocation3 + $0x288] sm:$0xff] %vm510, %v639
        %681 = vst.msk [vmem:[#allocation3 + $0x2a0] sm:$0xff] %vm510, %v641
        %682 = vst.msk [vmem:[#allocation3 + $0x2b8] sm:$0xff] %vm510, %v642
        %683 = vst.msk [vmem:[#allocation3 + $0x2d0] sm:$0xff] %vm510, %v644
        %684 = vst.msk [vmem:[#allocation3 + $0x2e8] sm:$0xff] %vm510, %v645
        %vm733 = vcmask 1046528
        %v734 = vrot.slane %v599, 1
        %v735 = vrot.slane %v600, 1
        %v736 = vsel %vm733, %v734, %v735
        %v737 = vrot.slane %v601, 1
        %v738 = vsel %vm733, %v735, %v737
        %v739 = vrot.slane %v602, 1
        %v740 = vrot.slane %v603, 1
        %v741 = vsel %vm733, %v739, %v740
        %v742 = vrot.slane %v604, 1
        %v743 = vsel %vm733, %v740, %v742
        %v744 = vrot.slane %v605, 1
        %v745 = vrot.slane %v606, 1
        %v746 = vsel %vm733, %v744, %v745
        %v747 = vrot.slane %v607, 1
        %v748 = vsel %vm733, %v745, %v747
        %v749 = vrot.slane %v608, 1
        %v750 = vrot.slane %v609, 1
        %v751 = vsel %vm733, %v749, %v750
        %v752 = vrot.slane %v610, 1
        %v753 = vsel %vm733, %v750, %v752
        %v754 = vrot.slane %v611, 1
        %v755 = vrot.slane %v612, 1
        %v756 = vsel %vm733, %v754, %v755
        %v757 = vrot.slane %v613, 1
        %v758 = vsel %vm733, %v755, %v757
        %v759 = vrot.slane %v614, 1
        %v760 = vrot.slane %v615, 1
        %v761 = vsel %vm733, %v759, %v760
        %v762 = vrot.slane %v616, 1
        %v763 = vsel %vm733, %v760, %v762
        %v764 = vrot.slane %v617, 1
        %v765 = vrot.slane %v618, 1
        %v766 = vsel %vm733, %v764, %v765
        %v767 = vrot.slane %v619, 1
        %v768 = vsel %vm733, %v765, %v767
        %v769 = vrot.slane %v620, 1
        %v770 = vrot.slane %v621, 1
        %v771 = vsel %vm733, %v769, %v770
        %v772 = vrot.slane %v622, 1
        %v773 = vsel %vm733, %v770, %v772
        %v774 = vrot.slane %v623, 1
        %v775 = vrot.slane %v624, 1
        %v776 = vsel %vm733, %v774, %v775
        %v777 = vrot.slane %v625, 1
        %v778 = vsel %vm733, %v775, %v777
        %v779 = vrot.slane %v626, 1
        %v780 = vrot.slane %v627, 1
        %v781 = vsel %vm733, %v779, %v780
        %v782 = vrot.slane %v628, 1
        %v783 = vsel %vm733, %v780, %v782
        %v784 = vrot.slane %v629, 1
        %v785 = vrot.slane %v630, 1
        %v786 = vsel %vm733, %v784, %v785
        %v787 = vrot.slane %v631, 1
        %v788 = vsel %vm733, %v785, %v787
        %v789 = vrot.slane %v632, 1
        %v790 = vrot.slane %v633, 1
        %v791 = vsel %vm733, %v789, %v790
        %v792 = vrot.slane %v634, 1
        %v793 = vsel %vm733, %v790, %v792
        %v794 = vrot.slane %v635, 1
        %v795 = vrot.slane %v636, 1
        %v796 = vsel %vm733, %v794, %v795
        %v797 = vrot.slane %v637, 1
        %v798 = vsel %vm733, %v795, %v797
        %v799 = vrot.slane %v638, 1
        %v800 = vrot.slane %v639, 1
        %v801 = vsel %vm733, %v799, %v800
        %v802 = vrot.slane %v640, 1
        %v803 = vsel %vm733, %v800, %v802
        %v804 = vrot.slane %v641, 1
        %v805 = vrot.slane %v642, 1
        %v806 = vsel %vm733, %v804, %v805
        %v807 = vrot.slane %v643, 1
        %v808 = vsel %vm733, %v805, %v807
        %v809 = vrot.slane %v644, 1
        %v810 = vrot.slane %v645, 1
        %v811 = vsel %vm733, %v809, %v810
        %v812 = vrot.slane %v646, 1
        %v813 = vsel %vm733, %v810, %v812
        %814 = vrot.lane.b32.xlu0 %v736, 32
        %v815 = vpop.permute.xlu0 %814
        %816 = vrot.lane.b32.xlu0 %v738, 32
        %v817 = vpop.permute.xlu0 %816
        %818 = vrot.lane.b32.xlu0 %v741, 32
        %v819 = vpop.permute.xlu0 %818
        %820 = vrot.lane.b32.xlu0 %v743, 32
        %v821 = vpop.permute.xlu0 %820
        %822 = vrot.lane.b32.xlu0 %v746, 32
        %v823 = vpop.permute.xlu0 %822
        %824 = vrot.lane.b32.xlu0 %v748, 32
        %v825 = vpop.permute.xlu0 %824
        %826 = vrot.lane.b32.xlu0 %v751, 32
        %v827 = vpop.permute.xlu0 %826
        %828 = vrot.lane.b32.xlu0 %v753, 32
        %v829 = vpop.permute.xlu0 %828
        %830 = vrot.lane.b32.xlu0 %v756, 32
        %v831 = vpop.permute.xlu0 %830
        %832 = vrot.lane.b32.xlu0 %v758, 32
        %v833 = vpop.permute.xlu0 %832
        %834 = vrot.lane.b32.xlu0 %v761, 32
        %v835 = vpop.permute.xlu0 %834
        %836 = vrot.lane.b32.xlu0 %v763, 32
        %v837 = vpop.permute.xlu0 %836
        %838 = vrot.lane.b32.xlu0 %v766, 32
        %v839 = vpop.permute.xlu0 %838
        %840 = vrot.lane.b32.xlu0 %v768, 32
        %v841 = vpop.permute.xlu0 %840
        %842 = vrot.lane.b32.xlu0 %v771, 32
        %v843 = vpop.permute.xlu0 %842
        %844 = vrot.lane.b32.xlu0 %v773, 32
        %v845 = vpop.permute.xlu0 %844
        %846 = vrot.lane.b32.xlu0 %v776, 32
        %v847 = vpop.permute.xlu0 %846
        %848 = vrot.lane.b32.xlu0 %v778, 32
        %v849 = vpop.permute.xlu0 %848
        %850 = vrot.lane.b32.xlu0 %v781, 32
        %v851 = vpop.permute.xlu0 %850
        %852 = vrot.lane.b32.xlu0 %v783, 32
        %v853 = vpop.permute.xlu0 %852
        %854 = vrot.lane.b32.xlu0 %v786, 32
        %v855 = vpop.permute.xlu0 %854
        %856 = vrot.lane.b32.xlu0 %v788, 32
        %v857 = vpop.permute.xlu0 %856
        %858 = vrot.lane.b32.xlu0 %v791, 32
        %v859 = vpop.permute.xlu0 %858
        %860 = vrot.lane.b32.xlu0 %v793, 32
        %v861 = vpop.permute.xlu0 %860
        %862 = vrot.lane.b32.xlu0 %v796, 32
        %v863 = vpop.permute.xlu0 %862
        %864 = vrot.lane.b32.xlu0 %v798, 32
        %v865 = vpop.permute.xlu0 %864
        %866 = vrot.lane.b32.xlu0 %v801, 32
        %v867 = vpop.permute.xlu0 %866
        %868 = vrot.lane.b32.xlu0 %v803, 32
        %v869 = vpop.permute.xlu0 %868
        %870 = vrot.lane.b32.xlu0 %v806, 32
        %v871 = vpop.permute.xlu0 %870
        %872 = vrot.lane.b32.xlu0 %v808, 32
        %v873 = vpop.permute.xlu0 %872
        %874 = vrot.lane.b32.xlu0 %v811, 32
        %v875 = vpop.permute.xlu0 %874
        %876 = vrot.lane.b32.xlu0 %v813, 32
        %v877 = vpop.permute.xlu0 %876
        %vm910 = vcmask 523520
        %911 = vst.msk [vmem:[#allocation3] sm:$0xff] %vm910, %v815
        %912 = vst.msk [vmem:[#allocation3 + $0x18] sm:$0xff] %vm910, %v817
        %913 = vst.msk [vmem:[#allocation3 + $0x30] sm:$0xff] %vm910, %v819
        %914 = vst.msk [vmem:[#allocation3 + $0x48] sm:$0xff] %vm910, %v821
        %915 = vst.msk [vmem:[#allocation3 + $0x60] sm:$0xff] %vm910, %v823
        %916 = vst.msk [vmem:[#allocation3 + $0x78] sm:$0xff] %vm910, %v825
        %917 = vst.msk [vmem:[#allocation3 + $0x90] sm:$0xff] %vm910, %v827
        %918 = vst.msk [vmem:[#allocation3 + $0xa8] sm:$0xff] %vm910, %v829
        %919 = vst.msk [vmem:[#allocation3 + $0xc0] sm:$0xff] %vm910, %v831
        %920 = vst.msk [vmem:[#allocation3 + $0xd8] sm:$0xff] %vm910, %v833
        %921 = vst.msk [vmem:[#allocation3 + $0xf0] sm:$0xff] %vm910, %v835
        %922 = vst.msk [vmem:[#allocation3 + $0x108] sm:$0xff] %vm910, %v837
        %923 = vst.msk [vmem:[#allocation3 + $0x120] sm:$0xff] %vm910, %v839
        %924 = vst.msk [vmem:[#allocation3 + $0x138] sm:$0xff] %vm910, %v841
        %925 = vst.msk [vmem:[#allocation3 + $0x150] sm:$0xff] %vm910, %v843
        %926 = vst.msk [vmem:[#allocation3 + $0x168] sm:$0xff] %vm910, %v845
        %927 = vst.msk [vmem:[#allocation3 + $0x180] sm:$0xff] %vm910, %v847
        %928 = vst.msk [vmem:[#allocation3 + $0x198] sm:$0xff] %vm910, %v849
        %929 = vst.msk [vmem:[#allocation3 + $0x1b0] sm:$0xff] %vm910, %v851
        %930 = vst.msk [vmem:[#allocation3 + $0x1c8] sm:$0xff] %vm910, %v853
        %931 = vst.msk [vmem:[#allocation3 + $0x1e0] sm:$0xff] %vm910, %v855
        %932 = vst.msk [vmem:[#allocation3 + $0x1f8] sm:$0xff] %vm910, %v857
        %933 = vst.msk [vmem:[#allocation3 + $0x210] sm:$0xff] %vm910, %v859
        %934 = vst.msk [vmem:[#allocation3 + $0x228] sm:$0xff] %vm910, %v861
        %935 = vst.msk [vmem:[#allocation3 + $0x240] sm:$0xff] %vm910, %v863
        %936 = vst.msk [vmem:[#allocation3 + $0x258] sm:$0xff] %vm910, %v865
        %937 = vst.msk [vmem:[#allocation3 + $0x270] sm:$0xff] %vm910, %v867
        %938 = vst.msk [vmem:[#allocation3 + $0x288] sm:$0xff] %vm910, %v869
        %939 = vst.msk [vmem:[#allocation3 + $0x2a0] sm:$0xff] %vm910, %v871
        %940 = vst.msk [vmem:[#allocation3 + $0x2b8] sm:$0xff] %vm910, %v873
        %941 = vst.msk [vmem:[#allocation3 + $0x2d0] sm:$0xff] %vm910, %v875
        %942 = vst.msk [vmem:[#allocation3 + $0x2e8] sm:$0xff] %vm910, %v877
        %vm943 = vcmask 1045504
        %v944 = vrot.slane %v599, 2
        %v945 = vrot.slane %v600, 2
        %v946 = vsel %vm943, %v944, %v945
        %v947 = vrot.slane %v601, 2
        %v948 = vsel %vm943, %v945, %v947
        %v949 = vrot.slane %v602, 2
        %v950 = vrot.slane %v603, 2
        %v951 = vsel %vm943, %v949, %v950
        %v952 = vrot.slane %v604, 2
        %v953 = vsel %vm943, %v950, %v952
        %v954 = vrot.slane %v605, 2
        %v955 = vrot.slane %v606, 2
        %v956 = vsel %vm943, %v954, %v955
        %v957 = vrot.slane %v607, 2
        %v958 = vsel %vm943, %v955, %v957
        %v959 = vrot.slane %v608, 2
        %v960 = vrot.slane %v609, 2
        %v961 = vsel %vm943, %v959, %v960
        %v962 = vrot.slane %v610, 2
        %v963 = vsel %vm943, %v960, %v962
        %v964 = vrot.slane %v611, 2
        %v965 = vrot.slane %v612, 2
        %v966 = vsel %vm943, %v964, %v965
        %v967 = vrot.slane %v613, 2
        %v968 = vsel %vm943, %v965, %v967
        %v969 = vrot.slane %v614, 2
        %v970 = vrot.slane %v615, 2
        %v971 = vsel %vm943, %v969, %v970
        %v972 = vrot.slane %v616, 2
        %v973 = vsel %vm943, %v970, %v972
        %v974 = vrot.slane %v617, 2
        %v975 = vrot.slane %v618, 2
        %v976 = vsel %vm943, %v974, %v975
        %v977 = vrot.slane %v619, 2
        %v978 = vsel %vm943, %v975, %v977
        %v979 = vrot.slane %v620, 2
        %v980 = vrot.slane %v621, 2
        %v981 = vsel %vm943, %v979, %v980
        %v982 = vrot.slane %v622, 2
        %v983 = vsel %vm943, %v980, %v982
        %v984 = vrot.slane %v623, 2
        %v985 = vrot.slane %v624, 2
        %v986 = vsel %vm943, %v984, %v985
        %v987 = vrot.slane %v625, 2
        %v988 = vsel %vm943, %v985, %v987
        %v989 = vrot.slane %v626, 2
        %v990 = vrot.slane %v627, 2
        %v991 = vsel %vm943, %v989, %v990
        %v992 = vrot.slane %v628, 2
        %v993 = vsel %vm943, %v990, %v992
        %v994 = vrot.slane %v629, 2
        %v995 = vrot.slane %v630, 2
        %v996 = vsel %vm943, %v994, %v995
        %v997 = vrot.slane %v631, 2
        %v998 = vsel %vm943, %v995, %v997
        %v999 = vrot.slane %v632, 2
        %v1000 = vrot.slane %v633, 2
        %v1001 = vsel %vm943, %v999, %v1000
        %v1002 = vrot.slane %v634, 2
        %v1003 = vsel %vm943, %v1000, %v1002
        %v1004 = vrot.slane %v635, 2
        %v1005 = vrot.slane %v636, 2
        %v1006 = vsel %vm943, %v1004, %v1005
        %v1007 = vrot.slane %v637, 2
        %v1008 = vsel %vm943, %v1005, %v1007
        %v1009 = vrot.slane %v638, 2
        %v1010 = vrot.slane %v639, 2
        %v1011 = vsel %vm943, %v1009, %v1010
        %v1012 = vrot.slane %v640, 2
        %v1013 = vsel %vm943, %v1010, %v1012
        %v1014 = vrot.slane %v641, 2
        %v1015 = vrot.slane %v642, 2
        %v1016 = vsel %vm943, %v1014, %v1015
        %v1017 = vrot.slane %v643, 2
        %v1018 = vsel %vm943, %v1015, %v1017
        %v1019 = vrot.slane %v644, 2
        %v1020 = vrot.slane %v645, 2
        %v1021 = vsel %vm943, %v1019, %v1020
        %v1022 = vrot.slane %v646, 2
        %v1023 = vsel %vm943, %v1020, %v1022
        %1024 = vrot.lane.b32.xlu0 %v946, 64
        %v1025 = vpop.permute.xlu0 %1024
        %1026 = vrot.lane.b32.xlu0 %v948, 64
        %v1027 = vpop.permute.xlu0 %1026
        %1028 = vrot.lane.b32.xlu0 %v951, 64
        %v1029 = vpop.permute.xlu0 %1028
        %1030 = vrot.lane.b32.xlu0 %v953, 64
        %v1031 = vpop.permute.xlu0 %1030
        %1032 = vrot.lane.b32.xlu0 %v956, 64
        %v1033 = vpop.permute.xlu0 %1032
        %1034 = vrot.lane.b32.xlu0 %v958, 64
        %v1035 = vpop.permute.xlu0 %1034
        %1036 = vrot.lane.b32.xlu0 %v961, 64
        %v1037 = vpop.permute.xlu0 %1036
        %1038 = vrot.lane.b32.xlu0 %v963, 64
        %v1039 = vpop.permute.xlu0 %1038
        %1040 = vrot.lane.b32.xlu0 %v966, 64
        %v1041 = vpop.permute.xlu0 %1040
        %1042 = vrot.lane.b32.xlu0 %v968, 64
        %v1043 = vpop.permute.xlu0 %1042
        %1044 = vrot.lane.b32.xlu0 %v971, 64
        %v1045 = vpop.permute.xlu0 %1044
        %1046 = vrot.lane.b32.xlu0 %v973, 64
        %v1047 = vpop.permute.xlu0 %1046
        %1048 = vrot.lane.b32.xlu0 %v976, 64
        %v1049 = vpop.permute.xlu0 %1048
        %1050 = vrot.lane.b32.xlu0 %v978, 64
        %v1051 = vpop.permute.xlu0 %1050
        %1052 = vrot.lane.b32.xlu0 %v981, 64
        %v1053 = vpop.permute.xlu0 %1052
        %1054 = vrot.lane.b32.xlu0 %v983, 64
        %v1055 = vpop.permute.xlu0 %1054
        %1056 = vrot.lane.b32.xlu0 %v986, 64
        %v1057 = vpop.permute.xlu0 %1056
        %1058 = vrot.lane.b32.xlu0 %v988, 64
        %v1059 = vpop.permute.xlu0 %1058
        %1060 = vrot.lane.b32.xlu0 %v991, 64
        %v1061 = vpop.permute.xlu0 %1060
        %1062 = vrot.lane.b32.xlu0 %v993, 64
        %v1063 = vpop.permute.xlu0 %1062
        %1064 = vrot.lane.b32.xlu0 %v996, 64
        %v1065 = vpop.permute.xlu0 %1064
        %1066 = vrot.lane.b32.xlu0 %v998, 64
        %v1067 = vpop.permute.xlu0 %1066
        %1068 = vrot.lane.b32.xlu0 %v1001, 64
        %v1069 = vpop.permute.xlu0 %1068
        %1070 = vrot.lane.b32.xlu0 %v1003, 64
        %v1071 = vpop.permute.xlu0 %1070
        %1072 = vrot.lane.b32.xlu0 %v1006, 64
        %v1073 = vpop.permute.xlu0 %1072
        %1074 = vrot.lane.b32.xlu0 %v1008, 64
        %v1075 = vpop.permute.xlu0 %1074
        %1076 = vrot.lane.b32.xlu0 %v1011, 64
        %v1077 = vpop.permute.xlu0 %1076
        %1078 = vrot.lane.b32.xlu0 %v1013, 64
        %v1079 = vpop.permute.xlu0 %1078
        %1080 = vrot.lane.b32.xlu0 %v1016, 64
        %v1081 = vpop.permute.xlu0 %1080
        %1082 = vrot.lane.b32.xlu0 %v1018, 64
        %v1083 = vpop.permute.xlu0 %1082
        %1084 = vrot.lane.b32.xlu0 %v1021, 64
        %v1085 = vpop.permute.xlu0 %1084
        %1086 = vrot.lane.b32.xlu0 %v1023, 64
        %v1087 = vpop.permute.xlu0 %1086
        %vm1120 = vcmask 785920
        %1121 = vst.msk [vmem:[#allocation3] sm:$0xff] %vm1120, %v1025
        %1122 = vst.msk [vmem:[#allocation3 + $0x18] sm:$0xff] %vm1120, %v1027
        %1123 = vst.msk [vmem:[#allocation3 + $0x30] sm:$0xff] %vm1120, %v1029
        %1124 = vst.msk [vmem:[#allocation3 + $0x48] sm:$0xff] %vm1120, %v1031
        %1125 = vst.msk [vmem:[#allocation3 + $0x60] sm:$0xff] %vm1120, %v1033
        %1126 = vst.msk [vmem:[#allocation3 + $0x78] sm:$0xff] %vm1120, %v1035
        %1127 = vst.msk [vmem:[#allocation3 + $0x90] sm:$0xff] %vm1120, %v1037
        %1128 = vst.msk [vmem:[#allocation3 + $0xa8] sm:$0xff] %vm1120, %v1039
        %1129 = vst.msk [vmem:[#allocation3 + $0xc0] sm:$0xff] %vm1120, %v1041
        %1130 = vst.msk [vmem:[#allocation3 + $0xd8] sm:$0xff] %vm1120, %v1043
        %1131 = vst.msk [vmem:[#allocation3 + $0xf0] sm:$0xff] %vm1120, %v1045
        %1132 = vst.msk [vmem:[#allocation3 + $0x108] sm:$0xff] %vm1120, %v1047
        %1133 = vst.msk [vmem:[#allocation3 + $0x120] sm:$0xff] %vm1120, %v1049
        %1134 = vst.msk [vmem:[#allocation3 + $0x138] sm:$0xff] %vm1120, %v1051
        %1135 = vst.msk [vmem:[#allocation3 + $0x150] sm:$0xff] %vm1120, %v1053
        %1136 = vst.msk [vmem:[#allocation3 + $0x168] sm:$0xff] %vm1120, %v1055
        %1137 = vst.msk [vmem:[#allocation3 + $0x180] sm:$0xff] %vm1120, %v1057
        %1138 = vst.msk [vmem:[#allocation3 + $0x198] sm:$0xff] %vm1120, %v1059
        %1139 = vst.msk [vmem:[#allocation3 + $0x1b0] sm:$0xff] %vm1120, %v1061
        %1140 = vst.msk [vmem:[#allocation3 + $0x1c8] sm:$0xff] %vm1120, %v1063
        %1141 = vst.msk [vmem:[#allocation3 + $0x1e0] sm:$0xff] %vm1120, %v1065
        %1142 = vst.msk [vmem:[#allocation3 + $0x1f8] sm:$0xff] %vm1120, %v1067
        %1143 = vst.msk [vmem:[#allocation3 + $0x210] sm:$0xff] %vm1120, %v1069
        %1144 = vst.msk [vmem:[#allocation3 + $0x228] sm:$0xff] %vm1120, %v1071
        %1145 = vst.msk [vmem:[#allocation3 + $0x240] sm:$0xff] %vm1120, %v1073
        %1146 = vst.msk [vmem:[#allocation3 + $0x258] sm:$0xff] %vm1120, %v1075
        %1147 = vst.msk [vmem:[#allocation3 + $0x270] sm:$0xff] %vm1120, %v1077
        %1148 = vst.msk [vmem:[#allocation3 + $0x288] sm:$0xff] %vm1120, %v1079
        %1149 = vst.msk [vmem:[#allocation3 + $0x2a0] sm:$0xff] %vm1120, %v1081
        %1150 = vst.msk [vmem:[#allocation3 + $0x2b8] sm:$0xff] %vm1120, %v1083
        %1151 = vst.msk [vmem:[#allocation3 + $0x2d0] sm:$0xff] %vm1120, %v1085
        %1152 = vst.msk [vmem:[#allocation3 + $0x2e8] sm:$0xff] %vm1120, %v1087
        %1155 = vrot.lane.b32.xlu0 %v602, 96
        %v1156 = vpop.permute.xlu0 %1155
        %1157 = vrot.lane.b32.xlu0 %v603, 96
        %v1158 = vpop.permute.xlu0 %1157
        %1159 = vrot.lane.b32.xlu0 %v605, 96
        %v1160 = vpop.permute.xlu0 %1159
        %1161 = vrot.lane.b32.xlu0 %v606, 96
        %v1162 = vpop.permute.xlu0 %1161
        %1163 = vrot.lane.b32.xlu0 %v608, 96
        %v1164 = vpop.permute.xlu0 %1163
        %1165 = vrot.lane.b32.xlu0 %v609, 96
        %v1166 = vpop.permute.xlu0 %1165
        %1167 = vrot.lane.b32.xlu0 %v611, 96
        %v1168 = vpop.permute.xlu0 %1167
        %1169 = vrot.lane.b32.xlu0 %v612, 96
        %v1170 = vpop.permute.xlu0 %1169
        %1171 = vrot.lane.b32.xlu0 %v614, 96
        %v1172 = vpop.permute.xlu0 %1171
        %1173 = vrot.lane.b32.xlu0 %v615, 96
        %v1174 = vpop.permute.xlu0 %1173
        %1175 = vrot.lane.b32.xlu0 %v617, 96
        %v1176 = vpop.permute.xlu0 %1175
        %1177 = vrot.lane.b32.xlu0 %v618, 96
        %v1178 = vpop.permute.xlu0 %1177
        %1179 = vrot.lane.b32.xlu0 %v620, 96
        %v1180 = vpop.permute.xlu0 %1179
        %1181 = vrot.lane.b32.xlu0 %v621, 96
        %v1182 = vpop.permute.xlu0 %1181
        %1183 = vrot.lane.b32.xlu0 %v623, 96
        %v1184 = vpop.permute.xlu0 %1183
        %1185 = vrot.lane.b32.xlu0 %v624, 96
        %v1186 = vpop.permute.xlu0 %1185
        %1187 = vrot.lane.b32.xlu0 %v626, 96
        %v1188 = vpop.permute.xlu0 %1187
        %1189 = vrot.lane.b32.xlu0 %v627, 96
        %v1190 = vpop.permute.xlu0 %1189
        %1191 = vrot.lane.b32.xlu0 %v629, 96
        %v1192 = vpop.permute.xlu0 %1191
        %1193 = vrot.lane.b32.xlu0 %v630, 96
        %v1194 = vpop.permute.xlu0 %1193
        %1195 = vrot.lane.b32.xlu0 %v632, 96
        %v1196 = vpop.permute.xlu0 %1195
        %1197 = vrot.lane.b32.xlu0 %v633, 96
        %v1198 = vpop.permute.xlu0 %1197
        %1199 = vrot.lane.b32.xlu0 %v635, 96
        %v1200 = vpop.permute.xlu0 %1199
        %1201 = vrot.lane.b32.xlu0 %v636, 96
        %v1202 = vpop.permute.xlu0 %1201
        %1203 = vrot.lane.b32.xlu0 %v638, 96
        %v1204 = vpop.permute.xlu0 %1203
        %1205 = vrot.lane.b32.xlu0 %v639, 96
        %v1206 = vpop.permute.xlu0 %1205
        %1207 = vrot.lane.b32.xlu0 %v641, 96
        %v1208 = vpop.permute.xlu0 %1207
        %1209 = vrot.lane.b32.xlu0 %v642, 96
        %v1210 = vpop.permute.xlu0 %1209
        %1211 = vrot.lane.b32.xlu0 %v644, 96
        %v1212 = vpop.permute.xlu0 %1211
        %1213 = vrot.lane.b32.xlu0 %v645, 96
        %v1214 = vpop.permute.xlu0 %1213
        %1215 = vrot.lane.b32.xlu0 %v647, 96
        %v1216 = vpop.permute.xlu0 %1215
        %1217 = vrot.lane.b32.xlu0 %v648, 96
        %v1218 = vpop.permute.xlu0 %1217
        %vm1251 = vcmask 1048320
        %1252 = vst.msk [vmem:[#allocation3] sm:$0xff] %vm1251, %v1156
        %1253 = vst.msk [vmem:[#allocation3 + $0x18] sm:$0xff] %vm1251, %v1158
        %1254 = vst.msk [vmem:[#allocation3 + $0x30] sm:$0xff] %vm1251, %v1160
        %1255 = vst.msk [vmem:[#allocation3 + $0x48] sm:$0xff] %vm1251, %v1162
        %1256 = vst.msk [vmem:[#allocation3 + $0x60] sm:$0xff] %vm1251, %v1164
        %1257 = vst.msk [vmem:[#allocation3 + $0x78] sm:$0xff] %vm1251, %v1166
        %1258 = vst.msk [vmem:[#allocation3 + $0x90] sm:$0xff] %vm1251, %v1168
        %1259 = vst.msk [vmem:[#allocation3 + $0xa8] sm:$0xff] %vm1251, %v1170
        %1260 = vst.msk [vmem:[#allocation3 + $0xc0] sm:$0xff] %vm1251, %v1172
        %1261 = vst.msk [vmem:[#allocation3 + $0xd8] sm:$0xff] %vm1251, %v1174
        %1262 = vst.msk [vmem:[#allocation3 + $0xf0] sm:$0xff] %vm1251, %v1176
        %1263 = vst.msk [vmem:[#allocation3 + $0x108] sm:$0xff] %vm1251, %v1178
        %1264 = vst.msk [vmem:[#allocation3 + $0x120] sm:$0xff] %vm1251, %v1180
        %1265 = vst.msk [vmem:[#allocation3 + $0x138] sm:$0xff] %vm1251, %v1182
        %1266 = vst.msk [vmem:[#allocation3 + $0x150] sm:$0xff] %vm1251, %v1184
        %1267 = vst.msk [vmem:[#allocation3 + $0x168] sm:$0xff] %vm1251, %v1186
        %1268 = vst.msk [vmem:[#allocation3 + $0x180] sm:$0xff] %vm1251, %v1188
        %1269 = vst.msk [vmem:[#allocation3 + $0x198] sm:$0xff] %vm1251, %v1190
        %1270 = vst.msk [vmem:[#allocation3 + $0x1b0] sm:$0xff] %vm1251, %v1192
        %1271 = vst.msk [vmem:[#allocation3 + $0x1c8] sm:$0xff] %vm1251, %v1194
        %1272 = vst.msk [vmem:[#allocation3 + $0x1e0] sm:$0xff] %vm1251, %v1196
        %1273 = vst.msk [vmem:[#allocation3 + $0x1f8] sm:$0xff] %vm1251, %v1198
        %1274 = vst.msk [vmem:[#allocation3 + $0x210] sm:$0xff] %vm1251, %v1200
        %1275 = vst.msk [vmem:[#allocation3 + $0x228] sm:$0xff] %vm1251, %v1202
        %1276 = vst.msk [vmem:[#allocation3 + $0x240] sm:$0xff] %vm1251, %v1204
        %1277 = vst.msk [vmem:[#allocation3 + $0x258] sm:$0xff] %vm1251, %v1206
        %1278 = vst.msk [vmem:[#allocation3 + $0x270] sm:$0xff] %vm1251, %v1208
        %1279 = vst.msk [vmem:[#allocation3 + $0x288] sm:$0xff] %vm1251, %v1210
        %1280 = vst.msk [vmem:[#allocation3 + $0x2a0] sm:$0xff] %vm1251, %v1212
        %1281 = vst.msk [vmem:[#allocation3 + $0x2b8] sm:$0xff] %vm1251, %v1214
        %1282 = vst.msk [vmem:[#allocation3 + $0x2d0] sm:$0xff] %vm1251, %v1216
        %1283 = vst.msk [vmem:[#allocation3 + $0x2e8] sm:$0xff] %vm1251, %v1218
        %v1285 = vrot.slane %v647, 1
        %v1286 = vrot.slane %v648, 1
        %v1287 = vsel %vm733, %v1285, %v1286
        %v1288 = vrot.slane %v649, 1
        %v1289 = vsel %vm733, %v1286, %v1288
        %1322 = vst.msk [vmem:[#allocation3 + $0x8] sm:$0xff] %vm510, %v741
        %1323 = vst.msk [vmem:[#allocation3 + $0x20] sm:$0xff] %vm510, %v743
        %1324 = vst.msk [vmem:[#allocation3 + $0x38] sm:$0xff] %vm510, %v746
        %1325 = vst.msk [vmem:[#allocation3 + $0x50] sm:$0xff] %vm510, %v748
        %1326 = vst.msk [vmem:[#allocation3 + $0x68] sm:$0xff] %vm510, %v751
        %1327 = vst.msk [vmem:[#allocation3 + $0x80] sm:$0xff] %vm510, %v753
        %1328 = vst.msk [vmem:[#allocation3 + $0x98] sm:$0xff] %vm510, %v756
        %1329 = vst.msk [vmem:[#allocation3 + $0xb0] sm:$0xff] %vm510, %v758
        %1330 = vst.msk [vmem:[#allocation3 + $0xc8] sm:$0xff] %vm510, %v761
        %1331 = vst.msk [vmem:[#allocation3 + $0xe0] sm:$0xff] %vm510, %v763
        %1332 = vst.msk [vmem:[#allocation3 + $0xf8] sm:$0xff] %vm510, %v766
        %1333 = vst.msk [vmem:[#allocation3 + $0x110] sm:$0xff] %vm510, %v768
        %1334 = vst.msk [vmem:[#allocation3 + $0x128] sm:$0xff] %vm510, %v771
        %1335 = vst.msk [vmem:[#allocation3 + $0x140] sm:$0xff] %vm510, %v773
        %1336 = vst.msk [vmem:[#allocation3 + $0x158] sm:$0xff] %vm510, %v776
        %1337 = vst.msk [vmem:[#allocation3 + $0x170] sm:$0xff] %vm510, %v778
        %1338 = vst.msk [vmem:[#allocation3 + $0x188] sm:$0xff] %vm510, %v781
        %1339 = vst.msk [vmem:[#allocation3 + $0x1a0] sm:$0xff] %vm510, %v783
        %1340 = vst.msk [vmem:[#allocation3 + $0x1b8] sm:$0xff] %vm510, %v786
        %1341 = vst.msk [vmem:[#allocation3 + $0x1d0] sm:$0xff] %vm510, %v788
        %1342 = vst.msk [vmem:[#allocation3 + $0x1e8] sm:$0xff] %vm510, %v791
        %1343 = vst.msk [vmem:[#allocation3 + $0x200] sm:$0xff] %vm510, %v793
        %1344 = vst.msk [vmem:[#allocation3 + $0x218] sm:$0xff] %vm510, %v796
        %1345 = vst.msk [vmem:[#allocation3 + $0x230] sm:$0xff] %vm510, %v798
        %1346 = vst.msk [vmem:[#allocation3 + $0x248] sm:$0xff] %vm510, %v801
        %1347 = vst.msk [vmem:[#allocation3 + $0x260] sm:$0xff] %vm510, %v803
        %1348 = vst.msk [vmem:[#allocation3 + $0x278] sm:$0xff] %vm510, %v806
        %1349 = vst.msk [vmem:[#allocation3 + $0x290] sm:$0xff] %vm510, %v808
        %1350 = vst.msk [vmem:[#allocation3 + $0x2a8] sm:$0xff] %vm510, %v811
        %1351 = vst.msk [vmem:[#allocation3 + $0x2c0] sm:$0xff] %vm510, %v813
        %1352 = vst.msk [vmem:[#allocation3 + $0x2d8] sm:$0xff] %vm510, %v1287
        %1353 = vst.msk [vmem:[#allocation3 + $0x2f0] sm:$0xff] %vm510, %v1289
        %v1354 = vrot.slane %v647, 2
        %v1355 = vrot.slane %v648, 2
        %v1356 = vsel %vm943, %v1354, %v1355
        %v1357 = vrot.slane %v649, 2
        %v1358 = vsel %vm943, %v1355, %v1357
        %1359 = vrot.lane.b32.xlu0 %v951, 32
        %v1360 = vpop.permute.xlu0 %1359
        %1361 = vrot.lane.b32.xlu0 %v953, 32
        %v1362 = vpop.permute.xlu0 %1361
        %1363 = vrot.lane.b32.xlu0 %v956, 32
        %v1364 = vpop.permute.xlu0 %1363
        %1365 = vrot.lane.b32.xlu0 %v958, 32
        %v1366 = vpop.permute.xlu0 %1365
        %1367 = vrot.lane.b32.xlu0 %v961, 32
        %v1368 = vpop.permute.xlu0 %1367
        %1369 = vrot.lane.b32.xlu0 %v963, 32
        %v1370 = vpop.permute.xlu0 %1369
        %1371 = vrot.lane.b32.xlu0 %v966, 32
        %v1372 = vpop.permute.xlu0 %1371
        %1373 = vrot.lane.b32.xlu0 %v968, 32
        %v1374 = vpop.permute.xlu0 %1373
        %1375 = vrot.lane.b32.xlu0 %v971, 32
        %v1376 = vpop.permute.xlu0 %1375
        %1377 = vrot.lane.b32.xlu0 %v973, 32
        %v1378 = vpop.permute.xlu0 %1377
        %1379 = vrot.lane.b32.xlu0 %v976, 32
        %v1380 = vpop.permute.xlu0 %1379
        %1381 = vrot.lane.b32.xlu0 %v978, 32
        %v1382 = vpop.permute.xlu0 %1381
        %1383 = vrot.lane.b32.xlu0 %v981, 32
        %v1384 = vpop.permute.xlu0 %1383
        %1385 = vrot.lane.b32.xlu0 %v983, 32
        %v1386 = vpop.permute.xlu0 %1385
        %1387 = vrot.lane.b32.xlu0 %v986, 32
        %v1388 = vpop.permute.xlu0 %1387
        %1389 = vrot.lane.b32.xlu0 %v988, 32
        %v1390 = vpop.permute.xlu0 %1389
        %1391 = vrot.lane.b32.xlu0 %v991, 32
        %v1392 = vpop.permute.xlu0 %1391
        %1393 = vrot.lane.b32.xlu0 %v993, 32
        %v1394 = vpop.permute.xlu0 %1393
        %1395 = vrot.lane.b32.xlu0 %v996, 32
        %v1396 = vpop.permute.xlu0 %1395
        %1397 = vrot.lane.b32.xlu0 %v998, 32
        %v1398 = vpop.permute.xlu0 %1397
        %1399 = vrot.lane.b32.xlu0 %v1001, 32
        %v1400 = vpop.permute.xlu0 %1399
        %1401 = vrot.lane.b32.xlu0 %v1003, 32
        %v1402 = vpop.permute.xlu0 %1401
        %1403 = vrot.lane.b32.xlu0 %v1006, 32
        %v1404 = vpop.permute.xlu0 %1403
        %1405 = vrot.lane.b32.xlu0 %v1008, 32
        %v1406 = vpop.permute.xlu0 %1405
        %1407 = vrot.lane.b32.xlu0 %v1011, 32
        %v1408 = vpop.permute.xlu0 %1407
        %1409 = vrot.lane.b32.xlu0 %v1013, 32
        %v1410 = vpop.permute.xlu0 %1409
        %1411 = vrot.lane.b32.xlu0 %v1016, 32
        %v1412 = vpop.permute.xlu0 %1411
        %1413 = vrot.lane.b32.xlu0 %v1018, 32
        %v1414 = vpop.permute.xlu0 %1413
        %1415 = vrot.lane.b32.xlu0 %v1021, 32
        %v1416 = vpop.permute.xlu0 %1415
        %1417 = vrot.lane.b32.xlu0 %v1023, 32
        %v1418 = vpop.permute.xlu0 %1417
        %1419 = vrot.lane.b32.xlu0 %v1356, 32
        %v1420 = vpop.permute.xlu0 %1419
        %1421 = vrot.lane.b32.xlu0 %v1358, 32
        %v1422 = vpop.permute.xlu0 %1421
        %1455 = vst.msk [vmem:[#allocation3 + $0x8] sm:$0xff] %vm910, %v1360
        %1456 = vst.msk [vmem:[#allocation3 + $0x20] sm:$0xff] %vm910, %v1362
        %1457 = vst.msk [vmem:[#allocation3 + $0x38] sm:$0xff] %vm910, %v1364
        %1458 = vst.msk [vmem:[#allocation3 + $0x50] sm:$0xff] %vm910, %v1366
        %1459 = vst.msk [vmem:[#allocation3 + $0x68] sm:$0xff] %vm910, %v1368
        %1460 = vst.msk [vmem:[#allocation3 + $0x80] sm:$0xff] %vm910, %v1370
        %1461 = vst.msk [vmem:[#allocation3 + $0x98] sm:$0xff] %vm910, %v1372
        %1462 = vst.msk [vmem:[#allocation3 + $0xb0] sm:$0xff] %vm910, %v1374
        %1463 = vst.msk [vmem:[#allocation3 + $0xc8] sm:$0xff] %vm910, %v1376
        %1464 = vst.msk [vmem:[#allocation3 + $0xe0] sm:$0xff] %vm910, %v1378
        %1465 = vst.msk [vmem:[#allocation3 + $0xf8] sm:$0xff] %vm910, %v1380
        %1466 = vst.msk [vmem:[#allocation3 + $0x110] sm:$0xff] %vm910, %v1382
        %1467 = vst.msk [vmem:[#allocation3 + $0x128] sm:$0xff] %vm910, %v1384
        %1468 = vst.msk [vmem:[#allocation3 + $0x140] sm:$0xff] %vm910, %v1386
        %1469 = vst.msk [vmem:[#allocation3 + $0x158] sm:$0xff] %vm910, %v1388
        %1470 = vst.msk [vmem:[#allocation3 + $0x170] sm:$0xff] %vm910, %v1390
        %1471 = vst.msk [vmem:[#allocation3 + $0x188] sm:$0xff] %vm910, %v1392
        %1472 = vst.msk [vmem:[#allocation3 + $0x1a0] sm:$0xff] %vm910, %v1394
        %1473 = vst.msk [vmem:[#allocation3 + $0x1b8] sm:$0xff] %vm910, %v1396
        %1474 = vst.msk [vmem:[#allocation3 + $0x1d0] sm:$0xff] %vm910, %v1398
        %1475 = vst.msk [vmem:[#allocation3 + $0x1e8] sm:$0xff] %vm910, %v1400
        %1476 = vst.msk [vmem:[#allocation3 + $0x200] sm:$0xff] %vm910, %v1402
        %1477 = vst.msk [vmem:[#allocation3 + $0x218] sm:$0xff] %vm910, %v1404
        %1478 = vst.msk [vmem:[#allocation3 + $0x230] sm:$0xff] %vm910, %v1406
        %1479 = vst.msk [vmem:[#allocation3 + $0x248] sm:$0xff] %vm910, %v1408
        %1480 = vst.msk [vmem:[#allocation3 + $0x260] sm:$0xff] %vm910, %v1410
        %1481 = vst.msk [vmem:[#allocation3 + $0x278] sm:$0xff] %vm910, %v1412
        %1482 = vst.msk [vmem:[#allocation3 + $0x290] sm:$0xff] %vm910, %v1414
        %1483 = vst.msk [vmem:[#allocation3 + $0x2a8] sm:$0xff] %vm910, %v1416
        %1484 = vst.msk [vmem:[#allocation3 + $0x2c0] sm:$0xff] %vm910, %v1418
        %1485 = vst.msk [vmem:[#allocation3 + $0x2d8] sm:$0xff] %vm910, %v1420
        %1486 = vst.msk [vmem:[#allocation3 + $0x2f0] sm:$0xff] %vm910, %v1422
        %1489 = vrot.lane.b32.xlu0 %v605, 64
        %v1490 = vpop.permute.xlu0 %1489
        %1491 = vrot.lane.b32.xlu0 %v606, 64
        %v1492 = vpop.permute.xlu0 %1491
        %1493 = vrot.lane.b32.xlu0 %v608, 64
        %v1494 = vpop.permute.xlu0 %1493
        %1495 = vrot.lane.b32.xlu0 %v609, 64
        %v1496 = vpop.permute.xlu0 %1495
        %1497 = vrot.lane.b32.xlu0 %v611, 64
        %v1498 = vpop.permute.xlu0 %1497
        %1499 = vrot.lane.b32.xlu0 %v612, 64
        %v1500 = vpop.permute.xlu0 %1499
        %1501 = vrot.lane.b32.xlu0 %v614, 64
        %v1502 = vpop.permute.xlu0 %1501
        %1503 = vrot.lane.b32.xlu0 %v615, 64
        %v1504 = vpop.permute.xlu0 %1503
        %1505 = vrot.lane.b32.xlu0 %v617, 64
        %v1506 = vpop.permute.xlu0 %1505
        %1507 = vrot.lane.b32.xlu0 %v618, 64
        %v1508 = vpop.permute.xlu0 %1507
        %1509 = vrot.lane.b32.xlu0 %v620, 64
        %v1510 = vpop.permute.xlu0 %1509
        %1511 = vrot.lane.b32.xlu0 %v621, 64
        %v1512 = vpop.permute.xlu0 %1511
        %1513 = vrot.lane.b32.xlu0 %v623, 64
        %v1514 = vpop.permute.xlu0 %1513
        %1515 = vrot.lane.b32.xlu0 %v624, 64
        %v1516 = vpop.permute.xlu0 %1515
        %1517 = vrot.lane.b32.xlu0 %v626, 64
        %v1518 = vpop.permute.xlu0 %1517
        %1519 = vrot.lane.b32.xlu0 %v627, 64
        %v1520 = vpop.permute.xlu0 %1519
        %1521 = vrot.lane.b32.xlu0 %v629, 64
        %v1522 = vpop.permute.xlu0 %1521
        %1523 = vrot.lane.b32.xlu0 %v630, 64
        %v1524 = vpop.permute.xlu0 %1523
        %1525 = vrot.lane.b32.xlu0 %v632, 64
        %v1526 = vpop.permute.xlu0 %1525
        %1527 = vrot.lane.b32.xlu0 %v633, 64
        %v1528 = vpop.permute.xlu0 %1527
        %1529 = vrot.lane.b32.xlu0 %v635, 64
        %v1530 = vpop.permute.xlu0 %1529
        %1531 = vrot.lane.b32.xlu0 %v636, 64
        %v1532 = vpop.permute.xlu0 %1531
        %1533 = vrot.lane.b32.xlu0 %v638, 64
        %v1534 = vpop.permute.xlu0 %1533
        %1535 = vrot.lane.b32.xlu0 %v639, 64
        %v1536 = vpop.permute.xlu0 %1535
        %1537 = vrot.lane.b32.xlu0 %v641, 64
        %v1538 = vpop.permute.xlu0 %1537
        %1539 = vrot.lane.b32.xlu0 %v642, 64
        %v1540 = vpop.permute.xlu0 %1539
        %1541 = vrot.lane.b32.xlu0 %v644, 64
        %v1542 = vpop.permute.xlu0 %1541
        %1543 = vrot.lane.b32.xlu0 %v645, 64
        %v1544 = vpop.permute.xlu0 %1543
        %1545 = vrot.lane.b32.xlu0 %v647, 64
        %v1546 = vpop.permute.xlu0 %1545
        %1547 = vrot.lane.b32.xlu0 %v648, 64
        %v1548 = vpop.permute.xlu0 %1547
        %1549 = vrot.lane.b32.xlu0 %v650, 64
        %v1550 = vpop.permute.xlu0 %1549
        %1551 = vrot.lane.b32.xlu0 %v651, 64
        %v1552 = vpop.permute.xlu0 %1551
        %1585 = vst.msk [vmem:[#allocation3 + $0x8] sm:$0xff] %vm1120, %v1490
        %1586 = vst.msk [vmem:[#allocation3 + $0x20] sm:$0xff] %vm1120, %v1492
        %1587 = vst.msk [vmem:[#allocation3 + $0x38] sm:$0xff] %vm1120, %v1494
        %1588 = vst.msk [vmem:[#allocation3 + $0x50] sm:$0xff] %vm1120, %v1496
        %1589 = vst.msk [vmem:[#allocation3 + $0x68] sm:$0xff] %vm1120, %v1498
        %1590 = vst.msk [vmem:[#allocation3 + $0x80] sm:$0xff] %vm1120, %v1500
        %1591 = vst.msk [vmem:[#allocation3 + $0x98] sm:$0xff] %vm1120, %v1502
        %1592 = vst.msk [vmem:[#allocation3 + $0xb0] sm:$0xff] %vm1120, %v1504
        %1593 = vst.msk [vmem:[#allocation3 + $0xc8] sm:$0xff] %vm1120, %v1506
        %1594 = vst.msk [vmem:[#allocation3 + $0xe0] sm:$0xff] %vm1120, %v1508
        %1595 = vst.msk [vmem:[#allocation3 + $0xf8] sm:$0xff] %vm1120, %v1510
        %1596 = vst.msk [vmem:[#allocation3 + $0x110] sm:$0xff] %vm1120, %v1512
        %1597 = vst.msk [vmem:[#allocation3 + $0x128] sm:$0xff] %vm1120, %v1514
        %1598 = vst.msk [vmem:[#allocation3 + $0x140] sm:$0xff] %vm1120, %v1516
        %1599 = vst.msk [vmem:[#allocation3 + $0x158] sm:$0xff] %vm1120, %v1518
        %1600 = vst.msk [vmem:[#allocation3 + $0x170] sm:$0xff] %vm1120, %v1520
        %1601 = vst.msk [vmem:[#allocation3 + $0x188] sm:$0xff] %vm1120, %v1522
        %1602 = vst.msk [vmem:[#allocation3 + $0x1a0] sm:$0xff] %vm1120, %v1524
        %1603 = vst.msk [vmem:[#allocation3 + $0x1b8] sm:$0xff] %vm1120, %v1526
        %1604 = vst.msk [vmem:[#allocation3 + $0x1d0] sm:$0xff] %vm1120, %v1528
        %1605 = vst.msk [vmem:[#allocation3 + $0x1e8] sm:$0xff] %vm1120, %v1530
        %1606 = vst.msk [vmem:[#allocation3 + $0x200] sm:$0xff] %vm1120, %v1532
        %1607 = vst.msk [vmem:[#allocation3 + $0x218] sm:$0xff] %vm1120, %v1534
        %1608 = vst.msk [vmem:[#allocation3 + $0x230] sm:$0xff] %vm1120, %v1536
        %1609 = vst.msk [vmem:[#allocation3 + $0x248] sm:$0xff] %vm1120, %v1538
        %1610 = vst.msk [vmem:[#allocation3 + $0x260] sm:$0xff] %vm1120, %v1540
        %1611 = vst.msk [vmem:[#allocation3 + $0x278] sm:$0xff] %vm1120, %v1542
        %1612 = vst.msk [vmem:[#allocation3 + $0x290] sm:$0xff] %vm1120, %v1544
        %1613 = vst.msk [vmem:[#allocation3 + $0x2a8] sm:$0xff] %vm1120, %v1546
        %1614 = vst.msk [vmem:[#allocation3 + $0x2c0] sm:$0xff] %vm1120, %v1548
        %1615 = vst.msk [vmem:[#allocation3 + $0x2d8] sm:$0xff] %vm1120, %v1550
        %1616 = vst.msk [vmem:[#allocation3 + $0x2f0] sm:$0xff] %vm1120, %v1552
        %v1618 = vrot.slane %v650, 1
        %v1619 = vrot.slane %v651, 1
        %v1620 = vsel %vm733, %v1618, %v1619
        %v1621 = vrot.slane %v652, 1
        %v1622 = vsel %vm733, %v1619, %v1621
        %1623 = vrot.lane.b32.xlu0 %v746, 96
        %v1624 = vpop.permute.xlu0 %1623
        %1625 = vrot.lane.b32.xlu0 %v748, 96
        %v1626 = vpop.permute.xlu0 %1625
        %1627 = vrot.lane.b32.xlu0 %v751, 96
        %v1628 = vpop.permute.xlu0 %1627
        %1629 = vrot.lane.b32.xlu0 %v753, 96
        %v1630 = vpop.permute.xlu0 %1629
        %1631 = vrot.lane.b32.xlu0 %v756, 96
        %v1632 = vpop.permute.xlu0 %1631
        %1633 = vrot.lane.b32.xlu0 %v758, 96
        %v1634 = vpop.permute.xlu0 %1633
        %1635 = vrot.lane.b32.xlu0 %v761, 96
        %v1636 = vpop.permute.xlu0 %1635
        %1637 = vrot.lane.b32.xlu0 %v763, 96
        %v1638 = vpop.permute.xlu0 %1637
        %1639 = vrot.lane.b32.xlu0 %v766, 96
        %v1640 = vpop.permute.xlu0 %1639
        %1641 = vrot.lane.b32.xlu0 %v768, 96
        %v1642 = vpop.permute.xlu0 %1641
        %1643 = vrot.lane.b32.xlu0 %v771, 96
        %v1644 = vpop.permute.xlu0 %1643
        %1645 = vrot.lane.b32.xlu0 %v773, 96
        %v1646 = vpop.permute.xlu0 %1645
        %1647 = vrot.lane.b32.xlu0 %v776, 96
        %v1648 = vpop.permute.xlu0 %1647
        %1649 = vrot.lane.b32.xlu0 %v778, 96
        %v1650 = vpop.permute.xlu0 %1649
        %1651 = vrot.lane.b32.xlu0 %v781, 96
        %v1652 = vpop.permute.xlu0 %1651
        %1653 = vrot.lane.b32.xlu0 %v783, 96
        %v1654 = vpop.permute.xlu0 %1653
        %1655 = vrot.lane.b32.xlu0 %v786, 96
        %v1656 = vpop.permute.xlu0 %1655
        %1657 = vrot.lane.b32.xlu0 %v788, 96
        %v1658 = vpop.permute.xlu0 %1657
        %1659 = vrot.lane.b32.xlu0 %v791, 96
        %v1660 = vpop.permute.xlu0 %1659
        %1661 = vrot.lane.b32.xlu0 %v793, 96
        %v1662 = vpop.permute.xlu0 %1661
        %1663 = vrot.lane.b32.xlu0 %v796, 96
        %v1664 = vpop.permute.xlu0 %1663
        %1665 = vrot.lane.b32.xlu0 %v798, 96
        %v1666 = vpop.permute.xlu0 %1665
        %1667 = vrot.lane.b32.xlu0 %v801, 96
        %v1668 = vpop.permute.xlu0 %1667
        %1669 = vrot.lane.b32.xlu0 %v803, 96
        %v1670 = vpop.permute.xlu0 %1669
        %1671 = vrot.lane.b32.xlu0 %v806, 96
        %v1672 = vpop.permute.xlu0 %1671
        %1673 = vrot.lane.b32.xlu0 %v808, 96
        %v1674 = vpop.permute.xlu0 %1673
        %1675 = vrot.lane.b32.xlu0 %v811, 96
        %v1676 = vpop.permute.xlu0 %1675
        %1677 = vrot.lane.b32.xlu0 %v813, 96
        %v1678 = vpop.permute.xlu0 %1677
        %1679 = vrot.lane.b32.xlu0 %v1287, 96
        %v1680 = vpop.permute.xlu0 %1679
        %1681 = vrot.lane.b32.xlu0 %v1289, 96
        %v1682 = vpop.permute.xlu0 %1681
        %1683 = vrot.lane.b32.xlu0 %v1620, 96
        %v1684 = vpop.permute.xlu0 %1683
        %1685 = vrot.lane.b32.xlu0 %v1622, 96
        %v1686 = vpop.permute.xlu0 %1685
        %1719 = vst.msk [vmem:[#allocation3 + $0x8] sm:$0xff] %vm1251, %v1624
        %1720 = vst.msk [vmem:[#allocation3 + $0x20] sm:$0xff] %vm1251, %v1626
        %1721 = vst.msk [vmem:[#allocation3 + $0x38] sm:$0xff] %vm1251, %v1628
        %1722 = vst.msk [vmem:[#allocation3 + $0x50] sm:$0xff] %vm1251, %v1630
        %1723 = vst.msk [vmem:[#allocation3 + $0x68] sm:$0xff] %vm1251, %v1632
        %1724 = vst.msk [vmem:[#allocation3 + $0x80] sm:$0xff] %vm1251, %v1634
        %1725 = vst.msk [vmem:[#allocation3 + $0x98] sm:$0xff] %vm1251, %v1636
        %1726 = vst.msk [vmem:[#allocation3 + $0xb0] sm:$0xff] %vm1251, %v1638
        %1727 = vst.msk [vmem:[#allocation3 + $0xc8] sm:$0xff] %vm1251, %v1640
        %1728 = vst.msk [vmem:[#allocation3 + $0xe0] sm:$0xff] %vm1251, %v1642
        %1729 = vst.msk [vmem:[#allocation3 + $0xf8] sm:$0xff] %vm1251, %v1644
        %1730 = vst.msk [vmem:[#allocation3 + $0x110] sm:$0xff] %vm1251, %v1646
        %1731 = vst.msk [vmem:[#allocation3 + $0x128] sm:$0xff] %vm1251, %v1648
        %1732 = vst.msk [vmem:[#allocation3 + $0x140] sm:$0xff] %vm1251, %v1650
        %1733 = vst.msk [vmem:[#allocation3 + $0x158] sm:$0xff] %vm1251, %v1652
        %1734 = vst.msk [vmem:[#allocation3 + $0x170] sm:$0xff] %vm1251, %v1654
        %1735 = vst.msk [vmem:[#allocation3 + $0x188] sm:$0xff] %vm1251, %v1656
        %1736 = vst.msk [vmem:[#allocation3 + $0x1a0] sm:$0xff] %vm1251, %v1658
        %1737 = vst.msk [vmem:[#allocation3 + $0x1b8] sm:$0xff] %vm1251, %v1660
        %1738 = vst.msk [vmem:[#allocation3 + $0x1d0] sm:$0xff] %vm1251, %v1662
        %1739 = vst.msk [vmem:[#allocation3 + $0x1e8] sm:$0xff] %vm1251, %v1664
        %1740 = vst.msk [vmem:[#allocation3 + $0x200] sm:$0xff] %vm1251, %v1666
        %1741 = vst.msk [vmem:[#allocation3 + $0x218] sm:$0xff] %vm1251, %v1668
        %1742 = vst.msk [vmem:[#allocation3 + $0x230] sm:$0xff] %vm1251, %v1670
        %1743 = vst.msk [vmem:[#allocation3 + $0x248] sm:$0xff] %vm1251, %v1672
        %1744 = vst.msk [vmem:[#allocation3 + $0x260] sm:$0xff] %vm1251, %v1674
        %1745 = vst.msk [vmem:[#allocation3 + $0x278] sm:$0xff] %vm1251, %v1676
        %1746 = vst.msk [vmem:[#allocation3 + $0x290] sm:$0xff] %vm1251, %v1678
        %1747 = vst.msk [vmem:[#allocation3 + $0x2a8] sm:$0xff] %vm1251, %v1680
        %1748 = vst.msk [vmem:[#allocation3 + $0x2c0] sm:$0xff] %vm1251, %v1682
        %1749 = vst.msk [vmem:[#allocation3 + $0x2d8] sm:$0xff] %vm1251, %v1684
        %1750 = vst.msk [vmem:[#allocation3 + $0x2f0] sm:$0xff] %vm1251, %v1686
        %v1751 = vrot.slane %v650, 2
        %v1752 = vrot.slane %v651, 2
        %v1753 = vsel %vm943, %v1751, %v1752
        %v1754 = vrot.slane %v652, 2
        %v1755 = vsel %vm943, %v1752, %v1754
        %1788 = vst.msk [vmem:[#allocation3 + $0x10] sm:$0xff] %vm510, %v956
        %1789 = vst.msk [vmem:[#allocation3 + $0x28] sm:$0xff] %vm510, %v958
        %1790 = vst.msk [vmem:[#allocation3 + $0x40] sm:$0xff] %vm510, %v961
        %1791 = vst.msk [vmem:[#allocation3 + $0x58] sm:$0xff] %vm510, %v963
        %1792 = vst.msk [vmem:[#allocation3 + $0x70] sm:$0xff] %vm510, %v966
        %1793 = vst.msk [vmem:[#allocation3 + $0x88] sm:$0xff] %vm510, %v968
        %1794 = vst.msk [vmem:[#allocation3 + $0xa0] sm:$0xff] %vm510, %v971
        %1795 = vst.msk [vmem:[#allocation3 + $0xb8] sm:$0xff] %vm510, %v973
        %1796 = vst.msk [vmem:[#allocation3 + $0xd0] sm:$0xff] %vm510, %v976
        %1797 = vst.msk [vmem:[#allocation3 + $0xe8] sm:$0xff] %vm510, %v978
        %1798 = vst.msk [vmem:[#allocation3 + $0x100] sm:$0xff] %vm510, %v981
        %1799 = vst.msk [vmem:[#allocation3 + $0x118] sm:$0xff] %vm510, %v983
        %1800 = vst.msk [vmem:[#allocation3 + $0x130] sm:$0xff] %vm510, %v986
        %1801 = vst.msk [vmem:[#allocation3 + $0x148] sm:$0xff] %vm510, %v988
        %1802 = vst.msk [vmem:[#allocation3 + $0x160] sm:$0xff] %vm510, %v991
        %1803 = vst.msk [vmem:[#allocation3 + $0x178] sm:$0xff] %vm510, %v993
        %1804 = vst.msk [vmem:[#allocation3 + $0x190] sm:$0xff] %vm510, %v996
        %1805 = vst.msk [vmem:[#allocation3 + $0x1a8] sm:$0xff] %vm510, %v998
        %1806 = vst.msk [vmem:[#allocation3 + $0x1c0] sm:$0xff] %vm510, %v1001
        %1807 = vst.msk [vmem:[#allocation3 + $0x1d8] sm:$0xff] %vm510, %v1003
        %1808 = vst.msk [vmem:[#allocation3 + $0x1f0] sm:$0xff] %vm510, %v1006
        %1809 = vst.msk [vmem:[#allocation3 + $0x208] sm:$0xff] %vm510, %v1008
        %1810 = vst.msk [vmem:[#allocation3 + $0x220] sm:$0xff] %vm510, %v1011
        %1811 = vst.msk [vmem:[#allocation3 + $0x238] sm:$0xff] %vm510, %v1013
        %1812 = vst.msk [vmem:[#allocation3 + $0x250] sm:$0xff] %vm510, %v1016
        %1813 = vst.msk [vmem:[#allocation3 + $0x268] sm:$0xff] %vm510, %v1018
        %1814 = vst.msk [vmem:[#allocation3 + $0x280] sm:$0xff] %vm510, %v1021
        %1815 = vst.msk [vmem:[#allocation3 + $0x298] sm:$0xff] %vm510, %v1023
        %1816 = vst.msk [vmem:[#allocation3 + $0x2b0] sm:$0xff] %vm510, %v1356
        %1817 = vst.msk [vmem:[#allocation3 + $0x2c8] sm:$0xff] %vm510, %v1358
        %1818 = vst.msk [vmem:[#allocation3 + $0x2e0] sm:$0xff] %vm510, %v1753
        %1819 = vst.msk [vmem:[#allocation3 + $0x2f8] sm:$0xff] %vm510, %v1755
        %v1820 = vld [vmem:[#allocation3] sm:$0xff]
        %v1821 = vld [vmem:[#allocation3 + $0x8] sm:$0xff]
        %v1822 = vld [vmem:[#allocation3 + $0x10] sm:$0xff]
        %v1823 = vld [vmem:[#allocation3 + $0x18] sm:$0xff]
        %v1824 = vld [vmem:[#allocation3 + $0x20] sm:$0xff]
        %v1825 = vld [vmem:[#allocation3 + $0x28] sm:$0xff]
        %v1826 = vld [vmem:[#allocation3 + $0x30] sm:$0xff]
        %v1827 = vld [vmem:[#allocation3 + $0x38] sm:$0xff]
        %v1828 = vld [vmem:[#allocation3 + $0x40] sm:$0xff]
        %v1829 = vld [vmem:[#allocation3 + $0x48] sm:$0xff]
        %v1830 = vld [vmem:[#allocation3 + $0x50] sm:$0xff]
        %v1831 = vld [vmem:[#allocation3 + $0x58] sm:$0xff]
        %v1832 = vld [vmem:[#allocation3 + $0x60] sm:$0xff]
        %v1833 = vld [vmem:[#allocation3 + $0x68] sm:$0xff]
        %v1834 = vld [vmem:[#allocation3 + $0x70] sm:$0xff]
        %v1835 = vld [vmem:[#allocation3 + $0x78] sm:$0xff]
        %v1836 = vld [vmem:[#allocation3 + $0x80] sm:$0xff]
        %v1837 = vld [vmem:[#allocation3 + $0x88] sm:$0xff]
        %v1838 = vld [vmem:[#allocation3 + $0x90] sm:$0xff]
        %v1839 = vld [vmem:[#allocation3 + $0x98] sm:$0xff]
        %v1840 = vld [vmem:[#allocation3 + $0xa0] sm:$0xff]
        %v1841 = vld [vmem:[#allocation3 + $0xa8] sm:$0xff]
        %v1842 = vld [vmem:[#allocation3 + $0xb0] sm:$0xff]
        %v1843 = vld [vmem:[#allocation3 + $0xb8] sm:$0xff]
        %v1844 = vld [vmem:[#allocation3 + $0xc0] sm:$0xff]
        %v1845 = vld [vmem:[#allocation3 + $0xc8] sm:$0xff]
        %v1846 = vld [vmem:[#allocation3 + $0xd0] sm:$0xff]
        %v1847 = vld [vmem:[#allocation3 + $0xd8] sm:$0xff]
        %v1848 = vld [vmem:[#allocation3 + $0xe0] sm:$0xff]
        %v1849 = vld [vmem:[#allocation3 + $0xe8] sm:$0xff]
        %v1850 = vld [vmem:[#allocation3 + $0xf0] sm:$0xff]
        %v1851 = vld [vmem:[#allocation3 + $0xf8] sm:$0xff]
        %v1852 = vld [vmem:[#allocation3 + $0x100] sm:$0xff]
        %v1853 = vld [vmem:[#allocation3 + $0x108] sm:$0xff]
        %v1854 = vld [vmem:[#allocation3 + $0x110] sm:$0xff]
        %v1855 = vld [vmem:[#allocation3 + $0x118] sm:$0xff]
        %v1856 = vld [vmem:[#allocation3 + $0x120] sm:$0xff]
        %v1857 = vld [vmem:[#allocation3 + $0x128] sm:$0xff]
        %v1858 = vld [vmem:[#allocation3 + $0x130] sm:$0xff]
        %v1859 = vld [vmem:[#allocation3 + $0x138] sm:$0xff]
        %v1860 = vld [vmem:[#allocation3 + $0x140] sm:$0xff]
        %v1861 = vld [vmem:[#allocation3 + $0x148] sm:$0xff]
        %v1862 = vld [vmem:[#allocation3 + $0x150] sm:$0xff]
        %v1863 = vld [vmem:[#allocation3 + $0x158] sm:$0xff]
        %v1864 = vld [vmem:[#allocation3 + $0x160] sm:$0xff]
        %v1865 = vld [vmem:[#allocation3 + $0x168] sm:$0xff]
        %v1866 = vld [vmem:[#allocation3 + $0x170] sm:$0xff]
        %v1867 = vld [vmem:[#allocation3 + $0x178] sm:$0xff]
        %v1868 = vld [vmem:[#allocation3 + $0x180] sm:$0xff]
        %v1869 = vld [vmem:[#allocation3 + $0x188] sm:$0xff]
        %v1870 = vld [vmem:[#allocation3 + $0x190] sm:$0xff]
        %v1871 = vld [vmem:[#allocation3 + $0x198] sm:$0xff]
        %v1872 = vld [vmem:[#allocation3 + $0x1a0] sm:$0xff]
        %v1873 = vld [vmem:[#allocation3 + $0x1a8] sm:$0xff]
        %v1874 = vld [vmem:[#allocation3 + $0x1b0] sm:$0xff]
        %v1875 = vld [vmem:[#allocation3 + $0x1b8] sm:$0xff]
        %v1876 = vld [vmem:[#allocation3 + $0x1c0] sm:$0xff]
        %v1877 = vld [vmem:[#allocation3 + $0x1c8] sm:$0xff]
        %v1878 = vld [vmem:[#allocation3 + $0x1d0] sm:$0xff]
        %v1879 = vld [vmem:[#allocation3 + $0x1d8] sm:$0xff]
        %v1880 = vld [vmem:[#allocation3 + $0x1e0] sm:$0xff]
        %v1881 = vld [vmem:[#allocation3 + $0x1e8] sm:$0xff]
        %v1882 = vld [vmem:[#allocation3 + $0x1f0] sm:$0xff]
        %v1883 = vld [vmem:[#allocation3 + $0x1f8] sm:$0xff]
        %v1884 = vld [vmem:[#allocation3 + $0x200] sm:$0xff]
        %v1885 = vld [vmem:[#allocation3 + $0x208] sm:$0xff]
        %v1886 = vld [vmem:[#allocation3 + $0x210] sm:$0xff]
        %v1887 = vld [vmem:[#allocation3 + $0x218] sm:$0xff]
        %v1888 = vld [vmem:[#allocation3 + $0x220] sm:$0xff]
        %v1889 = vld [vmem:[#allocation3 + $0x228] sm:$0xff]
        %v1890 = vld [vmem:[#allocation3 + $0x230] sm:$0xff]
        %v1891 = vld [vmem:[#allocation3 + $0x238] sm:$0xff]
        %v1892 = vld [vmem:[#allocation3 + $0x240] sm:$0xff]
        %v1893 = vld [vmem:[#allocation3 + $0x248] sm:$0xff]
        %v1894 = vld [vmem:[#allocation3 + $0x250] sm:$0xff]
        %v1895 = vld [vmem:[#allocation3 + $0x258] sm:$0xff]
        %v1896 = vld [vmem:[#allocation3 + $0x260] sm:$0xff]
        %v1897 = vld [vmem:[#allocation3 + $0x268] sm:$0xff]
        %v1898 = vld [vmem:[#allocation3 + $0x270] sm:$0xff]
        %v1899 = vld [vmem:[#allocation3 + $0x278] sm:$0xff]
        %v1900 = vld [vmem:[#allocation3 + $0x280] sm:$0xff]
        %v1901 = vld [vmem:[#allocation3 + $0x288] sm:$0xff]
        %v1902 = vld [vmem:[#allocation3 + $0x290] sm:$0xff]
        %v1903 = vld [vmem:[#allocation3 + $0x298] sm:$0xff]
        %v1904 = vld [vmem:[#allocation3 + $0x2a0] sm:$0xff]
        %v1905 = vld [vmem:[#allocation3 + $0x2a8] sm:$0xff]
        %v1906 = vld [vmem:[#allocation3 + $0x2b0] sm:$0xff]
        %v1907 = vld [vmem:[#allocation3 + $0x2b8] sm:$0xff]
        %v1908 = vld [vmem:[#allocation3 + $0x2c0] sm:$0xff]
        %v1909 = vld [vmem:[#allocation3 + $0x2c8] sm:$0xff]
        %v1910 = vld [vmem:[#allocation3 + $0x2d0] sm:$0xff]
        %v1911 = vld [vmem:[#allocation3 + $0x2d8] sm:$0xff]
        %v1912 = vld [vmem:[#allocation3 + $0x2e0] sm:$0xff]
        %v1913 = vld [vmem:[#allocation3 + $0x2e8] sm:$0xff]
        %v1914 = vld [vmem:[#allocation3 + $0x2f0] sm:$0xff]
        %v1915 = vld [vmem:[#allocation3 + $0x2f8] sm:$0xff]
        %v1916 = vld [vmem:[%s3] sm:$0xff]
        %v1917 = vld [vmem:[%s3 + $0x8] sm:$0xff]
        %v1918 = vld [vmem:[%s3 + $0x10] sm:$0xff]
        %v1919 = vld [vmem:[%s3 + $0x18] sm:$0xff]
        %v1920 = vld [vmem:[%s3 + $0x20] sm:$0xff]
        %v1921 = vld [vmem:[%s3 + $0x28] sm:$0xff]
        %v1922 = vld [vmem:[%s3 + $0x30] sm:$0xff]
        %v1923 = vld [vmem:[%s3 + $0x38] sm:$0xff]
        %v1924 = vld [vmem:[%s3 + $0x40] sm:$0xff]
        %v1925 = vld [vmem:[%s3 + $0x48] sm:$0xff]
        %v1926 = vld [vmem:[%s3 + $0x50] sm:$0xff]
        %v1927 = vld [vmem:[%s3 + $0x58] sm:$0xff]
        %v1928 = vld [vmem:[%s3 + $0x60] sm:$0xff]
        %v1929 = vld [vmem:[%s3 + $0x68] sm:$0xff]
        %v1930 = vld [vmem:[%s3 + $0x70] sm:$0xff]
        %v1931 = vld [vmem:[%s3 + $0x78] sm:$0xff]
        %v1932 = vld [vmem:[%s3 + $0x80] sm:$0xff]
        %v1933 = vld [vmem:[%s3 + $0x88] sm:$0xff]
        %v1934 = vld [vmem:[%s3 + $0x90] sm:$0xff]
        %v1935 = vld [vmem:[%s3 + $0x98] sm:$0xff]
        %v1936 = vld [vmem:[%s3 + $0xa0] sm:$0xff]
        %v1937 = vld [vmem:[%s3 + $0xa8] sm:$0xff]
        %v1938 = vld [vmem:[%s3 + $0xb0] sm:$0xff]
        %v1939 = vld [vmem:[%s3 + $0xb8] sm:$0xff]
        %v1940 = vld [vmem:[%s3 + $0xc0] sm:$0xff]
        %v1941 = vld [vmem:[%s3 + $0xc8] sm:$0xff]
        %v1942 = vld [vmem:[%s3 + $0xd0] sm:$0xff]
        %v1943 = vld [vmem:[%s3 + $0xd8] sm:$0xff]
        %v1944 = vld [vmem:[%s3 + $0xe0] sm:$0xff]
        %v1945 = vld [vmem:[%s3 + $0xe8] sm:$0xff]
        %v1946 = vld [vmem:[%s3 + $0xf0] sm:$0xff]
        %v1947 = vld [vmem:[%s3 + $0xf8] sm:$0xff]
        %v1948 = vld [vmem:[%s3 + $0x100] sm:$0xff]
        %v1949 = vld [vmem:[%s3 + $0x108] sm:$0xff]
        %v1950 = vld [vmem:[%s3 + $0x110] sm:$0xff]
        %v1951 = vld [vmem:[%s3 + $0x118] sm:$0xff]
        %v1952 = vld [vmem:[%s4] sm:$0x1]
        %v1954 = vperm.slane %v1952, 0
        %v1957 = vsel %vm510, %v1822, 0
        %v1960 = vsel %vm510, %v1825, 0
        %v1963 = vsel %vm510, %v1828, 0
        %v1966 = vsel %vm510, %v1831, 0
        %v1969 = vsel %vm510, %v1834, 0
        %v1972 = vsel %vm510, %v1837, 0
        %v1975 = vsel %vm510, %v1840, 0
        %v1978 = vsel %vm510, %v1843, 0
        %v1981 = vsel %vm510, %v1846, 0
        %v1984 = vsel %vm510, %v1849, 0
        %v1987 = vsel %vm510, %v1852, 0
        %v1990 = vsel %vm510, %v1855, 0
        %v1993 = vsel %vm510, %v1858, 0
        %v1996 = vsel %vm510, %v1861, 0
        %v1999 = vsel %vm510, %v1864, 0
        %v2002 = vsel %vm510, %v1867, 0
        %v2005 = vsel %vm510, %v1870, 0
        %v2008 = vsel %vm510, %v1873, 0
        %v2011 = vsel %vm510, %v1876, 0
        %v2014 = vsel %vm510, %v1879, 0
        %v2017 = vsel %vm510, %v1882, 0
        %v2020 = vsel %vm510, %v1885, 0
        %v2023 = vsel %vm510, %v1888, 0
        %v2026 = vsel %vm510, %v1891, 0
        %v2029 = vsel %vm510, %v1894, 0
        %v2032 = vsel %vm510, %v1897, 0
        %v2035 = vsel %vm510, %v1900, 0
        %v2038 = vsel %vm510, %v1903, 0
        %v2041 = vsel %vm510, %v1906, 0
        %v2044 = vsel %vm510, %v1909, 0
        %v2047 = vsel %vm510, %v1912, 0
        %v2050 = vsel %vm510, %v1915, 0
        %2052 = vmatpush.msra.mxu0 %v1931
        %2053 = vmatpush.msra.mxu0 %v1930
        %2054 = vmatpush.msra.mxu0 %v1929
        %2055 = vmatpush.msra.mxu0 %v1928
        %2056 = vmatpush.msra.mxu0 %v1927
        %2057 = vmatpush.msra.mxu0 %v1926
        %2058 = vmatpush.msra.mxu0 %v1925
        %2059 = vmatpush.msra.mxu0 %v1924
        %2060 = vmatpush.msra.mxu0 %v1923
        %2061 = vmatpush.msra.mxu0 %v1922
        %2062 = vmatpush.msra.mxu0 %v1921
        %2063 = vmatpush.msra.mxu0 %v1920
        %2064 = vmatpush.msra.mxu0 %v1919
        %2065 = vmatpush.msra.mxu0 %v1918
        %2066 = vmatpush.msra.mxu0 %v1917
        %2067 = vmatpush.msra.mxu0 %v1916
        %2068 = vmatmul.f32.gmra.mxu0 %v1820
        %v2069 = vpop.f32.mrf.mxu0
        %v2070 = vadd.f32 %v1954, %v2069
        %2071 = vmatmul.f32.gmra.mxu0 %v1823
        %v2072 = vpop.f32.mrf.mxu0
        %v2073 = vadd.f32 %v1954, %v2072
        %2074 = vmatmul.f32.gmra.mxu0 %v1826
        %v2075 = vpop.f32.mrf.mxu0
        %v2076 = vadd.f32 %v1954, %v2075
        %2077 = vmatmul.f32.gmra.mxu0 %v1829
        %v2078 = vpop.f32.mrf.mxu0
        %v2079 = vadd.f32 %v1954, %v2078
        %2080 = vmatmul.f32.gmra.mxu0 %v1832
        %v2081 = vpop.f32.mrf.mxu0
        %v2082 = vadd.f32 %v1954, %v2081
        %2083 = vmatmul.f32.gmra.mxu0 %v1835
        %v2084 = vpop.f32.mrf.mxu0
        %v2085 = vadd.f32 %v1954, %v2084
        %2086 = vmatmul.f32.gmra.mxu0 %v1838
        %v2087 = vpop.f32.mrf.mxu0
        %v2088 = vadd.f32 %v1954, %v2087
        %2089 = vmatmul.f32.gmra.mxu0 %v1841
        %v2090 = vpop.f32.mrf.mxu0
        %v2091 = vadd.f32 %v1954, %v2090
        %2092 = vmatmul.f32.gmra.mxu0 %v1844
        %v2093 = vpop.f32.mrf.mxu0
        %v2094 = vadd.f32 %v1954, %v2093
        %2095 = vmatmul.f32.gmra.mxu0 %v1847
        %v2096 = vpop.f32.mrf.mxu0
        %v2097 = vadd.f32 %v1954, %v2096
        %2098 = vmatmul.f32.gmra.mxu0 %v1850
        %v2099 = vpop.f32.mrf.mxu0
        %v2100 = vadd.f32 %v1954, %v2099
        %2101 = vmatmul.f32.gmra.mxu0 %v1853
        %v2102 = vpop.f32.mrf.mxu0
        %v2103 = vadd.f32 %v1954, %v2102
        %2104 = vmatmul.f32.gmra.mxu0 %v1856
        %v2105 = vpop.f32.mrf.mxu0
        %v2106 = vadd.f32 %v1954, %v2105
        %2107 = vmatmul.f32.gmra.mxu0 %v1859
        %v2108 = vpop.f32.mrf.mxu0
        %v2109 = vadd.f32 %v1954, %v2108
        %2110 = vmatmul.f32.gmra.mxu0 %v1862
        %v2111 = vpop.f32.mrf.mxu0
        %v2112 = vadd.f32 %v1954, %v2111
        %2113 = vmatmul.f32.gmra.mxu0 %v1865
        %v2114 = vpop.f32.mrf.mxu0
        %v2115 = vadd.f32 %v1954, %v2114
        %2116 = vmatmul.f32.gmra.mxu0 %v1868
        %v2117 = vpop.f32.mrf.mxu0
        %v2118 = vadd.f32 %v1954, %v2117
        %2119 = vmatmul.f32.gmra.mxu0 %v1871
        %v2120 = vpop.f32.mrf.mxu0
        %v2121 = vadd.f32 %v1954, %v2120
        %2122 = vmatmul.f32.gmra.mxu0 %v1874
        %v2123 = vpop.f32.mrf.mxu0
        %v2124 = vadd.f32 %v1954, %v2123
        %2125 = vmatmul.f32.gmra.mxu0 %v1877
        %v2126 = vpop.f32.mrf.mxu0
        %v2127 = vadd.f32 %v1954, %v2126
        %2128 = vmatmul.f32.gmra.mxu0 %v1880
        %v2129 = vpop.f32.mrf.mxu0
        %v2130 = vadd.f32 %v1954, %v2129
        %2131 = vmatmul.f32.gmra.mxu0 %v1883
        %v2132 = vpop.f32.mrf.mxu0
        %v2133 = vadd.f32 %v1954, %v2132
        %2134 = vmatmul.f32.gmra.mxu0 %v1886
        %v2135 = vpop.f32.mrf.mxu0
        %v2136 = vadd.f32 %v1954, %v2135
        %2137 = vmatmul.f32.gmra.mxu0 %v1889
        %v2138 = vpop.f32.mrf.mxu0
        %v2139 = vadd.f32 %v1954, %v2138
        %2140 = vmatmul.f32.gmra.mxu0 %v1892
        %v2141 = vpop.f32.mrf.mxu0
        %v2142 = vadd.f32 %v1954, %v2141
        %2143 = vmatmul.f32.gmra.mxu0 %v1895
        %v2144 = vpop.f32.mrf.mxu0
        %v2145 = vadd.f32 %v1954, %v2144
        %2146 = vmatmul.f32.gmra.mxu0 %v1898
        %v2147 = vpop.f32.mrf.mxu0
        %v2148 = vadd.f32 %v1954, %v2147
        %2149 = vmatmul.f32.gmra.mxu0 %v1901
        %v2150 = vpop.f32.mrf.mxu0
        %v2151 = vadd.f32 %v1954, %v2150
        %2152 = vmatmul.f32.gmra.mxu0 %v1904
        %v2153 = vpop.f32.mrf.mxu0
        %v2154 = vadd.f32 %v1954, %v2153
        %2155 = vmatmul.f32.gmra.mxu0 %v1907
        %v2156 = vpop.f32.mrf.mxu0
        %v2157 = vadd.f32 %v1954, %v2156
        %2158 = vmatmul.f32.gmra.mxu0 %v1910
        %v2159 = vpop.f32.mrf.mxu0
        %v2160 = vadd.f32 %v1954, %v2159
        %2161 = vmatmul.f32.gmra.mxu0 %v1913
        %v2162 = vpop.f32.mrf.mxu0
        %v2163 = vadd.f32 %v1954, %v2162
        %2164 = vdwg.mxu0
        %2165 = vmatpush.msra.mxu0 %v1947
        %2166 = vmatpush.msra.mxu0 %v1946
        %2167 = vmatpush.msra.mxu0 %v1945
        %2168 = vmatpush.msra.mxu0 %v1944
        %2169 = vmatpush.msra.mxu0 %v1943
        %2170 = vmatpush.msra.mxu0 %v1942
        %2171 = vmatpush.msra.mxu0 %v1941
        %2172 = vmatpush.msra.mxu0 %v1940
        %2173 = vmatpush.msra.mxu0 %v1939
        %2174 = vmatpush.msra.mxu0 %v1938
        %2175 = vmatpush.msra.mxu0 %v1937
        %2176 = vmatpush.msra.mxu0 %v1936
        %2177 = vmatpush.msra.mxu0 %v1935
        %2178 = vmatpush.msra.mxu0 %v1934
        %2179 = vmatpush.msra.mxu0 %v1933
        %2180 = vmatpush.msra.mxu0 %v1932
        %2181 = vmatmul.f32.gmra.mxu0 %v1821
        %v2182 = vpop.f32.mrf.mxu0
        %v2183 = vadd.f32 %v2070, %v2182
        %2184 = vmatmul.f32.gmra.mxu0 %v1824
        %v2185 = vpop.f32.mrf.mxu0
        %v2186 = vadd.f32 %v2073, %v2185
        %2187 = vmatmul.f32.gmra.mxu0 %v1827
        %v2188 = vpop.f32.mrf.mxu0
        %v2189 = vadd.f32 %v2076, %v2188
        %2190 = vmatmul.f32.gmra.mxu0 %v1830
        %v2191 = vpop.f32.mrf.mxu0
        %v2192 = vadd.f32 %v2079, %v2191
        %2193 = vmatmul.f32.gmra.mxu0 %v1833
        %v2194 = vpop.f32.mrf.mxu0
        %v2195 = vadd.f32 %v2082, %v2194
        %2196 = vmatmul.f32.gmra.mxu0 %v1836
        %v2197 = vpop.f32.mrf.mxu0
        %v2198 = vadd.f32 %v2085, %v2197
        %2199 = vmatmul.f32.gmra.mxu0 %v1839
        %v2200 = vpop.f32.mrf.mxu0
        %v2201 = vadd.f32 %v2088, %v2200
        %2202 = vmatmul.f32.gmra.mxu0 %v1842
        %v2203 = vpop.f32.mrf.mxu0
        %v2204 = vadd.f32 %v2091, %v2203
        %2205 = vmatmul.f32.gmra.mxu0 %v1845
        %v2206 = vpop.f32.mrf.mxu0
        %v2207 = vadd.f32 %v2094, %v2206
        %2208 = vmatmul.f32.gmra.mxu0 %v1848
        %v2209 = vpop.f32.mrf.mxu0
        %v2210 = vadd.f32 %v2097, %v2209
        %2211 = vmatmul.f32.gmra.mxu0 %v1851
        %v2212 = vpop.f32.mrf.mxu0
        %v2213 = vadd.f32 %v2100, %v2212
        %2214 = vmatmul.f32.gmra.mxu0 %v1854
        %v2215 = vpop.f32.mrf.mxu0
        %v2216 = vadd.f32 %v2103, %v2215
        %2217 = vmatmul.f32.gmra.mxu0 %v1857
        %v2218 = vpop.f32.mrf.mxu0
        %v2219 = vadd.f32 %v2106, %v2218
        %2220 = vmatmul.f32.gmra.mxu0 %v1860
        %v2221 = vpop.f32.mrf.mxu0
        %v2222 = vadd.f32 %v2109, %v2221
        %2223 = vmatmul.f32.gmra.mxu0 %v1863
        %v2224 = vpop.f32.mrf.mxu0
        %v2225 = vadd.f32 %v2112, %v2224
        %2226 = vmatmul.f32.gmra.mxu0 %v1866
        %v2227 = vpop.f32.mrf.mxu0
        %v2228 = vadd.f32 %v2115, %v2227
        %2229 = vmatmul.f32.gmra.mxu0 %v1869
        %v2230 = vpop.f32.mrf.mxu0
        %v2231 = vadd.f32 %v2118, %v2230
        %2232 = vmatmul.f32.gmra.mxu0 %v1872
        %v2233 = vpop.f32.mrf.mxu0
        %v2234 = vadd.f32 %v2121, %v2233
        %2235 = vmatmul.f32.gmra.mxu0 %v1875
        %v2236 = vpop.f32.mrf.mxu0
        %v2237 = vadd.f32 %v2124, %v2236
        %2238 = vmatmul.f32.gmra.mxu0 %v1878
        %v2239 = vpop.f32.mrf.mxu0
        %v2240 = vadd.f32 %v2127, %v2239
        %2241 = vmatmul.f32.gmra.mxu0 %v1881
        %v2242 = vpop.f32.mrf.mxu0
        %v2243 = vadd.f32 %v2130, %v2242
        %2244 = vmatmul.f32.gmra.mxu0 %v1884
        %v2245 = vpop.f32.mrf.mxu0
        %v2246 = vadd.f32 %v2133, %v2245
        %2247 = vmatmul.f32.gmra.mxu0 %v1887
        %v2248 = vpop.f32.mrf.mxu0
        %v2249 = vadd.f32 %v2136, %v2248
        %2250 = vmatmul.f32.gmra.mxu0 %v1890
        %v2251 = vpop.f32.mrf.mxu0
        %v2252 = vadd.f32 %v2139, %v2251
        %2253 = vmatmul.f32.gmra.mxu0 %v1893
        %v2254 = vpop.f32.mrf.mxu0
        %v2255 = vadd.f32 %v2142, %v2254
        %2256 = vmatmul.f32.gmra.mxu0 %v1896
        %v2257 = vpop.f32.mrf.mxu0
        %v2258 = vadd.f32 %v2145, %v2257
        %2259 = vmatmul.f32.gmra.mxu0 %v1899
        %v2260 = vpop.f32.mrf.mxu0
        %v2261 = vadd.f32 %v2148, %v2260
        %2262 = vmatmul.f32.gmra.mxu0 %v1902
        %v2263 = vpop.f32.mrf.mxu0
        %v2264 = vadd.f32 %v2151, %v2263
        %2265 = vmatmul.f32.gmra.mxu0 %v1905
        %v2266 = vpop.f32.mrf.mxu0
        %v2267 = vadd.f32 %v2154, %v2266
        %2268 = vmatmul.f32.gmra.mxu0 %v1908
        %v2269 = vpop.f32.mrf.mxu0
        %v2270 = vadd.f32 %v2157, %v2269
        %2271 = vmatmul.f32.gmra.mxu0 %v1911
        %v2272 = vpop.f32.mrf.mxu0
        %v2273 = vadd.f32 %v2160, %v2272
        %2274 = vmatmul.f32.gmra.mxu0 %v1914
        %v2275 = vpop.f32.mrf.mxu0
        %v2276 = vadd.f32 %v2163, %v2275
        %2277 = vdwg.mxu0
        %2278 = vmatpush.msra.mxu0 0.0
        %2279 = vmatpush.msra.mxu0 0.0
        %2280 = vmatpush.msra.mxu0 0.0
        %2281 = vmatpush.msra.mxu0 0.0
        %2282 = vmatpush.msra.mxu0 0.0
        %2283 = vmatpush.msra.mxu0 0.0
        %2284 = vmatpush.msra.mxu0 0.0
        %2285 = vmatpush.msra.mxu0 0.0
        %2286 = vmatpush.msra.mxu0 0.0
        %2287 = vmatpush.msra.mxu0 0.0
        %2288 = vmatpush.msra.mxu0 0.0
        %2289 = vmatpush.msra.mxu0 0.0
        %2290 = vmatpush.msra.mxu0 %v1951
        %2291 = vmatpush.msra.mxu0 %v1950
        %2292 = vmatpush.msra.mxu0 %v1949
        %2293 = vmatpush.msra.mxu0 %v1948
        %2294 = vmatmul.f32.gmra.mxu0 %v1957
        %v2295 = vpop.f32.mrf.mxu0
        %v2296 = vadd.f32 %v2183, %v2295
        %2297 = vmatmul.f32.gmra.mxu0 %v1960
        %v2298 = vpop.f32.mrf.mxu0
        %v2299 = vadd.f32 %v2186, %v2298
        %2300 = vmatmul.f32.gmra.mxu0 %v1963
        %v2301 = vpop.f32.mrf.mxu0
        %v2302 = vadd.f32 %v2189, %v2301
        %2303 = vmatmul.f32.gmra.mxu0 %v1966
        %v2304 = vpop.f32.mrf.mxu0
        %v2305 = vadd.f32 %v2192, %v2304
        %2306 = vmatmul.f32.gmra.mxu0 %v1969
        %v2307 = vpop.f32.mrf.mxu0
        %v2308 = vadd.f32 %v2195, %v2307
        %2309 = vmatmul.f32.gmra.mxu0 %v1972
        %v2310 = vpop.f32.mrf.mxu0
        %v2311 = vadd.f32 %v2198, %v2310
        %2312 = vmatmul.f32.gmra.mxu0 %v1975
        %v2313 = vpop.f32.mrf.mxu0
        %v2314 = vadd.f32 %v2201, %v2313
        %2315 = vmatmul.f32.gmra.mxu0 %v1978
        %v2316 = vpop.f32.mrf.mxu0
        %v2317 = vadd.f32 %v2204, %v2316
        %2318 = vmatmul.f32.gmra.mxu0 %v1981
        %v2319 = vpop.f32.mrf.mxu0
        %v2320 = vadd.f32 %v2207, %v2319
        %2321 = vmatmul.f32.gmra.mxu0 %v1984
        %v2322 = vpop.f32.mrf.mxu0
        %v2323 = vadd.f32 %v2210, %v2322
        %2324 = vmatmul.f32.gmra.mxu0 %v1987
        %v2325 = vpop.f32.mrf.mxu0
        %v2326 = vadd.f32 %v2213, %v2325
        %2327 = vmatmul.f32.gmra.mxu0 %v1990
        %v2328 = vpop.f32.mrf.mxu0
        %v2329 = vadd.f32 %v2216, %v2328
        %2330 = vmatmul.f32.gmra.mxu0 %v1993
        %v2331 = vpop.f32.mrf.mxu0
        %v2332 = vadd.f32 %v2219, %v2331
        %2333 = vmatmul.f32.gmra.mxu0 %v1996
        %v2334 = vpop.f32.mrf.mxu0
        %v2335 = vadd.f32 %v2222, %v2334
        %2336 = vmatmul.f32.gmra.mxu0 %v1999
        %v2337 = vpop.f32.mrf.mxu0
        %v2338 = vadd.f32 %v2225, %v2337
        %2339 = vmatmul.f32.gmra.mxu0 %v2002
        %v2340 = vpop.f32.mrf.mxu0
        %v2341 = vadd.f32 %v2228, %v2340
        %2342 = vmatmul.f32.gmra.mxu0 %v2005
        %v2343 = vpop.f32.mrf.mxu0
        %v2344 = vadd.f32 %v2231, %v2343
        %2345 = vmatmul.f32.gmra.mxu0 %v2008
        %v2346 = vpop.f32.mrf.mxu0
        %v2347 = vadd.f32 %v2234, %v2346
        %2348 = vmatmul.f32.gmra.mxu0 %v2011
        %v2349 = vpop.f32.mrf.mxu0
        %v2350 = vadd.f32 %v2237, %v2349
        %2351 = vmatmul.f32.gmra.mxu0 %v2014
        %v2352 = vpop.f32.mrf.mxu0
        %v2353 = vadd.f32 %v2240, %v2352
        %2354 = vmatmul.f32.gmra.mxu0 %v2017
        %v2355 = vpop.f32.mrf.mxu0
        %v2356 = vadd.f32 %v2243, %v2355
        %2357 = vmatmul.f32.gmra.mxu0 %v2020
        %v2358 = vpop.f32.mrf.mxu0
        %v2359 = vadd.f32 %v2246, %v2358
        %2360 = vmatmul.f32.gmra.mxu0 %v2023
        %v2361 = vpop.f32.mrf.mxu0
        %v2362 = vadd.f32 %v2249, %v2361
        %2363 = vmatmul.f32.gmra.mxu0 %v2026
        %v2364 = vpop.f32.mrf.mxu0
        %v2365 = vadd.f32 %v2252, %v2364
        %2366 = vmatmul.f32.gmra.mxu0 %v2029
        %v2367 = vpop.f32.mrf.mxu0
        %v2368 = vadd.f32 %v2255, %v2367
        %2369 = vmatmul.f32.gmra.mxu0 %v2032
        %v2370 = vpop.f32.mrf.mxu0
        %v2371 = vadd.f32 %v2258, %v2370
        %2372 = vmatmul.f32.gmra.mxu0 %v2035
        %v2373 = vpop.f32.mrf.mxu0
        %v2374 = vadd.f32 %v2261, %v2373
        %2375 = vmatmul.f32.gmra.mxu0 %v2038
        %v2376 = vpop.f32.mrf.mxu0
        %v2377 = vadd.f32 %v2264, %v2376
        %2378 = vmatmul.f32.gmra.mxu0 %v2041
        %v2379 = vpop.f32.mrf.mxu0
        %v2380 = vadd.f32 %v2267, %v2379
        %2381 = vmatmul.f32.gmra.mxu0 %v2044
        %v2382 = vpop.f32.mrf.mxu0
        %v2383 = vadd.f32 %v2270, %v2382
        %2384 = vmatmul.f32.gmra.mxu0 %v2047
        %v2385 = vpop.f32.mrf.mxu0
        %v2386 = vadd.f32 %v2273, %v2385
        %2387 = vmatmul.f32.gmra.mxu0 %v2050
        %v2388 = vpop.f32.mrf.mxu0
        %v2389 = vadd.f32 %v2276, %v2388
        %2390 = vdwg.mxu0
        %v2391 = vmax.f32 %v2296, 0.0
        %v2392 = vmax.f32 %v2299, 0.0
        %v2393 = vmax.f32 %v2302, 0.0
        %v2394 = vmax.f32 %v2305, 0.0
        %v2395 = vmax.f32 %v2308, 0.0
        %v2396 = vmax.f32 %v2311, 0.0
        %v2397 = vmax.f32 %v2314, 0.0
        %v2398 = vmax.f32 %v2317, 0.0
        %v2399 = vmax.f32 %v2320, 0.0
        %v2400 = vmax.f32 %v2323, 0.0
        %v2401 = vmax.f32 %v2326, 0.0
        %v2402 = vmax.f32 %v2329, 0.0
        %v2403 = vmax.f32 %v2332, 0.0
        %v2404 = vmax.f32 %v2335, 0.0
        %v2405 = vmax.f32 %v2338, 0.0
        %v2406 = vmax.f32 %v2341, 0.0
        %v2407 = vmax.f32 %v2344, 0.0
        %v2408 = vmax.f32 %v2347, 0.0
        %v2409 = vmax.f32 %v2350, 0.0
        %v2410 = vmax.f32 %v2353, 0.0
        %v2411 = vmax.f32 %v2356, 0.0
        %v2412 = vmax.f32 %v2359, 0.0
        %v2413 = vmax.f32 %v2362, 0.0
        %v2414 = vmax.f32 %v2365, 0.0
        %v2415 = vmax.f32 %v2368, 0.0
        %v2416 = vmax.f32 %v2371, 0.0
        %v2417 = vmax.f32 %v2374, 0.0
        %v2418 = vmax.f32 %v2377, 0.0
        %v2419 = vmax.f32 %v2380, 0.0
        %v2420 = vmax.f32 %v2383, 0.0
        %v2421 = vmax.f32 %v2386, 0.0
        %v2422 = vmax.f32 %v2389, 0.0
        %v2455 = vrot.slane %v2391, 2
        %v2456 = vrot.slane %v2391, 4
        %v2457 = vrot.slane %v2391, 6
        %v2458 = vrot.slane %v2392, 2
        %v2459 = vrot.slane %v2392, 4
        %v2460 = vrot.slane %v2392, 6
        %v2461 = vrot.slane %v2393, 2
        %v2462 = vrot.slane %v2393, 4
        %v2463 = vrot.slane %v2393, 6
        %v2464 = vrot.slane %v2394, 2
        %v2465 = vrot.slane %v2394, 4
        %v2466 = vrot.slane %v2394, 6
        %v2467 = vrot.slane %v2395, 2
        %v2468 = vrot.slane %v2395, 4
        %v2469 = vrot.slane %v2395, 6
        %v2470 = vrot.slane %v2396, 2
        %v2471 = vrot.slane %v2396, 4
        %v2472 = vrot.slane %v2396, 6
        %v2473 = vrot.slane %v2397, 2
        %v2474 = vrot.slane %v2397, 4
        %v2475 = vrot.slane %v2397, 6
        %v2476 = vrot.slane %v2398, 2
        %v2477 = vrot.slane %v2398, 4
        %v2478 = vrot.slane %v2398, 6
        %v2479 = vrot.slane %v2399, 2
        %v2480 = vrot.slane %v2399, 4
        %v2481 = vrot.slane %v2399, 6
        %v2482 = vrot.slane %v2400, 2
        %v2483 = vrot.slane %v2400, 4
        %v2484 = vrot.slane %v2400, 6
        %v2485 = vrot.slane %v2401, 2
        %v2486 = vrot.slane %v2401, 4
        %v2487 = vrot.slane %v2401, 6
        %v2488 = vrot.slane %v2402, 2
        %v2489 = vrot.slane %v2402, 4
        %v2490 = vrot.slane %v2402, 6
        %v2491 = vrot.slane %v2403, 2
        %v2492 = vrot.slane %v2403, 4
        %v2493 = vrot.slane %v2403, 6
        %v2494 = vrot.slane %v2404, 2
        %v2495 = vrot.slane %v2404, 4
        %v2496 = vrot.slane %v2404, 6
        %v2497 = vrot.slane %v2405, 2
        %v2498 = vrot.slane %v2405, 4
        %v2499 = vrot.slane %v2405, 6
        %v2500 = vrot.slane %v2406, 2
        %v2501 = vrot.slane %v2406, 4
        %v2502 = vrot.slane %v2406, 6
        %v2503 = vrot.slane %v2407, 2
        %v2504 = vrot.slane %v2407, 4
        %v2505 = vrot.slane %v2407, 6
        %v2506 = vrot.slane %v2408, 2
        %v2507 = vrot.slane %v2408, 4
        %v2508 = vrot.slane %v2408, 6
        %v2509 = vrot.slane %v2409, 2
        %v2510 = vrot.slane %v2409, 4
        %v2511 = vrot.slane %v2409, 6
        %v2512 = vrot.slane %v2410, 2
        %v2513 = vrot.slane %v2410, 4
        %v2514 = vrot.slane %v2410, 6
        %v2515 = vrot.slane %v2411, 2
        %v2516 = vrot.slane %v2411, 4
        %v2517 = vrot.slane %v2411, 6
        %v2518 = vrot.slane %v2412, 2
        %v2519 = vrot.slane %v2412, 4
        %v2520 = vrot.slane %v2412, 6
        %v2521 = vrot.slane %v2413, 2
        %v2522 = vrot.slane %v2413, 4
        %v2523 = vrot.slane %v2413, 6
        %v2524 = vrot.slane %v2414, 2
        %v2525 = vrot.slane %v2414, 4
        %v2526 = vrot.slane %v2414, 6
        %v2527 = vrot.slane %v2415, 2
        %v2528 = vrot.slane %v2415, 4
        %v2529 = vrot.slane %v2415, 6
        %v2530 = vrot.slane %v2416, 2
        %v2531 = vrot.slane %v2416, 4
        %v2532 = vrot.slane %v2416, 6
        %v2533 = vrot.slane %v2417, 2
        %v2534 = vrot.slane %v2417, 4
        %v2535 = vrot.slane %v2417, 6
        %v2536 = vrot.slane %v2418, 2
        %v2537 = vrot.slane %v2418, 4
        %v2538 = vrot.slane %v2418, 6
        %v2539 = vrot.slane %v2419, 2
        %v2540 = vrot.slane %v2419, 4
        %v2541 = vrot.slane %v2419, 6
        %v2542 = vrot.slane %v2420, 2
        %v2543 = vrot.slane %v2420, 4
        %v2544 = vrot.slane %v2420, 6
        %v2545 = vrot.slane %v2421, 2
        %v2546 = vrot.slane %v2421, 4
        %v2547 = vrot.slane %v2421, 6
        %v2548 = vrot.slane %v2422, 2
        %v2549 = vrot.slane %v2422, 4
        %v2550 = vrot.slane %v2422, 6
        %v2647 = vsel %vm513, %v2391, -inf
        %v2648 = vsel %vm513, %v2393, -inf
        %v2649 = vmax.f32 %v2647, %v2648
        %v2650 = vrot.slane %v2649, 4
        %v2651 = vmax.f32 %v2649, %v2650
        %v2652 = vrot.slane %v2651, 2
        %v2653 = vmax.f32 %v2651, %v2652
        %v2654 = vrot.slane %v2653, 1
        %v2655 = vmax.f32 %v2653, %v2654
        %v2656 = vsel %vm513, %v2455, -inf
        %v2657 = vsel %vm513, %v2461, -inf
        %v2658 = vmax.f32 %v2656, %v2657
        %v2659 = vrot.slane %v2658, 4
        %v2660 = vmax.f32 %v2658, %v2659
        %v2661 = vrot.slane %v2660, 2
        %v2662 = vmax.f32 %v2660, %v2661
        %v2663 = vrot.slane %v2662, 1
        %v2664 = vmax.f32 %v2662, %v2663
        %v2665 = vsel %vm513, %v2456, -inf
        %v2666 = vsel %vm513, %v2462, -inf
        %v2667 = vmax.f32 %v2665, %v2666
        %v2668 = vrot.slane %v2667, 4
        %v2669 = vmax.f32 %v2667, %v2668
        %v2670 = vrot.slane %v2669, 2
        %v2671 = vmax.f32 %v2669, %v2670
        %v2672 = vrot.slane %v2671, 1
        %v2673 = vmax.f32 %v2671, %v2672
        %v2674 = vsel %vm513, %v2457, -inf
        %v2675 = vsel %vm513, %v2463, -inf
        %v2676 = vmax.f32 %v2674, %v2675
        %v2677 = vrot.slane %v2676, 4
        %v2678 = vmax.f32 %v2676, %v2677
        %v2679 = vrot.slane %v2678, 2
        %v2680 = vmax.f32 %v2678, %v2679
        %v2681 = vrot.slane %v2680, 1
        %v2682 = vmax.f32 %v2680, %v2681
        %v2683 = vsel %vm513, %v2392, -inf
        %v2684 = vsel %vm513, %v2394, -inf
        %v2685 = vmax.f32 %v2683, %v2684
        %v2686 = vrot.slane %v2685, 4
        %v2687 = vmax.f32 %v2685, %v2686
        %v2688 = vrot.slane %v2687, 2
        %v2689 = vmax.f32 %v2687, %v2688
        %v2690 = vrot.slane %v2689, 1
        %v2691 = vmax.f32 %v2689, %v2690
        %v2692 = vsel %vm513, %v2458, -inf
        %v2693 = vsel %vm513, %v2464, -inf
        %v2694 = vmax.f32 %v2692, %v2693
        %v2695 = vrot.slane %v2694, 4
        %v2696 = vmax.f32 %v2694, %v2695
        %v2697 = vrot.slane %v2696, 2
        %v2698 = vmax.f32 %v2696, %v2697
        %v2699 = vrot.slane %v2698, 1
        %v2700 = vmax.f32 %v2698, %v2699
        %v2701 = vsel %vm513, %v2459, -inf
        %v2702 = vsel %vm513, %v2465, -inf
        %v2703 = vmax.f32 %v2701, %v2702
        %v2704 = vrot.slane %v2703, 4
        %v2705 = vmax.f32 %v2703, %v2704
        %v2706 = vrot.slane %v2705, 2
        %v2707 = vmax.f32 %v2705, %v2706
        %v2708 = vrot.slane %v2707, 1
        %v2709 = vmax.f32 %v2707, %v2708
        %v2710 = vsel %vm513, %v2460, -inf
        %v2711 = vsel %vm513, %v2466, -inf
        %v2712 = vmax.f32 %v2710, %v2711
        %v2713 = vrot.slane %v2712, 4
        %v2714 = vmax.f32 %v2712, %v2713
        %v2715 = vrot.slane %v2714, 2
        %v2716 = vmax.f32 %v2714, %v2715
        %v2717 = vrot.slane %v2716, 1
        %v2718 = vmax.f32 %v2716, %v2717
        %v2719 = vsel %vm513, %v2395, -inf
        %v2720 = vsel %vm513, %v2397, -inf
        %v2721 = vmax.f32 %v2719, %v2720
        %v2722 = vrot.slane %v2721, 4
        %v2723 = vmax.f32 %v2721, %v2722
        %v2724 = vrot.slane %v2723, 2
        %v2725 = vmax.f32 %v2723, %v2724
        %v2726 = vrot.slane %v2725, 1
        %v2727 = vmax.f32 %v2725, %v2726
        %v2728 = vsel %vm513, %v2467, -inf
        %v2729 = vsel %vm513, %v2473, -inf
        %v2730 = vmax.f32 %v2728, %v2729
        %v2731 = vrot.slane %v2730, 4
        %v2732 = vmax.f32 %v2730, %v2731
        %v2733 = vrot.slane %v2732, 2
        %v2734 = vmax.f32 %v2732, %v2733
        %v2735 = vrot.slane %v2734, 1
        %v2736 = vmax.f32 %v2734, %v2735
        %v2737 = vsel %vm513, %v2468, -inf
        %v2738 = vsel %vm513, %v2474, -inf
        %v2739 = vmax.f32 %v2737, %v2738
        %v2740 = vrot.slane %v2739, 4
        %v2741 = vmax.f32 %v2739, %v2740
        %v2742 = vrot.slane %v2741, 2
        %v2743 = vmax.f32 %v2741, %v2742
        %v2744 = vrot.slane %v2743, 1
        %v2745 = vmax.f32 %v2743, %v2744
        %v2746 = vsel %vm513, %v2469, -inf
        %v2747 = vsel %vm513, %v2475, -inf
        %v2748 = vmax.f32 %v2746, %v2747
        %v2749 = vrot.slane %v2748, 4
        %v2750 = vmax.f32 %v2748, %v2749
        %v2751 = vrot.slane %v2750, 2
        %v2752 = vmax.f32 %v2750, %v2751
        %v2753 = vrot.slane %v2752, 1
        %v2754 = vmax.f32 %v2752, %v2753
        %v2755 = vsel %vm513, %v2396, -inf
        %v2756 = vsel %vm513, %v2398, -inf
        %v2757 = vmax.f32 %v2755, %v2756
        %v2758 = vrot.slane %v2757, 4
        %v2759 = vmax.f32 %v2757, %v2758
        %v2760 = vrot.slane %v2759, 2
        %v2761 = vmax.f32 %v2759, %v2760
        %v2762 = vrot.slane %v2761, 1
        %v2763 = vmax.f32 %v2761, %v2762
        %v2764 = vsel %vm513, %v2470, -inf
        %v2765 = vsel %vm513, %v2476, -inf
        %v2766 = vmax.f32 %v2764, %v2765
        %v2767 = vrot.slane %v2766, 4
        %v2768 = vmax.f32 %v2766, %v2767
        %v2769 = vrot.slane %v2768, 2
        %v2770 = vmax.f32 %v2768, %v2769
        %v2771 = vrot.slane %v2770, 1
        %v2772 = vmax.f32 %v2770, %v2771
        %v2773 = vsel %vm513, %v2471, -inf
        %v2774 = vsel %vm513, %v2477, -inf
        %v2775 = vmax.f32 %v2773, %v2774
        %v2776 = vrot.slane %v2775, 4
        %v2777 = vmax.f32 %v2775, %v2776
        %v2778 = vrot.slane %v2777, 2
        %v2779 = vmax.f32 %v2777, %v2778
        %v2780 = vrot.slane %v2779, 1
        %v2781 = vmax.f32 %v2779, %v2780
        %v2782 = vsel %vm513, %v2472, -inf
        %v2783 = vsel %vm513, %v2478, -inf
        %v2784 = vmax.f32 %v2782, %v2783
        %v2785 = vrot.slane %v2784, 4
        %v2786 = vmax.f32 %v2784, %v2785
        %v2787 = vrot.slane %v2786, 2
        %v2788 = vmax.f32 %v2786, %v2787
        %v2789 = vrot.slane %v2788, 1
        %v2790 = vmax.f32 %v2788, %v2789
        %v2791 = vsel %vm513, %v2399, -inf
        %v2792 = vsel %vm513, %v2401, -inf
        %v2793 = vmax.f32 %v2791, %v2792
        %v2794 = vrot.slane %v2793, 4
        %v2795 = vmax.f32 %v2793, %v2794
        %v2796 = vrot.slane %v2795, 2
        %v2797 = vmax.f32 %v2795, %v2796
        %v2798 = vrot.slane %v2797, 1
        %v2799 = vmax.f32 %v2797, %v2798
        %v2800 = vsel %vm513, %v2479, -inf
        %v2801 = vsel %vm513, %v2485, -inf
        %v2802 = vmax.f32 %v2800, %v2801
        %v2803 = vrot.slane %v2802, 4
        %v2804 = vmax.f32 %v2802, %v2803
        %v2805 = vrot.slane %v2804, 2
        %v2806 = vmax.f32 %v2804, %v2805
        %v2807 = vrot.slane %v2806, 1
        %v2808 = vmax.f32 %v2806, %v2807
        %v2809 = vsel %vm513, %v2480, -inf
        %v2810 = vsel %vm513, %v2486, -inf
        %v2811 = vmax.f32 %v2809, %v2810
        %v2812 = vrot.slane %v2811, 4
        %v2813 = vmax.f32 %v2811, %v2812
        %v2814 = vrot.slane %v2813, 2
        %v2815 = vmax.f32 %v2813, %v2814
        %v2816 = vrot.slane %v2815, 1
        %v2817 = vmax.f32 %v2815, %v2816
        %v2818 = vsel %vm513, %v2481, -inf
        %v2819 = vsel %vm513, %v2487, -inf
        %v2820 = vmax.f32 %v2818, %v2819
        %v2821 = vrot.slane %v2820, 4
        %v2822 = vmax.f32 %v2820, %v2821
        %v2823 = vrot.slane %v2822, 2
        %v2824 = vmax.f32 %v2822, %v2823
        %v2825 = vrot.slane %v2824, 1
        %v2826 = vmax.f32 %v2824, %v2825
        %v2827 = vsel %vm513, %v2400, -inf
        %v2828 = vsel %vm513, %v2402, -inf
        %v2829 = vmax.f32 %v2827, %v2828
        %v2830 = vrot.slane %v2829, 4
        %v2831 = vmax.f32 %v2829, %v2830
        %v2832 = vrot.slane %v2831, 2
        %v2833 = vmax.f32 %v2831, %v2832
        %v2834 = vrot.slane %v2833, 1
        %v2835 = vmax.f32 %v2833, %v2834
        %v2836 = vsel %vm513, %v2482, -inf
        %v2837 = vsel %vm513, %v2488, -inf
        %v2838 = vmax.f32 %v2836, %v2837
        %v2839 = vrot.slane %v2838, 4
        %v2840 = vmax.f32 %v2838, %v2839
        %v2841 = vrot.slane %v2840, 2
        %v2842 = vmax.f32 %v2840, %v2841
        %v2843 = vrot.slane %v2842, 1
        %v2844 = vmax.f32 %v2842, %v2843
        %v2845 = vsel %vm513, %v2483, -inf
        %v2846 = vsel %vm513, %v2489, -inf
        %v2847 = vmax.f32 %v2845, %v2846
        %v2848 = vrot.slane %v2847, 4
        %v2849 = vmax.f32 %v2847, %v2848
        %v2850 = vrot.slane %v2849, 2
        %v2851 = vmax.f32 %v2849, %v2850
        %v2852 = vrot.slane %v2851, 1
        %v2853 = vmax.f32 %v2851, %v2852
        %v2854 = vsel %vm513, %v2484, -inf
        %v2855 = vsel %vm513, %v2490, -inf
        %v2856 = vmax.f32 %v2854, %v2855
        %v2857 = vrot.slane %v2856, 4
        %v2858 = vmax.f32 %v2856, %v2857
        %v2859 = vrot.slane %v2858, 2
        %v2860 = vmax.f32 %v2858, %v2859
        %v2861 = vrot.slane %v2860, 1
        %v2862 = vmax.f32 %v2860, %v2861
        %v2863 = vsel %vm513, %v2403, -inf
        %v2864 = vsel %vm513, %v2405, -inf
        %v2865 = vmax.f32 %v2863, %v2864
        %v2866 = vrot.slane %v2865, 4
        %v2867 = vmax.f32 %v2865, %v2866
        %v2868 = vrot.slane %v2867, 2
        %v2869 = vmax.f32 %v2867, %v2868
        %v2870 = vrot.slane %v2869, 1
        %v2871 = vmax.f32 %v2869, %v2870
        %v2872 = vsel %vm513, %v2491, -inf
        %v2873 = vsel %vm513, %v2497, -inf
        %v2874 = vmax.f32 %v2872, %v2873
        %v2875 = vrot.slane %v2874, 4
        %v2876 = vmax.f32 %v2874, %v2875
        %v2877 = vrot.slane %v2876, 2
        %v2878 = vmax.f32 %v2876, %v2877
        %v2879 = vrot.slane %v2878, 1
        %v2880 = vmax.f32 %v2878, %v2879
        %v2881 = vsel %vm513, %v2492, -inf
        %v2882 = vsel %vm513, %v2498, -inf
        %v2883 = vmax.f32 %v2881, %v2882
        %v2884 = vrot.slane %v2883, 4
        %v2885 = vmax.f32 %v2883, %v2884
        %v2886 = vrot.slane %v2885, 2
        %v2887 = vmax.f32 %v2885, %v2886
        %v2888 = vrot.slane %v2887, 1
        %v2889 = vmax.f32 %v2887, %v2888
        %v2890 = vsel %vm513, %v2493, -inf
        %v2891 = vsel %vm513, %v2499, -inf
        %v2892 = vmax.f32 %v2890, %v2891
        %v2893 = vrot.slane %v2892, 4
        %v2894 = vmax.f32 %v2892, %v2893
        %v2895 = vrot.slane %v2894, 2
        %v2896 = vmax.f32 %v2894, %v2895
        %v2897 = vrot.slane %v2896, 1
        %v2898 = vmax.f32 %v2896, %v2897
        %v2899 = vsel %vm513, %v2404, -inf
        %v2900 = vsel %vm513, %v2406, -inf
        %v2901 = vmax.f32 %v2899, %v2900
        %v2902 = vrot.slane %v2901, 4
        %v2903 = vmax.f32 %v2901, %v2902
        %v2904 = vrot.slane %v2903, 2
        %v2905 = vmax.f32 %v2903, %v2904
        %v2906 = vrot.slane %v2905, 1
        %v2907 = vmax.f32 %v2905, %v2906
        %v2908 = vsel %vm513, %v2494, -inf
        %v2909 = vsel %vm513, %v2500, -inf
        %v2910 = vmax.f32 %v2908, %v2909
        %v2911 = vrot.slane %v2910, 4
        %v2912 = vmax.f32 %v2910, %v2911
        %v2913 = vrot.slane %v2912, 2
        %v2914 = vmax.f32 %v2912, %v2913
        %v2915 = vrot.slane %v2914, 1
        %v2916 = vmax.f32 %v2914, %v2915
        %v2917 = vsel %vm513, %v2495, -inf
        %v2918 = vsel %vm513, %v2501, -inf
        %v2919 = vmax.f32 %v2917, %v2918
        %v2920 = vrot.slane %v2919, 4
        %v2921 = vmax.f32 %v2919, %v2920
        %v2922 = vrot.slane %v2921, 2
        %v2923 = vmax.f32 %v2921, %v2922
        %v2924 = vrot.slane %v2923, 1
        %v2925 = vmax.f32 %v2923, %v2924
        %v2926 = vsel %vm513, %v2496, -inf
        %v2927 = vsel %vm513, %v2502, -inf
        %v2928 = vmax.f32 %v2926, %v2927
        %v2929 = vrot.slane %v2928, 4
        %v2930 = vmax.f32 %v2928, %v2929
        %v2931 = vrot.slane %v2930, 2
        %v2932 = vmax.f32 %v2930, %v2931
        %v2933 = vrot.slane %v2932, 1
        %v2934 = vmax.f32 %v2932, %v2933
        %v2935 = vsel %vm513, %v2407, -inf
        %v2936 = vsel %vm513, %v2409, -inf
        %v2937 = vmax.f32 %v2935, %v2936
        %v2938 = vrot.slane %v2937, 4
        %v2939 = vmax.f32 %v2937, %v2938
        %v2940 = vrot.slane %v2939, 2
        %v2941 = vmax.f32 %v2939, %v2940
        %v2942 = vrot.slane %v2941, 1
        %v2943 = vmax.f32 %v2941, %v2942
        %v2944 = vsel %vm513, %v2503, -inf
        %v2945 = vsel %vm513, %v2509, -inf
        %v2946 = vmax.f32 %v2944, %v2945
        %v2947 = vrot.slane %v2946, 4
        %v2948 = vmax.f32 %v2946, %v2947
        %v2949 = vrot.slane %v2948, 2
        %v2950 = vmax.f32 %v2948, %v2949
        %v2951 = vrot.slane %v2950, 1
        %v2952 = vmax.f32 %v2950, %v2951
        %v2953 = vsel %vm513, %v2504, -inf
        %v2954 = vsel %vm513, %v2510, -inf
        %v2955 = vmax.f32 %v2953, %v2954
        %v2956 = vrot.slane %v2955, 4
        %v2957 = vmax.f32 %v2955, %v2956
        %v2958 = vrot.slane %v2957, 2
        %v2959 = vmax.f32 %v2957, %v2958
        %v2960 = vrot.slane %v2959, 1
        %v2961 = vmax.f32 %v2959, %v2960
        %v2962 = vsel %vm513, %v2505, -inf
        %v2963 = vsel %vm513, %v2511, -inf
        %v2964 = vmax.f32 %v2962, %v2963
        %v2965 = vrot.slane %v2964, 4
        %v2966 = vmax.f32 %v2964, %v2965
        %v2967 = vrot.slane %v2966, 2
        %v2968 = vmax.f32 %v2966, %v2967
        %v2969 = vrot.slane %v2968, 1
        %v2970 = vmax.f32 %v2968, %v2969
        %v2971 = vsel %vm513, %v2408, -inf
        %v2972 = vsel %vm513, %v2410, -inf
        %v2973 = vmax.f32 %v2971, %v2972
        %v2974 = vrot.slane %v2973, 4
        %v2975 = vmax.f32 %v2973, %v2974
        %v2976 = vrot.slane %v2975, 2
        %v2977 = vmax.f32 %v2975, %v2976
        %v2978 = vrot.slane %v2977, 1
        %v2979 = vmax.f32 %v2977, %v2978
        %v2980 = vsel %vm513, %v2506, -inf
        %v2981 = vsel %vm513, %v2512, -inf
        %v2982 = vmax.f32 %v2980, %v2981
        %v2983 = vrot.slane %v2982, 4
        %v2984 = vmax.f32 %v2982, %v2983
        %v2985 = vrot.slane %v2984, 2
        %v2986 = vmax.f32 %v2984, %v2985
        %v2987 = vrot.slane %v2986, 1
        %v2988 = vmax.f32 %v2986, %v2987
        %v2989 = vsel %vm513, %v2507, -inf
        %v2990 = vsel %vm513, %v2513, -inf
        %v2991 = vmax.f32 %v2989, %v2990
        %v2992 = vrot.slane %v2991, 4
        %v2993 = vmax.f32 %v2991, %v2992
        %v2994 = vrot.slane %v2993, 2
        %v2995 = vmax.f32 %v2993, %v2994
        %v2996 = vrot.slane %v2995, 1
        %v2997 = vmax.f32 %v2995, %v2996
        %v2998 = vsel %vm513, %v2508, -inf
        %v2999 = vsel %vm513, %v2514, -inf
        %v3000 = vmax.f32 %v2998, %v2999
        %v3001 = vrot.slane %v3000, 4
        %v3002 = vmax.f32 %v3000, %v3001
        %v3003 = vrot.slane %v3002, 2
        %v3004 = vmax.f32 %v3002, %v3003
        %v3005 = vrot.slane %v3004, 1
        %v3006 = vmax.f32 %v3004, %v3005
        %v3007 = vsel %vm513, %v2411, -inf
        %v3008 = vsel %vm513, %v2413, -inf
        %v3009 = vmax.f32 %v3007, %v3008
        %v3010 = vrot.slane %v3009, 4
        %v3011 = vmax.f32 %v3009, %v3010
        %v3012 = vrot.slane %v3011, 2
        %v3013 = vmax.f32 %v3011, %v3012
        %v3014 = vrot.slane %v3013, 1
        %v3015 = vmax.f32 %v3013, %v3014
        %v3016 = vsel %vm513, %v2515, -inf
        %v3017 = vsel %vm513, %v2521, -inf
        %v3018 = vmax.f32 %v3016, %v3017
        %v3019 = vrot.slane %v3018, 4
        %v3020 = vmax.f32 %v3018, %v3019
        %v3021 = vrot.slane %v3020, 2
        %v3022 = vmax.f32 %v3020, %v3021
        %v3023 = vrot.slane %v3022, 1
        %v3024 = vmax.f32 %v3022, %v3023
        %v3025 = vsel %vm513, %v2516, -inf
        %v3026 = vsel %vm513, %v2522, -inf
        %v3027 = vmax.f32 %v3025, %v3026
        %v3028 = vrot.slane %v3027, 4
        %v3029 = vmax.f32 %v3027, %v3028
        %v3030 = vrot.slane %v3029, 2
        %v3031 = vmax.f32 %v3029, %v3030
        %v3032 = vrot.slane %v3031, 1
        %v3033 = vmax.f32 %v3031, %v3032
        %v3034 = vsel %vm513, %v2517, -inf
        %v3035 = vsel %vm513, %v2523, -inf
        %v3036 = vmax.f32 %v3034, %v3035
        %v3037 = vrot.slane %v3036, 4
        %v3038 = vmax.f32 %v3036, %v3037
        %v3039 = vrot.slane %v3038, 2
        %v3040 = vmax.f32 %v3038, %v3039
        %v3041 = vrot.slane %v3040, 1
        %v3042 = vmax.f32 %v3040, %v3041
        %v3043 = vsel %vm513, %v2412, -inf
        %v3044 = vsel %vm513, %v2414, -inf
        %v3045 = vmax.f32 %v3043, %v3044
        %v3046 = vrot.slane %v3045, 4
        %v3047 = vmax.f32 %v3045, %v3046
        %v3048 = vrot.slane %v3047, 2
        %v3049 = vmax.f32 %v3047, %v3048
        %v3050 = vrot.slane %v3049, 1
        %v3051 = vmax.f32 %v3049, %v3050
        %v3052 = vsel %vm513, %v2518, -inf
        %v3053 = vsel %vm513, %v2524, -inf
        %v3054 = vmax.f32 %v3052, %v3053
        %v3055 = vrot.slane %v3054, 4
        %v3056 = vmax.f32 %v3054, %v3055
        %v3057 = vrot.slane %v3056, 2
        %v3058 = vmax.f32 %v3056, %v3057
        %v3059 = vrot.slane %v3058, 1
        %v3060 = vmax.f32 %v3058, %v3059
        %v3061 = vsel %vm513, %v2519, -inf
        %v3062 = vsel %vm513, %v2525, -inf
        %v3063 = vmax.f32 %v3061, %v3062
        %v3064 = vrot.slane %v3063, 4
        %v3065 = vmax.f32 %v3063, %v3064
        %v3066 = vrot.slane %v3065, 2
        %v3067 = vmax.f32 %v3065, %v3066
        %v3068 = vrot.slane %v3067, 1
        %v3069 = vmax.f32 %v3067, %v3068
        %v3070 = vsel %vm513, %v2520, -inf
        %v3071 = vsel %vm513, %v2526, -inf
        %v3072 = vmax.f32 %v3070, %v3071
        %v3073 = vrot.slane %v3072, 4
        %v3074 = vmax.f32 %v3072, %v3073
        %v3075 = vrot.slane %v3074, 2
        %v3076 = vmax.f32 %v3074, %v3075
        %v3077 = vrot.slane %v3076, 1
        %v3078 = vmax.f32 %v3076, %v3077
        %v3079 = vsel %vm513, %v2415, -inf
        %v3080 = vsel %vm513, %v2417, -inf
        %v3081 = vmax.f32 %v3079, %v3080
        %v3082 = vrot.slane %v3081, 4
        %v3083 = vmax.f32 %v3081, %v3082
        %v3084 = vrot.slane %v3083, 2
        %v3085 = vmax.f32 %v3083, %v3084
        %v3086 = vrot.slane %v3085, 1
        %v3087 = vmax.f32 %v3085, %v3086
        %v3088 = vsel %vm513, %v2527, -inf
        %v3089 = vsel %vm513, %v2533, -inf
        %v3090 = vmax.f32 %v3088, %v3089
        %v3091 = vrot.slane %v3090, 4
        %v3092 = vmax.f32 %v3090, %v3091
        %v3093 = vrot.slane %v3092, 2
        %v3094 = vmax.f32 %v3092, %v3093
        %v3095 = vrot.slane %v3094, 1
        %v3096 = vmax.f32 %v3094, %v3095
        %v3097 = vsel %vm513, %v2528, -inf
        %v3098 = vsel %vm513, %v2534, -inf
        %v3099 = vmax.f32 %v3097, %v3098
        %v3100 = vrot.slane %v3099, 4
        %v3101 = vmax.f32 %v3099, %v3100
        %v3102 = vrot.slane %v3101, 2
        %v3103 = vmax.f32 %v3101, %v3102
        %v3104 = vrot.slane %v3103, 1
        %v3105 = vmax.f32 %v3103, %v3104
        %v3106 = vsel %vm513, %v2529, -inf
        %v3107 = vsel %vm513, %v2535, -inf
        %v3108 = vmax.f32 %v3106, %v3107
        %v3109 = vrot.slane %v3108, 4
        %v3110 = vmax.f32 %v3108, %v3109
        %v3111 = vrot.slane %v3110, 2
        %v3112 = vmax.f32 %v3110, %v3111
        %v3113 = vrot.slane %v3112, 1
        %v3114 = vmax.f32 %v3112, %v3113
        %v3115 = vsel %vm513, %v2416, -inf
        %v3116 = vsel %vm513, %v2418, -inf
        %v3117 = vmax.f32 %v3115, %v3116
        %v3118 = vrot.slane %v3117, 4
        %v3119 = vmax.f32 %v3117, %v3118
        %v3120 = vrot.slane %v3119, 2
        %v3121 = vmax.f32 %v3119, %v3120
        %v3122 = vrot.slane %v3121, 1
        %v3123 = vmax.f32 %v3121, %v3122
        %v3124 = vsel %vm513, %v2530, -inf
        %v3125 = vsel %vm513, %v2536, -inf
        %v3126 = vmax.f32 %v3124, %v3125
        %v3127 = vrot.slane %v3126, 4
        %v3128 = vmax.f32 %v3126, %v3127
        %v3129 = vrot.slane %v3128, 2
        %v3130 = vmax.f32 %v3128, %v3129
        %v3131 = vrot.slane %v3130, 1
        %v3132 = vmax.f32 %v3130, %v3131
        %v3133 = vsel %vm513, %v2531, -inf
        %v3134 = vsel %vm513, %v2537, -inf
        %v3135 = vmax.f32 %v3133, %v3134
        %v3136 = vrot.slane %v3135, 4
        %v3137 = vmax.f32 %v3135, %v3136
        %v3138 = vrot.slane %v3137, 2
        %v3139 = vmax.f32 %v3137, %v3138
        %v3140 = vrot.slane %v3139, 1
        %v3141 = vmax.f32 %v3139, %v3140
        %v3142 = vsel %vm513, %v2532, -inf
        %v3143 = vsel %vm513, %v2538, -inf
        %v3144 = vmax.f32 %v3142, %v3143
        %v3145 = vrot.slane %v3144, 4
        %v3146 = vmax.f32 %v3144, %v3145
        %v3147 = vrot.slane %v3146, 2
        %v3148 = vmax.f32 %v3146, %v3147
        %v3149 = vrot.slane %v3148, 1
        %v3150 = vmax.f32 %v3148, %v3149
        %v3151 = vsel %vm513, %v2419, -inf
        %v3152 = vsel %vm513, %v2421, -inf
        %v3153 = vmax.f32 %v3151, %v3152
        %v3154 = vrot.slane %v3153, 4
        %v3155 = vmax.f32 %v3153, %v3154
        %v3156 = vrot.slane %v3155, 2
        %v3157 = vmax.f32 %v3155, %v3156
        %v3158 = vrot.slane %v3157, 1
        %v3159 = vmax.f32 %v3157, %v3158
        %v3160 = vsel %vm513, %v2539, -inf
        %v3161 = vsel %vm513, %v2545, -inf
        %v3162 = vmax.f32 %v3160, %v3161
        %v3163 = vrot.slane %v3162, 4
        %v3164 = vmax.f32 %v3162, %v3163
        %v3165 = vrot.slane %v3164, 2
        %v3166 = vmax.f32 %v3164, %v3165
        %v3167 = vrot.slane %v3166, 1
        %v3168 = vmax.f32 %v3166, %v3167
        %v3169 = vsel %vm513, %v2540, -inf
        %v3170 = vsel %vm513, %v2546, -inf
        %v3171 = vmax.f32 %v3169, %v3170
        %v3172 = vrot.slane %v3171, 4
        %v3173 = vmax.f32 %v3171, %v3172
        %v3174 = vrot.slane %v3173, 2
        %v3175 = vmax.f32 %v3173, %v3174
        %v3176 = vrot.slane %v3175, 1
        %v3177 = vmax.f32 %v3175, %v3176
        %v3178 = vsel %vm513, %v2541, -inf
        %v3179 = vsel %vm513, %v2547, -inf
        %v3180 = vmax.f32 %v3178, %v3179
        %v3181 = vrot.slane %v3180, 4
        %v3182 = vmax.f32 %v3180, %v3181
        %v3183 = vrot.slane %v3182, 2
        %v3184 = vmax.f32 %v3182, %v3183
        %v3185 = vrot.slane %v3184, 1
        %v3186 = vmax.f32 %v3184, %v3185
        %v3187 = vsel %vm513, %v2420, -inf
        %v3188 = vsel %vm513, %v2422, -inf
        %v3189 = vmax.f32 %v3187, %v3188
        %v3190 = vrot.slane %v3189, 4
        %v3191 = vmax.f32 %v3189, %v3190
        %v3192 = vrot.slane %v3191, 2
        %v3193 = vmax.f32 %v3191, %v3192
        %v3194 = vrot.slane %v3193, 1
        %v3195 = vmax.f32 %v3193, %v3194
        %v3196 = vsel %vm513, %v2542, -inf
        %v3197 = vsel %vm513, %v2548, -inf
        %v3198 = vmax.f32 %v3196, %v3197
        %v3199 = vrot.slane %v3198, 4
        %v3200 = vmax.f32 %v3198, %v3199
        %v3201 = vrot.slane %v3200, 2
        %v3202 = vmax.f32 %v3200, %v3201
        %v3203 = vrot.slane %v3202, 1
        %v3204 = vmax.f32 %v3202, %v3203
        %v3205 = vsel %vm513, %v2543, -inf
        %v3206 = vsel %vm513, %v2549, -inf
        %v3207 = vmax.f32 %v3205, %v3206
        %v3208 = vrot.slane %v3207, 4
        %v3209 = vmax.f32 %v3207, %v3208
        %v3210 = vrot.slane %v3209, 2
        %v3211 = vmax.f32 %v3209, %v3210
        %v3212 = vrot.slane %v3211, 1
        %v3213 = vmax.f32 %v3211, %v3212
        %v3214 = vsel %vm513, %v2544, -inf
        %v3215 = vsel %vm513, %v2550, -inf
        %v3216 = vmax.f32 %v3214, %v3215
        %v3217 = vrot.slane %v3216, 4
        %v3218 = vmax.f32 %v3216, %v3217
        %v3219 = vrot.slane %v3218, 2
        %v3220 = vmax.f32 %v3218, %v3219
        %v3221 = vrot.slane %v3220, 1
        %v3222 = vmax.f32 %v3220, %v3221
        %vm3287 = vcmask 1041409
        %v3288 = vsel %vm3287, %v2664, %v2655
        %vm3289 = vcmask 1042434
        %v3290 = vsel %vm3289, %v2673, %v3288
        %vm3291 = vcmask 1043459
        %v3292 = vsel %vm3291, %v2682, %v3290
        %vm3293 = vcmask 1044484
        %v3294 = vsel %vm3293, %v2691, %v3292
        %vm3295 = vcmask 1045509
        %v3296 = vsel %vm3295, %v2700, %v3294
        %vm3297 = vcmask 1046534
        %v3298 = vsel %vm3297, %v2709, %v3296
        %vm3299 = vcmask 1047559
        %v3300 = vsel %vm3299, %v2718, %v3298
        %v3301 = vsel %vm3287, %v2736, %v2727
        %v3302 = vsel %vm3289, %v2745, %v3301
        %v3303 = vsel %vm3291, %v2754, %v3302
        %v3304 = vsel %vm3293, %v2763, %v3303
        %v3305 = vsel %vm3295, %v2772, %v3304
        %v3306 = vsel %vm3297, %v2781, %v3305
        %v3307 = vsel %vm3299, %v2790, %v3306
        %v3308 = vsel %vm3287, %v2808, %v2799
        %v3309 = vsel %vm3289, %v2817, %v3308
        %v3310 = vsel %vm3291, %v2826, %v3309
        %v3311 = vsel %vm3293, %v2835, %v3310
        %v3312 = vsel %vm3295, %v2844, %v3311
        %v3313 = vsel %vm3297, %v2853, %v3312
        %v3314 = vsel %vm3299, %v2862, %v3313
        %v3315 = vsel %vm3287, %v2880, %v2871
        %v3316 = vsel %vm3289, %v2889, %v3315
        %v3317 = vsel %vm3291, %v2898, %v3316
        %v3318 = vsel %vm3293, %v2907, %v3317
        %v3319 = vsel %vm3295, %v2916, %v3318
        %v3320 = vsel %vm3297, %v2925, %v3319
        %v3321 = vsel %vm3299, %v2934, %v3320
        %v3322 = vsel %vm3287, %v2952, %v2943
        %v3323 = vsel %vm3289, %v2961, %v3322
        %v3324 = vsel %vm3291, %v2970, %v3323
        %v3325 = vsel %vm3293, %v2979, %v3324
        %v3326 = vsel %vm3295, %v2988, %v3325
        %v3327 = vsel %vm3297, %v2997, %v3326
        %v3328 = vsel %vm3299, %v3006, %v3327
        %v3329 = vsel %vm3287, %v3024, %v3015
        %v3330 = vsel %vm3289, %v3033, %v3329
        %v3331 = vsel %vm3291, %v3042, %v3330
        %v3332 = vsel %vm3293, %v3051, %v3331
        %v3333 = vsel %vm3295, %v3060, %v3332
        %v3334 = vsel %vm3297, %v3069, %v3333
        %v3335 = vsel %vm3299, %v3078, %v3334
        %v3336 = vsel %vm3287, %v3096, %v3087
        %v3337 = vsel %vm3289, %v3105, %v3336
        %v3338 = vsel %vm3291, %v3114, %v3337
        %v3339 = vsel %vm3293, %v3123, %v3338
        %v3340 = vsel %vm3295, %v3132, %v3339
        %v3341 = vsel %vm3297, %v3141, %v3340
        %v3342 = vsel %vm3299, %v3150, %v3341
        %v3343 = vsel %vm3287, %v3168, %v3159
        %v3344 = vsel %vm3289, %v3177, %v3343
        %v3345 = vsel %vm3291, %v3186, %v3344
        %v3346 = vsel %vm3293, %v3195, %v3345
        %v3347 = vsel %vm3295, %v3204, %v3346
        %v3348 = vsel %vm3297, %v3213, %v3347
        %v3349 = vsel %vm3299, %v3222, %v3348
        %3358 = vst.msk [vmem:[%s217] sm:$0xff] %vm510, %v3300
        %3359 = vst.msk [vmem:[%s217 + $0x8] sm:$0xff] %vm510, %v3307
        %3360 = vst.msk [vmem:[%s217 + $0x10] sm:$0xff] %vm510, %v3314
        %3361 = vst.msk [vmem:[%s217 + $0x18] sm:$0xff] %vm510, %v3321
        %3362 = vst.msk [vmem:[%s217 + $0x20] sm:$0xff] %vm510, %v3328
        %3363 = vst.msk [vmem:[%s217 + $0x28] sm:$0xff] %vm510, %v3335
        %3364 = vst.msk [vmem:[%s217 + $0x30] sm:$0xff] %vm510, %v3342
        %3365 = vst.msk [vmem:[%s217 + $0x38] sm:$0xff] %vm510, %v3349
        %s3366 = sand.u32 %s137, 1
        %s3367 = scalar_lea.sflag [#allocation5], %s3366
        %s3368 = sand.u32 %s137, 1
        %s3369 = smul.addr %s3368, 64
        %s3370 = scalar_lea.vmem [#allocation4], %s3369
        // Predicated region
        $region41: #{simple_conv_block_forward.1} parent=39 // pred_check
          %p3371 = pneg %p147
        $region42: #{simple_conv_block_forward.1} parent=39 // pred_check_branch
          %3373 = sbr.rel (%p3371) target = $region44
        $region43: #{simple_conv_block_forward.1} parent=39 // pred_region
          %3375 = vsyncadd %s3367, 0
          %s3376 = smul.addr %s19, 8
          %s3377 = smul.addr %s3376, 8
          %s3378 = scalar_lea.hbm %s5, %s3377
          %s3379 = sshll.u32 %s3370, 4
          %s3380 = int_to_ptr.vmem [resolvable:$true] %s3379
          %s3381 = sshll.u32 %s3378, 4
          %s3382 = int_to_ptr.hbm [resolvable:$true] %s3381
          %3387 = dma.vmem_to_hbm [thread:$0]  %s3380, 1024, %s3382, %s3367, 128, 128, 8
        $region44: #{simple_conv_block_forward.1} parent=39 // pred_fallthru
          _
      $region40: #{simple_conv_block_forward.1} parent=5 // pred_fallthru
        _
      %p3388 = scmp.le.s32.totalorder 2, %s14
      // Predicated region
      $region45: #{simple_conv_block_forward.1} parent=5 // pred_check
        %p3389 = pneg %p3388
      $region46: #{simple_conv_block_forward.1} parent=5 // pred_check_branch
        %3391 = sbr.rel (%p3389) target = $region48
      $region47: #{simple_conv_block_forward.1} parent=5 // pred_region
        %s3392 = ssub.s32 %s14, 2
        // Predicated region
        $region49: #{simple_conv_block_forward.1} parent=47 // pred_check
          %p3393 = pneg %p153
        $region50: #{simple_conv_block_forward.1} parent=47 // pred_check_branch
          %3395 = sbr.rel (%p3393) target = $region52
        $region51: #{simple_conv_block_forward.1} parent=47 // pred_region
          %s3396 = sand.u32 %s138, 1
          %s3397 = scalar_lea.sflag [#allocation5], %s3396
          %s3398 = sand.u32 %s138, 1
          %s3399 = smul.addr %s3398, 64
          %s3400 = scalar_lea.vmem [#allocation4], %s3399
          %3402 = dma.done %s3397, 1024
        $region52: #{simple_conv_block_forward.1} parent=47 // pred_fallthru
          _
      $region48: #{simple_conv_block_forward.1} parent=5 // pred_fallthru
        _
    $region6: #{simple_conv_block_forward.1} parent=1 // loop_footer
      %s18 = sadd.s32 1, %s14
    $region7: #{simple_conv_block_forward.1} parent=1 // loop_footer_branch
      %13 = sbr.rel target = $region3
    $region8: #{simple_conv_block_forward.1} parent=1 // loop_exit
      _
    %3403 = vsyncpa [#allocation5], 1
    %s3404 = scalar_lea.sflag [#allocation5], 1
    %3405 = vsyncpa %s3404, 1

</llo_original>
